<compile_context>
chip_gen: v7x
topology: tpu7x:2x2x1
jax: 0.10.0
libtpu: 0.0.40
codegen_flags: <defaults>
</compile_context>

<pallas_src>
import functools

import jax
import jax.numpy as jnp
from jax.experimental import pallas as pl
from jax.experimental.pallas import tpu as pltpu


# ----------------------------------------------------------------------------
# The fused Pallas kernel: whole HMM forward in one launch
# ----------------------------------------------------------------------------
def _hmm_fused_kernel(x1_ref, x2_ref, ew1_ref, ew2_ref, p1_ref, p2_ref,
                      f2a_ref, f2b_ref, logits_ref,
                      *, n_layers, n_heads, batch, p1_off, p2_off):
    f32 = jnp.float32
    B = batch
    H = n_heads
    Hd = p1_ref.shape[1]
    v1d = x1_ref.shape[1]
    v12d = x2_ref.shape[1]
    BN2 = x2_ref.shape[0]
    N1 = x1_ref.shape[0] // B
    N2 = BN2 // B

    # ---- unpack the two packed parameter slabs (static, sublane-aligned slices) ----
    w1t = p1_ref[pl.ds(p1_off[0], v1d), :]          # (v1d, Hd)
    b1 = p1_ref[pl.ds(p1_off[1], 1), :]             # (1, Hd)
    w2t = p1_ref[pl.ds(p1_off[2], v12d), :]         # (v1d+v2d, Hd)
    b2 = p1_ref[pl.ds(p1_off[3], BN2), :]           # (B*N2, Hd)  row-dependent bias
    wmm_a = p1_ref[pl.ds(p1_off[4], 1), :]          # (1, Hd)
    wmm_b = p1_ref[pl.ds(p1_off[5], 1), :]          # (1, Hd)

    wcls_a = p2_ref[pl.ds(p2_off[0], Hd), :]        # (Hd, label)
    wcls_b = p2_ref[pl.ds(p2_off[1], Hd), :]        # (Hd, label)
    bcls = p2_ref[pl.ds(p2_off[2], 1), :]           # (1, label)
    bmm = p2_ref[pl.ds(p2_off[3], 1), :][:, 0:1]    # (1, 1)

    # ---- node-map linears, batch-stacked: one MXU matmul per graph ----
    s1_all = jnp.dot(x1_ref[...], w1t, preferred_element_type=f32) + b1     # (B*N1, Hd)
    s2_all = jnp.dot(x2_ref[...], w2t, preferred_element_type=f32) + b2     # (B*N2, Hd)

    state1 = [s1_all[b * N1:(b + 1) * N1, :] for b in range(B)]
    state2 = [s2_all[b * N2:(b + 1) * N2, :] for b in range(B)]

    inv_h = 1.0 / H

    def attn_stack(state, ew_ref, n_nodes):
        HN = H * n_nodes
        # Constant helper matrices, built from iota + compares (no concat / reshape).
        rt = jax.lax.broadcasted_iota(jnp.int32, (n_nodes, HN), 0)
        ct = jax.lax.broadcasted_iota(jnp.int32, (n_nodes, HN), 1)
        rm = jax.lax.broadcasted_iota(jnp.int32, (HN, HN), 0)
        cm = jax.lax.broadcasted_iota(jnp.int32, (HN, HN), 1)
        rk = jax.lax.broadcasted_iota(jnp.int32, (HN, n_nodes), 0)
        ck = jax.lax.broadcasted_iota(jnp.int32, (HN, n_nodes), 1)
        t_rep = jnp.zeros((n_nodes, HN), f32)       # [I_N | I_N | ... | I_N]
        m_seg = jnp.zeros((HN, HN), f32)            # block-diagonal all-ones (head segments)
        for h in range(H):
            lo = h * n_nodes
            hi = lo + n_nodes
            t_rep = jnp.where((ct >= lo) & (ct < hi) & ((ct - lo) == rt), 1.0, t_rep)
            m_seg = jnp.where((rm >= lo) & (rm < hi) & (cm >= lo) & (cm < hi), 1.0, m_seg)

        # PyTorch reshape quirk: head h of batch b aggregates from state[(b*H + h) % B].
        # Build (H*N, N) placement matrices once per unique (pattern, source) so the
        # per-layer stacked sources are pure MXU work (no in-kernel concatenation).
        placements = {}
        for b in range(B):
            pat = tuple((b * H + h) % B for h in range(H))
            if pat in placements:
                continue
            sel = {}
            for s in sorted(set(pat)):
                k = jnp.zeros((HN, n_nodes), f32)
                for h in range(H):
                    if pat[h] == s:
                        lo = h * n_nodes
                        k = jnp.where((rk >= lo) & (rk < lo + n_nodes) & ((rk - lo) == ck),
                                      1.0, k)
                sel[s] = k
            placements[pat] = sel

        for l in range(n_layers):
            # per-pattern stacked aggregation sources (H*N, Hd)
            stacks = {}
            for pat, sel in placements.items():
                s_stack = jnp.zeros((HN, Hd), f32)
                for s, k in sel.items():
                    s_stack = s_stack + jnp.dot(k, state[s], preferred_element_type=f32)
                stacks[pat] = s_stack
            new_state = []
            for b in range(B):
                # similarity matmul, reused by every head of this batch element
                sim = jax.lax.dot_general(state[b], state[b],
                                          (((1,), (1,)), ((), ())),
                                          preferred_element_type=f32)        # (N, N)
                sim_t = jnp.dot(sim, t_rep, preferred_element_type=f32)      # (N, H*N)
                logits = sim_t * ew_ref[l * B + b]                           # (N, H*N)
                # head-batched, numerically-stable softmax over each head's N columns
                # (one shared per-row max is a valid shift for every head segment)
                mx = jnp.max(logits, axis=-1, keepdims=True)
                e = jnp.exp(logits - mx)
                z = jnp.dot(e, m_seg, preferred_element_type=f32)            # per-head sums, pre-broadcast
                p = e / z
                pat = tuple((b * H + h) % B for h in range(H))
                acc = jnp.dot(p, stacks[pat], preferred_element_type=f32)    # head sum on the MXU K-dim
                new_state.append(acc * inv_h)                                # mean over heads
            state = new_state
        return state

    state1 = attn_stack(state1, ew1_ref, N1)
    state2 = attn_stack(state2, ew2_ref, N2)

    # ---- tail: mm-layer attention over [v1emb|n], [v2emb|n], [n|n] + classifier,
    #      batched over B with one full-block store per output ----
    row_b = jax.lax.broadcasted_iota(jnp.int32, (B, Hd), 0)
    v1emb = jnp.zeros((B, Hd), f32)
    v2emb = jnp.zeros((B, Hd), f32)
    nf = jnp.zeros((B, Hd), f32)
    for b in range(B):
        v1emb = jnp.where(row_b == b, jnp.mean(state1[b], axis=0, keepdims=True), v1emb)
        v2emb = jnp.where(row_b == b, jnp.mean(state2[b], axis=0, keepdims=True), v2emb)
        nf = jnp.where(row_b == b, s1_all[b * N1:b * N1 + 1, :], nf)         # v1_map(nodes_b)

    nb = jnp.sum(nf * wmm_b, axis=1, keepdims=True) + bmm                    # (B, 1)
    s1 = jnp.sum(v1emb * wmm_a, axis=1, keepdims=True) + nb
    s2 = jnp.sum(v2emb * wmm_a, axis=1, keepdims=True) + nb
    s3 = jnp.sum(nf * wmm_a, axis=1, keepdims=True) + nb
    # leaky_relu(slope 0.01) + softmax over the 3 candidate rows
    s1 = jnp.where(s1 > 0, s1, 0.01 * s1)
    s2 = jnp.where(s2 > 0, s2, 0.01 * s2)
    s3 = jnp.where(s3 > 0, s3, 0.01 * s3)
    mx = jnp.maximum(jnp.maximum(s1, s2), s3)
    e1, e2, e3 = jnp.exp(s1 - mx), jnp.exp(s2 - mx), jnp.exp(s3 - mx)
    zz = e1 + e2 + e3
    a1, a2, a3 = e1 / zz, e2 / zz, e3 / zz

    third = 1.0 / 3.0
    f2_first = (a1 * v1emb + a2 * v2emb + a3 * nf) * third                   # f2[:, :Hd]
    f2_second = ((a1 + a2 + a3) * nf) * third                                # f2[:, Hd:]

    f2a_ref[...] = f2_first
    f2b_ref[...] = f2_second
    logits_ref[...] = (jnp.dot(f2_first, wcls_a, preferred_element_type=f32)
                       + jnp.dot(f2_second, wcls_b, preferred_element_type=f32)
                       + bcls)


def _full_spec(shape):
    nd = len(shape)
    return pl.BlockSpec(shape, lambda i, _nd=nd: (0,) * _nd)


def _pack_rows(pieces):
    """Row-stack 2-D arrays of equal lane width, padding each piece to a multiple of 8
    rows so every in-kernel slice starts at a sublane-aligned offset."""
    padded, offsets, off = [], [], 0
    for a in pieces:
        rows = a.shape[0]
        pad = (-rows) % 8
        if pad:
            a = jnp.concatenate([a, jnp.zeros((pad, a.shape[1]), a.dtype)], axis=0)
        padded.append(a)
        offsets.append(off)
        off += rows + pad
    return jnp.concatenate(padded, axis=0), tuple(offsets)


def hmm_fused_pallas(x1, x2, ew1, ew2, p1, p2, p1_off, p2_off,
                     *, n_layers, n_heads, batch, hidden_dim, label_num):
    out_shapes = (jax.ShapeDtypeStruct((batch, hidden_dim), jnp.float32),
                  jax.ShapeDtypeStruct((batch, hidden_dim), jnp.float32),
                  jax.ShapeDtypeStruct((batch, label_num), jnp.float32))
    inputs = (x1, x2, ew1, ew2, p1, p2)
    kernel = functools.partial(_hmm_fused_kernel, n_layers=n_layers, n_heads=n_heads,
                               batch=batch, p1_off=p1_off, p2_off=p2_off)
    return pl.pallas_call(
        kernel,
        out_shape=out_shapes,
        grid=(1,),
        in_specs=[_full_spec(a.shape) for a in inputs],
        out_specs=tuple(_full_spec(s.shape) for s in out_shapes),
        compiler_params=pltpu.CompilerParams(dimension_semantics=("arbitrary",)),
    )(*inputs)


# ----------------------------------------------------------------------------
# Plain-JAX glue (tiny): edge-weight tables + input / parameter packing
# ----------------------------------------------------------------------------
def _edge_weights_all_layers(adj, attr, edge_emb, w_list, b_list, attr_dim, n_heads):
    """Per-layer edge weights in the kernel-friendly layout (L*B, N, H*N):
    slab[l*B + b, i, h*N + j] = Linear_l([edge_emb[adj[b,i,j]], edge_attr[b,i,j]])[h].
    The reference interface passes edge_attr as (B, N, N), so only attr_dim in {0, 1}
    is representable."""
    assert attr_dim in (0, 1), "edge_attr_dim > 1 is not representable by a (B,N,N) attr input"
    E = edge_emb.shape[1]
    emb = edge_emb.astype(jnp.float32)
    B, N, _ = adj.shape
    out = []
    for W, bvec in zip(w_list, b_list):
        W = W.astype(jnp.float32)                       # (heads, E + attr_dim)
        table = jnp.dot(emb, W[:, :E].T)                # (edge_type_num, heads)
        g = jnp.take(table, adj, axis=0)                # (B, N, N, heads)
        if attr_dim > 0:
            g = g + attr[..., None].astype(jnp.float32) * W[:, E]
        g = g + bvec.astype(jnp.float32)
        # heads head-major on the lane axis: (B, N, H*N), block h is the per-head (N, N)
        g = jnp.transpose(g, (0, 1, 3, 2)).reshape(B, N, n_heads * N)
        out.append(g)
    return jnp.concatenate(out, axis=0)                 # (L*B, N, H*N), index = l*B + b


def hmm_forward(params, cfg, nodes, v1nodes, v2nodes, v1adj, v2adj, v1edge_attr, v2edge_attr):
    f32 = jnp.float32
    B = nodes.shape[0]
    Hd = cfg["hidden_dim"]
    v1d, v2d = cfg["v1_dim"], cfg["v2_dim"]
    S2 = v2nodes.shape[1]
    N1 = v1nodes.shape[1] + 1
    N2 = S2 + 1
    H = cfg["edge_head_num"]
    label = cfg["label_num"]

    nodes = nodes.astype(f32)
    v1nodes = v1nodes.astype(f32)
    v2nodes = v2nodes.astype(f32)

    # v1 graph input: shared node row prepended; batch-stacked for one in-kernel matmul
    x1 = jnp.concatenate([nodes[:, None, :], v1nodes], axis=1).reshape(B * N1, v1d)
    # v2 graph input: block-diagonal augmentation (row 0 -> v1_map, rows 1.. -> v2_map)
    x2_top = jnp.concatenate([nodes[:, None, :], jnp.zeros((B, 1, v2d), f32)], axis=2)
    x2_bot = jnp.concatenate([jnp.zeros((B, S2, v1d), f32), v2nodes], axis=2)
    x2 = jnp.concatenate([x2_top, x2_bot], axis=1).reshape(B * N2, v1d + v2d)

    ew1 = _edge_weights_all_layers(v1adj, v1edge_attr, params["edge_emb"],
                                   params["w_e1"], params["b_e1"],
                                   cfg["v1_edge_attr_dim"], H)
    ew2 = _edge_weights_all_layers(v2adj, v2edge_attr, params["edge_emb"],
                                   params["w_e2"], params["b_e2"],
                                   cfg["v2_edge_attr_dim"], H)

    # ---- pack the small parameters into two slabs (one per lane width) ----
    w1t = params["w_v1"].T.astype(f32)                                              # (v1d, Hd)
    b1 = params["b_v1"].reshape(1, Hd).astype(f32)
    w2t = jnp.concatenate([params["w_v1"], params["w_v2"]], axis=1).T.astype(f32)   # (v1d+v2d, Hd)
    b2 = jnp.concatenate([params["b_v1"].reshape(1, Hd),
                          jnp.broadcast_to(params["b_v2"].reshape(1, Hd), (S2, Hd))],
                         axis=0).astype(f32)
    b2 = jnp.tile(b2, (B, 1))                                                       # (B*N2, Hd)
    wmm = params["w_mm"].astype(f32)                                                # (1, 2*Hd)
    p1, p1_off = _pack_rows([w1t, b1, w2t, b2, wmm[:, :Hd], wmm[:, Hd:]])

    wcls = params["w_cls"].astype(f32)                                              # (label, 2*Hd)
    bmm_row = jnp.broadcast_to(params["b_mm"].reshape(1, 1).astype(f32), (1, label))
    p2, p2_off = _pack_rows([wcls[:, :Hd].T, wcls[:, Hd:].T,
                             params["b_cls"].reshape(1, label).astype(f32), bmm_row])

    f2a, f2b, logits = hmm_fused_pallas(
        x1, x2, ew1, ew2, p1, p2, p1_off, p2_off,
        n_layers=cfg["edge_layer_num"], n_heads=H, batch=B,
        hidden_dim=Hd, label_num=label)

    f2 = jnp.concatenate([f2a, f2b], axis=1)
    # nn.Dropout(p=0.5): eval-mode identity (deterministic forward)
    return f2, logits


# ----------------------------------------------------------------------------
# Pure-JAX transcription of the PyTorch forward (used only for the self-check)
# ----------------------------------------------------------------------------
def _hmm_reference(params, cfg, nodes, v1nodes, v2nodes, v1adj, v2adj, v1edge_attr, v2edge_attr):
    B = nodes.shape[0]
    Hd = cfg["hidden_dim"]
    H = cfg["edge_head_num"]
    lin = lambda x, w, b: jnp.dot(x, w.T) + b
    v1map = lin(nodes, params["w_v1"], params["b_v1"])
    v1n = lin(v1nodes, params["w_v1"], params["b_v1"])
    v2n = lin(v2nodes, params["w_v2"], params["b_v2"])
    nodes_h = v1map.reshape(B, 1, Hd)
    v1n = jnp.concatenate([nodes_h, v1n], axis=1)
    v2n = jnp.concatenate([nodes_h, v2n], axis=1)
    N1, N2 = v1n.shape[1], v2n.shape[1]
    v1ee = params["edge_emb"][v1adj]
    v2ee = params["edge_emb"][v2adj]
    if cfg["v1_edge_attr_dim"] > 0:
        v1ee = jnp.concatenate([v1ee, v1edge_attr[..., None]], axis=3)
    if cfg["v2_edge_attr_dim"] > 0:
        v2ee = jnp.concatenate([v2ee, v2edge_attr[..., None]], axis=3)
    for i in range(cfg["edge_layer_num"]):
        w1 = lin(v1ee, params["w_e1"][i], params["b_e1"][i])
        w2 = lin(v2ee, params["w_e2"][i], params["b_e2"][i])
        s1 = jnp.einsum('bnd,bmd->bnm', v1n, v1n)
        s2 = jnp.einsum('bnd,bmd->bnm', v2n, v2n)
        a1 = jnp.transpose(s1[..., None] * w1, (0, 3, 1, 2)).reshape(B * H, N1, N1)
        a2 = jnp.transpose(s2[..., None] * w2, (0, 3, 1, 2)).reshape(B * H, N2, N2)
        a1 = jax.nn.softmax(a1, axis=-1)
        a2 = jax.nn.softmax(a2, axis=-1)
        v1r = jnp.broadcast_to(v1n[None], (H, B, N1, Hd)).reshape(-1, N1, Hd)
        v2r = jnp.broadcast_to(v2n[None], (H, B, N2, Hd)).reshape(-1, N2, Hd)
        v1n = jnp.einsum('gnm,gmd->gnd', a1, v1r).reshape(B, H, N1, Hd).mean(axis=1)
        v2n = jnp.einsum('gnm,gmd->gnd', a2, v2r).reshape(B, H, N2, Hd).mean(axis=1)
    v1emb, v2emb, nf = v1n.mean(axis=1), v2n.mean(axis=1), v1map
    v1e = jnp.concatenate([v1emb, nf], axis=1)[:, None]
    v2e = jnp.concatenate([v2emb, nf], axis=1)[:, None]
    nn_ = jnp.concatenate([nf, nf], axis=1)[:, None]
    v = jnp.concatenate([v1e, v2e, nn_], axis=1)
    alpha = lin(v, params["w_mm"], params["b_mm"])
    alpha = jnp.where(alpha > 0, alpha, 0.01 * alpha)
    alpha = jax.nn.softmax(alpha, axis=1)
    f2 = (v * alpha).mean(axis=1)
    logits = lin(f2, params["w_cls"], params["b_cls"])
    return f2, logits


# ----------------------------------------------------------------------------
# Deterministic parameter construction (PyTorch layout: nn.Linear W is (out, in))
# ----------------------------------------------------------------------------
def make_params(cfg, key):
    ks = jax.random.split(key, 16)
    Hd = cfg["hidden_dim"]
    heads = cfg["edge_head_num"]
    L = cfg["edge_layer_num"]
    E = cfg["edge_emb_dim"]

    def init(k, shape, scale=0.1):
        return (scale * jax.random.normal(k, shape)).astype(jnp.float32)

    params = {
        "edge_emb": init(ks[0], (cfg["edge_type_num"], E)),
        "w_v1": init(ks[1], (Hd, cfg["v1_dim"])),
        "b_v1": init(ks[2], (Hd,)),
        "w_v2": init(ks[3], (Hd, cfg["v2_dim"])),
        "b_v2": init(ks[4], (Hd,)),
        "w_mm": init(ks[5], (1, 2 * Hd)),
        "b_mm": init(ks[6], (1,)),
        "w_cls": init(ks[7], (cfg["label_num"], 2 * Hd)),
        "b_cls": init(ks[8], (cfg["label_num"],)),
        "w_e1": [], "b_e1": [], "w_e2": [], "b_e2": [],
    }
    lk = jax.random.split(ks[9], 4 * L)
    for i in range(L):
        params["w_e1"].append(init(lk[4 * i + 0], (heads, E + cfg["v1_edge_attr_dim"])))
        params["b_e1"].append(init(lk[4 * i + 1], (heads,)))
        params["w_e2"].append(init(lk[4 * i + 2], (heads, E + cfg["v2_edge_attr_dim"])))
        params["b_e2"].append(init(lk[4 * i + 3], (heads,)))
    return params


# ----------------------------------------------------------------------------
# Main
# ----------------------------------------------------------------------------
if __name__ == "__main__":
    cfg = dict(
        v1_dim=16, v2_dim=12,
        v1_sample_num=8, v2_sample_num=4,
        hidden_dim=32,
        v1_edge_attr_dim=1, v2_edge_attr_dim=1,
        edge_layer_num=2, edge_head_num=4,
        edge_type_num=6, edge_emb_dim=8,
        label_num=5,
    )
    B = 2
    N1 = cfg["v1_sample_num"] + 1
    N2 = cfg["v2_sample_num"] + 1

    key = jax.random.PRNGKey(0)
    k = jax.random.split(key, 8)
    nodes = jax.random.normal(k[0], (B, cfg["v1_dim"]), dtype=jnp.float32)
    v1nodes = jax.random.normal(k[1], (B, cfg["v1_sample_num"], cfg["v1_dim"]), dtype=jnp.float32)
    v2nodes = jax.random.normal(k[2], (B, cfg["v2_sample_num"], cfg["v2_dim"]), dtype=jnp.float32)
    v1adj = jax.random.randint(k[3], (B, N1, N1), 0, cfg["edge_type_num"], dtype=jnp.int32)
    v2adj = jax.random.randint(k[4], (B, N2, N2), 0, cfg["edge_type_num"], dtype=jnp.int32)
    v1edge_attr = jax.random.normal(k[5], (B, N1, N1), dtype=jnp.float32)
    v2edge_attr = jax.random.normal(k[6], (B, N2, N2), dtype=jnp.float32)

    params = make_params(cfg, jax.random.PRNGKey(42))

    fwd = jax.jit(functools.partial(hmm_forward, params, cfg))
    f2, logits = fwd(nodes, v1nodes, v2nodes, v1adj, v2adj, v1edge_attr, v2edge_attr)
    jax.block_until_ready((f2, logits))

    assert f2.shape == (B, 2 * cfg["hidden_dim"])
    assert logits.shape == (B, cfg["label_num"])
    assert bool(jnp.all(jnp.isfinite(f2))) and bool(jnp.all(jnp.isfinite(logits)))

    # cross-check against a pure-JAX transcription of the PyTorch forward
    f2_ref, logits_ref = _hmm_reference(params, cfg, nodes, v1nodes, v2nodes,
                                        v1adj, v2adj, v1edge_attr, v2edge_attr)
    assert bool(jnp.allclose(f2, f2_ref, atol=2e-3, rtol=2e-3))
    assert bool(jnp.allclose(logits, logits_ref, atol=2e-3, rtol=2e-3))

    print("KERNEL_OK")
</pallas_src>

<mosaic_0001>
module attributes {stable_mosaic.version = 11 : i64} {
  func.func @_hmm_fused_kernel(%arg0: i32, %arg1: memref<18x16xf32, #tpu.memory_space<vmem>>, %arg2: memref<10x28xf32, #tpu.memory_space<vmem>>, %arg3: memref<4x9x36xf32, #tpu.memory_space<vmem>>, %arg4: memref<4x5x20xf32, #tpu.memory_space<vmem>>, %arg5: memref<88x32xf32, #tpu.memory_space<vmem>>, %arg6: memref<80x5xf32, #tpu.memory_space<vmem>>, %arg7: memref<2x32xf32, #tpu.memory_space<vmem>>, %arg8: memref<2x32xf32, #tpu.memory_space<vmem>>, %arg9: memref<2x5xf32, #tpu.memory_space<vmem>>) attributes {dimension_semantics = [#tpu.dimension_semantics<arbitrary>], iteration_bounds = array<i64: 1>, scalar_prefetch = 0 : i64, scratch_operands = 0 : i64, tpu.core_type = #tpu.core_type<tc>, window_params = [{pipeline_mode = #tpu.pipeline_mode<synchronous>, transform_indices = @transform_0, window_bounds = array<i64: 18, 16>}, {pipeline_mode = #tpu.pipeline_mode<synchronous>, transform_indices = @transform_1, window_bounds = array<i64: 10, 28>}, {pipeline_mode = #tpu.pipeline_mode<synchronous>, transform_indices = @transform_2, window_bounds = array<i64: 4, 9, 36>}, {pipeline_mode = #tpu.pipeline_mode<synchronous>, transform_indices = @transform_3, window_bounds = array<i64: 4, 5, 20>}, {pipeline_mode = #tpu.pipeline_mode<synchronous>, transform_indices = @transform_4, window_bounds = array<i64: 88, 32>}, {pipeline_mode = #tpu.pipeline_mode<synchronous>, transform_indices = @transform_5, window_bounds = array<i64: 80, 5>}, {pipeline_mode = #tpu.pipeline_mode<synchronous>, transform_indices = @transform_6, window_bounds = array<i64: 2, 32>}, {pipeline_mode = #tpu.pipeline_mode<synchronous>, transform_indices = @transform_7, window_bounds = array<i64: 2, 32>}, {pipeline_mode = #tpu.pipeline_mode<synchronous>, transform_indices = @transform_8, window_bounds = array<i64: 2, 5>}]} {
    %c0 = arith.constant 0 : index
    %c0_0 = arith.constant 0 : index
    %0 = vector.load %arg5[%c0, %c0_0] : memref<88x32xf32, #tpu.memory_space<vmem>>, vector<16x32xf32>
    %c16 = arith.constant 16 : index
    %c0_1 = arith.constant 0 : index
    %1 = vector.load %arg5[%c16, %c0_1] : memref<88x32xf32, #tpu.memory_space<vmem>>, vector<1x32xf32>
    %c24 = arith.constant 24 : index
    %c0_2 = arith.constant 0 : index
    %2 = vector.load %arg5[%c24, %c0_2] : memref<88x32xf32, #tpu.memory_space<vmem>>, vector<28x32xf32>
    %c56 = arith.constant 56 : index
    %c0_3 = arith.constant 0 : index
    %3 = vector.load %arg5[%c56, %c0_3] : memref<88x32xf32, #tpu.memory_space<vmem>>, vector<10x32xf32>
    %c72 = arith.constant 72 : index
    %c0_4 = arith.constant 0 : index
    %4 = vector.load %arg5[%c72, %c0_4] : memref<88x32xf32, #tpu.memory_space<vmem>>, vector<1x32xf32>
    %c80 = arith.constant 80 : index
    %c0_5 = arith.constant 0 : index
    %5 = vector.load %arg5[%c80, %c0_5] : memref<88x32xf32, #tpu.memory_space<vmem>>, vector<1x32xf32>
    %c0_6 = arith.constant 0 : index
    %c0_7 = arith.constant 0 : index
    %6 = vector.load %arg6[%c0_6, %c0_7] : memref<80x5xf32, #tpu.memory_space<vmem>>, vector<32x5xf32>
    %c32 = arith.constant 32 : index
    %c0_8 = arith.constant 0 : index
    %7 = vector.load %arg6[%c32, %c0_8] : memref<80x5xf32, #tpu.memory_space<vmem>>, vector<32x5xf32>
    %c64 = arith.constant 64 : index
    %c0_9 = arith.constant 0 : index
    %8 = vector.load %arg6[%c64, %c0_9] : memref<80x5xf32, #tpu.memory_space<vmem>>, vector<1x5xf32>
    %c72_10 = arith.constant 72 : index
    %c0_11 = arith.constant 0 : index
    %9 = vector.load %arg6[%c72_10, %c0_11] : memref<80x5xf32, #tpu.memory_space<vmem>>, vector<1x5xf32>
    %10 = vector.extract_strided_slice %9 {offsets = [0, 0], sizes = [1, 1], strides = [1, 1]} : vector<1x5xf32> to vector<1x1xf32>
    %c0_12 = arith.constant 0 : index
    %c0_13 = arith.constant 0 : index
    %11 = vector.load %arg1[%c0_12, %c0_13] : memref<18x16xf32, #tpu.memory_space<vmem>>, vector<18x16xf32>
    %cst = arith.constant dense<0.000000e+00> : vector<18x32xf32>
    %12 = tpu.matmul %11, %0, %cst {dimension_numbers = #tpu.dot_dimension_numbers<[1], [0], [0], [1], [0, 0, 1, 1], [], []>} : vector<18x16xf32>, vector<16x32xf32>, vector<18x32xf32> -> vector<18x32xf32>
    %13 = vector.broadcast %1 : vector<1x32xf32> to vector<18x32xf32>
    %14 = arith.addf %12, %13 : vector<18x32xf32>
    %c0_14 = arith.constant 0 : index
    %c0_15 = arith.constant 0 : index
    %15 = vector.load %arg2[%c0_14, %c0_15] : memref<10x28xf32, #tpu.memory_space<vmem>>, vector<10x28xf32>
    %cst_16 = arith.constant dense<0.000000e+00> : vector<10x32xf32>
    %16 = tpu.matmul %15, %2, %cst_16 {dimension_numbers = #tpu.dot_dimension_numbers<[1], [0], [0], [1], [0, 0, 1, 1], [], []>} : vector<10x28xf32>, vector<28x32xf32>, vector<10x32xf32> -> vector<10x32xf32>
    %17 = arith.addf %16, %3 : vector<10x32xf32>
    %18 = vector.extract_strided_slice %14 {offsets = [0, 0], sizes = [9, 32], strides = [1, 1]} : vector<18x32xf32> to vector<9x32xf32>
    %19 = vector.extract_strided_slice %14 {offsets = [9, 0], sizes = [9, 32], strides = [1, 1]} : vector<18x32xf32> to vector<9x32xf32>
    %20 = vector.extract_strided_slice %17 {offsets = [0, 0], sizes = [5, 32], strides = [1, 1]} : vector<10x32xf32> to vector<5x32xf32>
    %21 = vector.extract_strided_slice %17 {offsets = [5, 0], sizes = [5, 32], strides = [1, 1]} : vector<10x32xf32> to vector<5x32xf32>
    %22 = tpu.iota {dimensions = array<i32: 0>} : vector<9x36xi32>
    %23 = tpu.iota {dimensions = array<i32: 1>} : vector<9x36xi32>
    %24 = tpu.iota {dimensions = array<i32: 0>} : vector<36x36xi32>
    %25 = tpu.iota {dimensions = array<i32: 1>} : vector<36x36xi32>
    %26 = tpu.iota {dimensions = array<i32: 0>} : vector<36x9xi32>
    %27 = tpu.iota {dimensions = array<i32: 1>} : vector<36x9xi32>
    %cst_17 = arith.constant 0.000000e+00 : f32
    %28 = vector.broadcast %cst_17 : f32 to vector<9x36xf32>
    %cst_18 = arith.constant 0.000000e+00 : f32
    %29 = vector.broadcast %cst_18 : f32 to vector<36x36xf32>
    %c0_i32 = arith.constant 0 : i32
    %30 = vector.broadcast %c0_i32 : i32 to vector<9x36xi32>
    %31 = arith.cmpi sge, %23, %30 : vector<9x36xi32>
    %c9_i32 = arith.constant 9 : i32
    %32 = vector.broadcast %c9_i32 : i32 to vector<9x36xi32>
    %33 = arith.cmpi slt, %23, %32 : vector<9x36xi32>
    %34 = arith.andi %31, %33 : vector<9x36xi1>
    %c0_i32_19 = arith.constant 0 : i32
    %35 = vector.broadcast %c0_i32_19 : i32 to vector<9x36xi32>
    %36 = arith.subi %23, %35 : vector<9x36xi32>
    %37 = arith.cmpi eq, %36, %22 : vector<9x36xi32>
    %38 = arith.andi %34, %37 : vector<9x36xi1>
    %cst_20 = arith.constant 1.000000e+00 : f32
    %39 = vector.broadcast %cst_20 : f32 to vector<9x36xf32>
    %40 = arith.select %38, %39, %28 : vector<9x36xi1>, vector<9x36xf32>
    %c0_i32_21 = arith.constant 0 : i32
    %41 = vector.broadcast %c0_i32_21 : i32 to vector<36x36xi32>
    %42 = arith.cmpi sge, %24, %41 : vector<36x36xi32>
    %c9_i32_22 = arith.constant 9 : i32
    %43 = vector.broadcast %c9_i32_22 : i32 to vector<36x36xi32>
    %44 = arith.cmpi slt, %24, %43 : vector<36x36xi32>
    %45 = arith.andi %42, %44 : vector<36x36xi1>
    %c0_i32_23 = arith.constant 0 : i32
    %46 = vector.broadcast %c0_i32_23 : i32 to vector<36x36xi32>
    %47 = arith.cmpi sge, %25, %46 : vector<36x36xi32>
    %48 = arith.andi %45, %47 : vector<36x36xi1>
    %c9_i32_24 = arith.constant 9 : i32
    %49 = vector.broadcast %c9_i32_24 : i32 to vector<36x36xi32>
    %50 = arith.cmpi slt, %25, %49 : vector<36x36xi32>
    %51 = arith.andi %48, %50 : vector<36x36xi1>
    %cst_25 = arith.constant 1.000000e+00 : f32
    %52 = vector.broadcast %cst_25 : f32 to vector<36x36xf32>
    %53 = arith.select %51, %52, %29 : vector<36x36xi1>, vector<36x36xf32>
    %c9_i32_26 = arith.constant 9 : i32
    %54 = vector.broadcast %c9_i32_26 : i32 to vector<9x36xi32>
    %55 = arith.cmpi sge, %23, %54 : vector<9x36xi32>
    %c18_i32 = arith.constant 18 : i32
    %56 = vector.broadcast %c18_i32 : i32 to vector<9x36xi32>
    %57 = arith.cmpi slt, %23, %56 : vector<9x36xi32>
    %58 = arith.andi %55, %57 : vector<9x36xi1>
    %c9_i32_27 = arith.constant 9 : i32
    %59 = vector.broadcast %c9_i32_27 : i32 to vector<9x36xi32>
    %60 = arith.subi %23, %59 : vector<9x36xi32>
    %61 = arith.cmpi eq, %60, %22 : vector<9x36xi32>
    %62 = arith.andi %58, %61 : vector<9x36xi1>
    %cst_28 = arith.constant 1.000000e+00 : f32
    %63 = vector.broadcast %cst_28 : f32 to vector<9x36xf32>
    %64 = arith.select %62, %63, %40 : vector<9x36xi1>, vector<9x36xf32>
    %c9_i32_29 = arith.constant 9 : i32
    %65 = vector.broadcast %c9_i32_29 : i32 to vector<36x36xi32>
    %66 = arith.cmpi sge, %24, %65 : vector<36x36xi32>
    %c18_i32_30 = arith.constant 18 : i32
    %67 = vector.broadcast %c18_i32_30 : i32 to vector<36x36xi32>
    %68 = arith.cmpi slt, %24, %67 : vector<36x36xi32>
    %69 = arith.andi %66, %68 : vector<36x36xi1>
    %c9_i32_31 = arith.constant 9 : i32
    %70 = vector.broadcast %c9_i32_31 : i32 to vector<36x36xi32>
    %71 = arith.cmpi sge, %25, %70 : vector<36x36xi32>
    %72 = arith.andi %69, %71 : vector<36x36xi1>
    %c18_i32_32 = arith.constant 18 : i32
    %73 = vector.broadcast %c18_i32_32 : i32 to vector<36x36xi32>
    %74 = arith.cmpi slt, %25, %73 : vector<36x36xi32>
    %75 = arith.andi %72, %74 : vector<36x36xi1>
    %cst_33 = arith.constant 1.000000e+00 : f32
    %76 = vector.broadcast %cst_33 : f32 to vector<36x36xf32>
    %77 = arith.select %75, %76, %53 : vector<36x36xi1>, vector<36x36xf32>
    %c18_i32_34 = arith.constant 18 : i32
    %78 = vector.broadcast %c18_i32_34 : i32 to vector<9x36xi32>
    %79 = arith.cmpi sge, %23, %78 : vector<9x36xi32>
    %c27_i32 = arith.constant 27 : i32
    %80 = vector.broadcast %c27_i32 : i32 to vector<9x36xi32>
    %81 = arith.cmpi slt, %23, %80 : vector<9x36xi32>
    %82 = arith.andi %79, %81 : vector<9x36xi1>
    %c18_i32_35 = arith.constant 18 : i32
    %83 = vector.broadcast %c18_i32_35 : i32 to vector<9x36xi32>
    %84 = arith.subi %23, %83 : vector<9x36xi32>
    %85 = arith.cmpi eq, %84, %22 : vector<9x36xi32>
    %86 = arith.andi %82, %85 : vector<9x36xi1>
    %cst_36 = arith.constant 1.000000e+00 : f32
    %87 = vector.broadcast %cst_36 : f32 to vector<9x36xf32>
    %88 = arith.select %86, %87, %64 : vector<9x36xi1>, vector<9x36xf32>
    %c18_i32_37 = arith.constant 18 : i32
    %89 = vector.broadcast %c18_i32_37 : i32 to vector<36x36xi32>
    %90 = arith.cmpi sge, %24, %89 : vector<36x36xi32>
    %c27_i32_38 = arith.constant 27 : i32
    %91 = vector.broadcast %c27_i32_38 : i32 to vector<36x36xi32>
    %92 = arith.cmpi slt, %24, %91 : vector<36x36xi32>
    %93 = arith.andi %90, %92 : vector<36x36xi1>
    %c18_i32_39 = arith.constant 18 : i32
    %94 = vector.broadcast %c18_i32_39 : i32 to vector<36x36xi32>
    %95 = arith.cmpi sge, %25, %94 : vector<36x36xi32>
    %96 = arith.andi %93, %95 : vector<36x36xi1>
    %c27_i32_40 = arith.constant 27 : i32
    %97 = vector.broadcast %c27_i32_40 : i32 to vector<36x36xi32>
    %98 = arith.cmpi slt, %25, %97 : vector<36x36xi32>
    %99 = arith.andi %96, %98 : vector<36x36xi1>
    %cst_41 = arith.constant 1.000000e+00 : f32
    %100 = vector.broadcast %cst_41 : f32 to vector<36x36xf32>
    %101 = arith.select %99, %100, %77 : vector<36x36xi1>, vector<36x36xf32>
    %c27_i32_42 = arith.constant 27 : i32
    %102 = vector.broadcast %c27_i32_42 : i32 to vector<9x36xi32>
    %103 = arith.cmpi sge, %23, %102 : vector<9x36xi32>
    %c36_i32 = arith.constant 36 : i32
    %104 = vector.broadcast %c36_i32 : i32 to vector<9x36xi32>
    %105 = arith.cmpi slt, %23, %104 : vector<9x36xi32>
    %106 = arith.andi %103, %105 : vector<9x36xi1>
    %c27_i32_43 = arith.constant 27 : i32
    %107 = vector.broadcast %c27_i32_43 : i32 to vector<9x36xi32>
    %108 = arith.subi %23, %107 : vector<9x36xi32>
    %109 = arith.cmpi eq, %108, %22 : vector<9x36xi32>
    %110 = arith.andi %106, %109 : vector<9x36xi1>
    %cst_44 = arith.constant 1.000000e+00 : f32
    %111 = vector.broadcast %cst_44 : f32 to vector<9x36xf32>
    %112 = arith.select %110, %111, %88 : vector<9x36xi1>, vector<9x36xf32>
    %c27_i32_45 = arith.constant 27 : i32
    %113 = vector.broadcast %c27_i32_45 : i32 to vector<36x36xi32>
    %114 = arith.cmpi sge, %24, %113 : vector<36x36xi32>
    %c36_i32_46 = arith.constant 36 : i32
    %115 = vector.broadcast %c36_i32_46 : i32 to vector<36x36xi32>
    %116 = arith.cmpi slt, %24, %115 : vector<36x36xi32>
    %117 = arith.andi %114, %116 : vector<36x36xi1>
    %c27_i32_47 = arith.constant 27 : i32
    %118 = vector.broadcast %c27_i32_47 : i32 to vector<36x36xi32>
    %119 = arith.cmpi sge, %25, %118 : vector<36x36xi32>
    %120 = arith.andi %117, %119 : vector<36x36xi1>
    %c36_i32_48 = arith.constant 36 : i32
    %121 = vector.broadcast %c36_i32_48 : i32 to vector<36x36xi32>
    %122 = arith.cmpi slt, %25, %121 : vector<36x36xi32>
    %123 = arith.andi %120, %122 : vector<36x36xi1>
    %cst_49 = arith.constant 1.000000e+00 : f32
    %124 = vector.broadcast %cst_49 : f32 to vector<36x36xf32>
    %125 = arith.select %123, %124, %101 : vector<36x36xi1>, vector<36x36xf32>
    %cst_50 = arith.constant 0.000000e+00 : f32
    %126 = vector.broadcast %cst_50 : f32 to vector<36x9xf32>
    %c0_i32_51 = arith.constant 0 : i32
    %127 = vector.broadcast %c0_i32_51 : i32 to vector<36x9xi32>
    %128 = arith.cmpi sge, %26, %127 : vector<36x9xi32>
    %c9_i32_52 = arith.constant 9 : i32
    %129 = vector.broadcast %c9_i32_52 : i32 to vector<36x9xi32>
    %130 = arith.cmpi slt, %26, %129 : vector<36x9xi32>
    %131 = arith.andi %128, %130 : vector<36x9xi1>
    %c0_i32_53 = arith.constant 0 : i32
    %132 = vector.broadcast %c0_i32_53 : i32 to vector<36x9xi32>
    %133 = arith.subi %26, %132 : vector<36x9xi32>
    %134 = arith.cmpi eq, %133, %27 : vector<36x9xi32>
    %135 = arith.andi %131, %134 : vector<36x9xi1>
    %cst_54 = arith.constant 1.000000e+00 : f32
    %136 = vector.broadcast %cst_54 : f32 to vector<36x9xf32>
    %137 = arith.select %135, %136, %126 : vector<36x9xi1>, vector<36x9xf32>
    %c18_i32_55 = arith.constant 18 : i32
    %138 = vector.broadcast %c18_i32_55 : i32 to vector<36x9xi32>
    %139 = arith.cmpi sge, %26, %138 : vector<36x9xi32>
    %c27_i32_56 = arith.constant 27 : i32
    %140 = vector.broadcast %c27_i32_56 : i32 to vector<36x9xi32>
    %141 = arith.cmpi slt, %26, %140 : vector<36x9xi32>
    %142 = arith.andi %139, %141 : vector<36x9xi1>
    %c18_i32_57 = arith.constant 18 : i32
    %143 = vector.broadcast %c18_i32_57 : i32 to vector<36x9xi32>
    %144 = arith.subi %26, %143 : vector<36x9xi32>
    %145 = arith.cmpi eq, %144, %27 : vector<36x9xi32>
    %146 = arith.andi %142, %145 : vector<36x9xi1>
    %cst_58 = arith.constant 1.000000e+00 : f32
    %147 = vector.broadcast %cst_58 : f32 to vector<36x9xf32>
    %148 = arith.select %146, %147, %137 : vector<36x9xi1>, vector<36x9xf32>
    %cst_59 = arith.constant 0.000000e+00 : f32
    %149 = vector.broadcast %cst_59 : f32 to vector<36x9xf32>
    %c9_i32_60 = arith.constant 9 : i32
    %150 = vector.broadcast %c9_i32_60 : i32 to vector<36x9xi32>
    %151 = arith.cmpi sge, %26, %150 : vector<36x9xi32>
    %c18_i32_61 = arith.constant 18 : i32
    %152 = vector.broadcast %c18_i32_61 : i32 to vector<36x9xi32>
    %153 = arith.cmpi slt, %26, %152 : vector<36x9xi32>
    %154 = arith.andi %151, %153 : vector<36x9xi1>
    %c9_i32_62 = arith.constant 9 : i32
    %155 = vector.broadcast %c9_i32_62 : i32 to vector<36x9xi32>
    %156 = arith.subi %26, %155 : vector<36x9xi32>
    %157 = arith.cmpi eq, %156, %27 : vector<36x9xi32>
    %158 = arith.andi %154, %157 : vector<36x9xi1>
    %cst_63 = arith.constant 1.000000e+00 : f32
    %159 = vector.broadcast %cst_63 : f32 to vector<36x9xf32>
    %160 = arith.select %158, %159, %149 : vector<36x9xi1>, vector<36x9xf32>
    %c27_i32_64 = arith.constant 27 : i32
    %161 = vector.broadcast %c27_i32_64 : i32 to vector<36x9xi32>
    %162 = arith.cmpi sge, %26, %161 : vector<36x9xi32>
    %c36_i32_65 = arith.constant 36 : i32
    %163 = vector.broadcast %c36_i32_65 : i32 to vector<36x9xi32>
    %164 = arith.cmpi slt, %26, %163 : vector<36x9xi32>
    %165 = arith.andi %162, %164 : vector<36x9xi1>
    %c27_i32_66 = arith.constant 27 : i32
    %166 = vector.broadcast %c27_i32_66 : i32 to vector<36x9xi32>
    %167 = arith.subi %26, %166 : vector<36x9xi32>
    %168 = arith.cmpi eq, %167, %27 : vector<36x9xi32>
    %169 = arith.andi %165, %168 : vector<36x9xi1>
    %cst_67 = arith.constant 1.000000e+00 : f32
    %170 = vector.broadcast %cst_67 : f32 to vector<36x9xf32>
    %171 = arith.select %169, %170, %160 : vector<36x9xi1>, vector<36x9xf32>
    %cst_68 = arith.constant 0.000000e+00 : f32
    %172 = vector.broadcast %cst_68 : f32 to vector<36x32xf32>
    %cst_69 = arith.constant dense<0.000000e+00> : vector<36x32xf32>
    %173 = tpu.matmul %148, %18, %cst_69 {dimension_numbers = #tpu.dot_dimension_numbers<[1], [0], [0], [1], [0, 0, 1, 1], [], []>} : vector<36x9xf32>, vector<9x32xf32>, vector<36x32xf32> -> vector<36x32xf32>
    %174 = arith.addf %172, %173 : vector<36x32xf32>
    %cst_70 = arith.constant dense<0.000000e+00> : vector<36x32xf32>
    %175 = tpu.matmul %171, %19, %cst_70 {dimension_numbers = #tpu.dot_dimension_numbers<[1], [0], [0], [1], [0, 0, 1, 1], [], []>} : vector<36x9xf32>, vector<9x32xf32>, vector<36x32xf32> -> vector<36x32xf32>
    %176 = arith.addf %174, %175 : vector<36x32xf32>
    %cst_71 = arith.constant dense<0.000000e+00> : vector<9x9xf32>
    %177 = tpu.matmul %18, %18, %cst_71 {dimension_numbers = #tpu.dot_dimension_numbers<[1], [1], [0], [0], [0, 0, 1, 0], [], []>} : vector<9x32xf32>, vector<9x32xf32>, vector<9x9xf32> -> vector<9x9xf32>
    %cst_72 = arith.constant dense<0.000000e+00> : vector<9x36xf32>
    %178 = tpu.matmul %177, %112, %cst_72 {dimension_numbers = #tpu.dot_dimension_numbers<[1], [0], [0], [1], [0, 0, 1, 1], [], []>} : vector<9x9xf32>, vector<9x36xf32>, vector<9x36xf32> -> vector<9x36xf32>
    %c0_73 = arith.constant 0 : index
    %c0_74 = arith.constant 0 : index
    %c0_75 = arith.constant 0 : index
    %179 = vector.load %arg3[%c0_73, %c0_74, %c0_75] : memref<4x9x36xf32, #tpu.memory_space<vmem>>, vector<1x9x36xf32>
    %180 = vector.shape_cast %179 : vector<1x9x36xf32> to vector<9x36xf32>
    %181 = arith.mulf %178, %180 : vector<9x36xf32>
    %cst_76 = arith.constant dense<0xFF800000> : vector<9xf32>
    %182 = vector.multi_reduction <maximumf>, %181, %cst_76 [1] : vector<9x36xf32> to vector<9xf32>
    %183 = vector.shape_cast %182 : vector<9xf32> to vector<9x1xf32>
    %184 = vector.broadcast %183 : vector<9x1xf32> to vector<9x36xf32>
    %185 = arith.subf %181, %184 : vector<9x36xf32>
    %186 = math.exp %185 : vector<9x36xf32>
    %cst_77 = arith.constant dense<0.000000e+00> : vector<9x36xf32>
    %187 = tpu.matmul %186, %125, %cst_77 {dimension_numbers = #tpu.dot_dimension_numbers<[1], [0], [0], [1], [0, 0, 1, 1], [], []>} : vector<9x36xf32>, vector<36x36xf32>, vector<9x36xf32> -> vector<9x36xf32>
    %188 = arith.divf %186, %187 : vector<9x36xf32>
    %cst_78 = arith.constant dense<0.000000e+00> : vector<9x32xf32>
    %189 = tpu.matmul %188, %176, %cst_78 {dimension_numbers = #tpu.dot_dimension_numbers<[1], [0], [0], [1], [0, 0, 1, 1], [], []>} : vector<9x36xf32>, vector<36x32xf32>, vector<9x32xf32> -> vector<9x32xf32>
    %cst_79 = arith.constant 2.500000e-01 : f32
    %190 = vector.broadcast %cst_79 : f32 to vector<9x32xf32>
    %191 = arith.mulf %189, %190 : vector<9x32xf32>
    %cst_80 = arith.constant dense<0.000000e+00> : vector<9x9xf32>
    %192 = tpu.matmul %19, %19, %cst_80 {dimension_numbers = #tpu.dot_dimension_numbers<[1], [1], [0], [0], [0, 0, 1, 0], [], []>} : vector<9x32xf32>, vector<9x32xf32>, vector<9x9xf32> -> vector<9x9xf32>
    %cst_81 = arith.constant dense<0.000000e+00> : vector<9x36xf32>
    %193 = tpu.matmul %192, %112, %cst_81 {dimension_numbers = #tpu.dot_dimension_numbers<[1], [0], [0], [1], [0, 0, 1, 1], [], []>} : vector<9x9xf32>, vector<9x36xf32>, vector<9x36xf32> -> vector<9x36xf32>
    %c1 = arith.constant 1 : index
    %c0_82 = arith.constant 0 : index
    %c0_83 = arith.constant 0 : index
    %194 = vector.load %arg3[%c1, %c0_82, %c0_83] : memref<4x9x36xf32, #tpu.memory_space<vmem>>, vector<1x9x36xf32>
    %195 = vector.shape_cast %194 : vector<1x9x36xf32> to vector<9x36xf32>
    %196 = arith.mulf %193, %195 : vector<9x36xf32>
    %cst_84 = arith.constant dense<0xFF800000> : vector<9xf32>
    %197 = vector.multi_reduction <maximumf>, %196, %cst_84 [1] : vector<9x36xf32> to vector<9xf32>
    %198 = vector.shape_cast %197 : vector<9xf32> to vector<9x1xf32>
    %199 = vector.broadcast %198 : vector<9x1xf32> to vector<9x36xf32>
    %200 = arith.subf %196, %199 : vector<9x36xf32>
    %201 = math.exp %200 : vector<9x36xf32>
    %cst_85 = arith.constant dense<0.000000e+00> : vector<9x36xf32>
    %202 = tpu.matmul %201, %125, %cst_85 {dimension_numbers = #tpu.dot_dimension_numbers<[1], [0], [0], [1], [0, 0, 1, 1], [], []>} : vector<9x36xf32>, vector<36x36xf32>, vector<9x36xf32> -> vector<9x36xf32>
    %203 = arith.divf %201, %202 : vector<9x36xf32>
    %cst_86 = arith.constant dense<0.000000e+00> : vector<9x32xf32>
    %204 = tpu.matmul %203, %176, %cst_86 {dimension_numbers = #tpu.dot_dimension_numbers<[1], [0], [0], [1], [0, 0, 1, 1], [], []>} : vector<9x36xf32>, vector<36x32xf32>, vector<9x32xf32> -> vector<9x32xf32>
    %cst_87 = arith.constant 2.500000e-01 : f32
    %205 = vector.broadcast %cst_87 : f32 to vector<9x32xf32>
    %206 = arith.mulf %204, %205 : vector<9x32xf32>
    %cst_88 = arith.constant 0.000000e+00 : f32
    %207 = vector.broadcast %cst_88 : f32 to vector<36x32xf32>
    %cst_89 = arith.constant dense<0.000000e+00> : vector<36x32xf32>
    %208 = tpu.matmul %148, %191, %cst_89 {dimension_numbers = #tpu.dot_dimension_numbers<[1], [0], [0], [1], [0, 0, 1, 1], [], []>} : vector<36x9xf32>, vector<9x32xf32>, vector<36x32xf32> -> vector<36x32xf32>
    %209 = arith.addf %207, %208 : vector<36x32xf32>
    %cst_90 = arith.constant dense<0.000000e+00> : vector<36x32xf32>
    %210 = tpu.matmul %171, %206, %cst_90 {dimension_numbers = #tpu.dot_dimension_numbers<[1], [0], [0], [1], [0, 0, 1, 1], [], []>} : vector<36x9xf32>, vector<9x32xf32>, vector<36x32xf32> -> vector<36x32xf32>
    %211 = arith.addf %209, %210 : vector<36x32xf32>
    %cst_91 = arith.constant dense<0.000000e+00> : vector<9x9xf32>
    %212 = tpu.matmul %191, %191, %cst_91 {dimension_numbers = #tpu.dot_dimension_numbers<[1], [1], [0], [0], [0, 0, 1, 0], [], []>} : vector<9x32xf32>, vector<9x32xf32>, vector<9x9xf32> -> vector<9x9xf32>
    %cst_92 = arith.constant dense<0.000000e+00> : vector<9x36xf32>
    %213 = tpu.matmul %212, %112, %cst_92 {dimension_numbers = #tpu.dot_dimension_numbers<[1], [0], [0], [1], [0, 0, 1, 1], [], []>} : vector<9x9xf32>, vector<9x36xf32>, vector<9x36xf32> -> vector<9x36xf32>
    %c2 = arith.constant 2 : index
    %c0_93 = arith.constant 0 : index
    %c0_94 = arith.constant 0 : index
    %214 = vector.load %arg3[%c2, %c0_93, %c0_94] : memref<4x9x36xf32, #tpu.memory_space<vmem>>, vector<1x9x36xf32>
    %215 = vector.shape_cast %214 : vector<1x9x36xf32> to vector<9x36xf32>
    %216 = arith.mulf %213, %215 : vector<9x36xf32>
    %cst_95 = arith.constant dense<0xFF800000> : vector<9xf32>
    %217 = vector.multi_reduction <maximumf>, %216, %cst_95 [1] : vector<9x36xf32> to vector<9xf32>
    %218 = vector.shape_cast %217 : vector<9xf32> to vector<9x1xf32>
    %219 = vector.broadcast %218 : vector<9x1xf32> to vector<9x36xf32>
    %220 = arith.subf %216, %219 : vector<9x36xf32>
    %221 = math.exp %220 : vector<9x36xf32>
    %cst_96 = arith.constant dense<0.000000e+00> : vector<9x36xf32>
    %222 = tpu.matmul %221, %125, %cst_96 {dimension_numbers = #tpu.dot_dimension_numbers<[1], [0], [0], [1], [0, 0, 1, 1], [], []>} : vector<9x36xf32>, vector<36x36xf32>, vector<9x36xf32> -> vector<9x36xf32>
    %223 = arith.divf %221, %222 : vector<9x36xf32>
    %cst_97 = arith.constant dense<0.000000e+00> : vector<9x32xf32>
    %224 = tpu.matmul %223, %211, %cst_97 {dimension_numbers = #tpu.dot_dimension_numbers<[1], [0], [0], [1], [0, 0, 1, 1], [], []>} : vector<9x36xf32>, vector<36x32xf32>, vector<9x32xf32> -> vector<9x32xf32>
    %cst_98 = arith.constant 2.500000e-01 : f32
    %225 = vector.broadcast %cst_98 : f32 to vector<9x32xf32>
    %226 = arith.mulf %224, %225 : vector<9x32xf32>
    %cst_99 = arith.constant dense<0.000000e+00> : vector<9x9xf32>
    %227 = tpu.matmul %206, %206, %cst_99 {dimension_numbers = #tpu.dot_dimension_numbers<[1], [1], [0], [0], [0, 0, 1, 0], [], []>} : vector<9x32xf32>, vector<9x32xf32>, vector<9x9xf32> -> vector<9x9xf32>
    %cst_100 = arith.constant dense<0.000000e+00> : vector<9x36xf32>
    %228 = tpu.matmul %227, %112, %cst_100 {dimension_numbers = #tpu.dot_dimension_numbers<[1], [0], [0], [1], [0, 0, 1, 1], [], []>} : vector<9x9xf32>, vector<9x36xf32>, vector<9x36xf32> -> vector<9x36xf32>
    %c3 = arith.constant 3 : index
    %c0_101 = arith.constant 0 : index
    %c0_102 = arith.constant 0 : index
    %229 = vector.load %arg3[%c3, %c0_101, %c0_102] : memref<4x9x36xf32, #tpu.memory_space<vmem>>, vector<1x9x36xf32>
    %230 = vector.shape_cast %229 : vector<1x9x36xf32> to vector<9x36xf32>
    %231 = arith.mulf %228, %230 : vector<9x36xf32>
    %cst_103 = arith.constant dense<0xFF800000> : vector<9xf32>
    %232 = vector.multi_reduction <maximumf>, %231, %cst_103 [1] : vector<9x36xf32> to vector<9xf32>
    %233 = vector.shape_cast %232 : vector<9xf32> to vector<9x1xf32>
    %234 = vector.broadcast %233 : vector<9x1xf32> to vector<9x36xf32>
    %235 = arith.subf %231, %234 : vector<9x36xf32>
    %236 = math.exp %235 : vector<9x36xf32>
    %cst_104 = arith.constant dense<0.000000e+00> : vector<9x36xf32>
    %237 = tpu.matmul %236, %125, %cst_104 {dimension_numbers = #tpu.dot_dimension_numbers<[1], [0], [0], [1], [0, 0, 1, 1], [], []>} : vector<9x36xf32>, vector<36x36xf32>, vector<9x36xf32> -> vector<9x36xf32>
    %238 = arith.divf %236, %237 : vector<9x36xf32>
    %cst_105 = arith.constant dense<0.000000e+00> : vector<9x32xf32>
    %239 = tpu.matmul %238, %211, %cst_105 {dimension_numbers = #tpu.dot_dimension_numbers<[1], [0], [0], [1], [0, 0, 1, 1], [], []>} : vector<9x36xf32>, vector<36x32xf32>, vector<9x32xf32> -> vector<9x32xf32>
    %cst_106 = arith.constant 2.500000e-01 : f32
    %240 = vector.broadcast %cst_106 : f32 to vector<9x32xf32>
    %241 = arith.mulf %239, %240 : vector<9x32xf32>
    %242 = tpu.iota {dimensions = array<i32: 0>} : vector<5x20xi32>
    %243 = tpu.iota {dimensions = array<i32: 1>} : vector<5x20xi32>
    %244 = tpu.iota {dimensions = array<i32: 0>} : vector<20x20xi32>
    %245 = tpu.iota {dimensions = array<i32: 1>} : vector<20x20xi32>
    %246 = tpu.iota {dimensions = array<i32: 0>} : vector<20x5xi32>
    %247 = tpu.iota {dimensions = array<i32: 1>} : vector<20x5xi32>
    %cst_107 = arith.constant 0.000000e+00 : f32
    %248 = vector.broadcast %cst_107 : f32 to vector<5x20xf32>
    %cst_108 = arith.constant 0.000000e+00 : f32
    %249 = vector.broadcast %cst_108 : f32 to vector<20x20xf32>
    %c0_i32_109 = arith.constant 0 : i32
    %250 = vector.broadcast %c0_i32_109 : i32 to vector<5x20xi32>
    %251 = arith.cmpi sge, %243, %250 : vector<5x20xi32>
    %c5_i32 = arith.constant 5 : i32
    %252 = vector.broadcast %c5_i32 : i32 to vector<5x20xi32>
    %253 = arith.cmpi slt, %243, %252 : vector<5x20xi32>
    %254 = arith.andi %251, %253 : vector<5x20xi1>
    %c0_i32_110 = arith.constant 0 : i32
    %255 = vector.broadcast %c0_i32_110 : i32 to vector<5x20xi32>
    %256 = arith.subi %243, %255 : vector<5x20xi32>
    %257 = arith.cmpi eq, %256, %242 : vector<5x20xi32>
    %258 = arith.andi %254, %257 : vector<5x20xi1>
    %cst_111 = arith.constant 1.000000e+00 : f32
    %259 = vector.broadcast %cst_111 : f32 to vector<5x20xf32>
    %260 = arith.select %258, %259, %248 : vector<5x20xi1>, vector<5x20xf32>
    %c0_i32_112 = arith.constant 0 : i32
    %261 = vector.broadcast %c0_i32_112 : i32 to vector<20x20xi32>
    %262 = arith.cmpi sge, %244, %261 : vector<20x20xi32>
    %c5_i32_113 = arith.constant 5 : i32
    %263 = vector.broadcast %c5_i32_113 : i32 to vector<20x20xi32>
    %264 = arith.cmpi slt, %244, %263 : vector<20x20xi32>
    %265 = arith.andi %262, %264 : vector<20x20xi1>
    %c0_i32_114 = arith.constant 0 : i32
    %266 = vector.broadcast %c0_i32_114 : i32 to vector<20x20xi32>
    %267 = arith.cmpi sge, %245, %266 : vector<20x20xi32>
    %268 = arith.andi %265, %267 : vector<20x20xi1>
    %c5_i32_115 = arith.constant 5 : i32
    %269 = vector.broadcast %c5_i32_115 : i32 to vector<20x20xi32>
    %270 = arith.cmpi slt, %245, %269 : vector<20x20xi32>
    %271 = arith.andi %268, %270 : vector<20x20xi1>
    %cst_116 = arith.constant 1.000000e+00 : f32
    %272 = vector.broadcast %cst_116 : f32 to vector<20x20xf32>
    %273 = arith.select %271, %272, %249 : vector<20x20xi1>, vector<20x20xf32>
    %c5_i32_117 = arith.constant 5 : i32
    %274 = vector.broadcast %c5_i32_117 : i32 to vector<5x20xi32>
    %275 = arith.cmpi sge, %243, %274 : vector<5x20xi32>
    %c10_i32 = arith.constant 10 : i32
    %276 = vector.broadcast %c10_i32 : i32 to vector<5x20xi32>
    %277 = arith.cmpi slt, %243, %276 : vector<5x20xi32>
    %278 = arith.andi %275, %277 : vector<5x20xi1>
    %c5_i32_118 = arith.constant 5 : i32
    %279 = vector.broadcast %c5_i32_118 : i32 to vector<5x20xi32>
    %280 = arith.subi %243, %279 : vector<5x20xi32>
    %281 = arith.cmpi eq, %280, %242 : vector<5x20xi32>
    %282 = arith.andi %278, %281 : vector<5x20xi1>
    %cst_119 = arith.constant 1.000000e+00 : f32
    %283 = vector.broadcast %cst_119 : f32 to vector<5x20xf32>
    %284 = arith.select %282, %283, %260 : vector<5x20xi1>, vector<5x20xf32>
    %c5_i32_120 = arith.constant 5 : i32
    %285 = vector.broadcast %c5_i32_120 : i32 to vector<20x20xi32>
    %286 = arith.cmpi sge, %244, %285 : vector<20x20xi32>
    %c10_i32_121 = arith.constant 10 : i32
    %287 = vector.broadcast %c10_i32_121 : i32 to vector<20x20xi32>
    %288 = arith.cmpi slt, %244, %287 : vector<20x20xi32>
    %289 = arith.andi %286, %288 : vector<20x20xi1>
    %c5_i32_122 = arith.constant 5 : i32
    %290 = vector.broadcast %c5_i32_122 : i32 to vector<20x20xi32>
    %291 = arith.cmpi sge, %245, %290 : vector<20x20xi32>
    %292 = arith.andi %289, %291 : vector<20x20xi1>
    %c10_i32_123 = arith.constant 10 : i32
    %293 = vector.broadcast %c10_i32_123 : i32 to vector<20x20xi32>
    %294 = arith.cmpi slt, %245, %293 : vector<20x20xi32>
    %295 = arith.andi %292, %294 : vector<20x20xi1>
    %cst_124 = arith.constant 1.000000e+00 : f32
    %296 = vector.broadcast %cst_124 : f32 to vector<20x20xf32>
    %297 = arith.select %295, %296, %273 : vector<20x20xi1>, vector<20x20xf32>
    %c10_i32_125 = arith.constant 10 : i32
    %298 = vector.broadcast %c10_i32_125 : i32 to vector<5x20xi32>
    %299 = arith.cmpi sge, %243, %298 : vector<5x20xi32>
    %c15_i32 = arith.constant 15 : i32
    %300 = vector.broadcast %c15_i32 : i32 to vector<5x20xi32>
    %301 = arith.cmpi slt, %243, %300 : vector<5x20xi32>
    %302 = arith.andi %299, %301 : vector<5x20xi1>
    %c10_i32_126 = arith.constant 10 : i32
    %303 = vector.broadcast %c10_i32_126 : i32 to vector<5x20xi32>
    %304 = arith.subi %243, %303 : vector<5x20xi32>
    %305 = arith.cmpi eq, %304, %242 : vector<5x20xi32>
    %306 = arith.andi %302, %305 : vector<5x20xi1>
    %cst_127 = arith.constant 1.000000e+00 : f32
    %307 = vector.broadcast %cst_127 : f32 to vector<5x20xf32>
    %308 = arith.select %306, %307, %284 : vector<5x20xi1>, vector<5x20xf32>
    %c10_i32_128 = arith.constant 10 : i32
    %309 = vector.broadcast %c10_i32_128 : i32 to vector<20x20xi32>
    %310 = arith.cmpi sge, %244, %309 : vector<20x20xi32>
    %c15_i32_129 = arith.constant 15 : i32
    %311 = vector.broadcast %c15_i32_129 : i32 to vector<20x20xi32>
    %312 = arith.cmpi slt, %244, %311 : vector<20x20xi32>
    %313 = arith.andi %310, %312 : vector<20x20xi1>
    %c10_i32_130 = arith.constant 10 : i32
    %314 = vector.broadcast %c10_i32_130 : i32 to vector<20x20xi32>
    %315 = arith.cmpi sge, %245, %314 : vector<20x20xi32>
    %316 = arith.andi %313, %315 : vector<20x20xi1>
    %c15_i32_131 = arith.constant 15 : i32
    %317 = vector.broadcast %c15_i32_131 : i32 to vector<20x20xi32>
    %318 = arith.cmpi slt, %245, %317 : vector<20x20xi32>
    %319 = arith.andi %316, %318 : vector<20x20xi1>
    %cst_132 = arith.constant 1.000000e+00 : f32
    %320 = vector.broadcast %cst_132 : f32 to vector<20x20xf32>
    %321 = arith.select %319, %320, %297 : vector<20x20xi1>, vector<20x20xf32>
    %c15_i32_133 = arith.constant 15 : i32
    %322 = vector.broadcast %c15_i32_133 : i32 to vector<5x20xi32>
    %323 = arith.cmpi sge, %243, %322 : vector<5x20xi32>
    %c20_i32 = arith.constant 20 : i32
    %324 = vector.broadcast %c20_i32 : i32 to vector<5x20xi32>
    %325 = arith.cmpi slt, %243, %324 : vector<5x20xi32>
    %326 = arith.andi %323, %325 : vector<5x20xi1>
    %c15_i32_134 = arith.constant 15 : i32
    %327 = vector.broadcast %c15_i32_134 : i32 to vector<5x20xi32>
    %328 = arith.subi %243, %327 : vector<5x20xi32>
    %329 = arith.cmpi eq, %328, %242 : vector<5x20xi32>
    %330 = arith.andi %326, %329 : vector<5x20xi1>
    %cst_135 = arith.constant 1.000000e+00 : f32
    %331 = vector.broadcast %cst_135 : f32 to vector<5x20xf32>
    %332 = arith.select %330, %331, %308 : vector<5x20xi1>, vector<5x20xf32>
    %c15_i32_136 = arith.constant 15 : i32
    %333 = vector.broadcast %c15_i32_136 : i32 to vector<20x20xi32>
    %334 = arith.cmpi sge, %244, %333 : vector<20x20xi32>
    %c20_i32_137 = arith.constant 20 : i32
    %335 = vector.broadcast %c20_i32_137 : i32 to vector<20x20xi32>
    %336 = arith.cmpi slt, %244, %335 : vector<20x20xi32>
    %337 = arith.andi %334, %336 : vector<20x20xi1>
    %c15_i32_138 = arith.constant 15 : i32
    %338 = vector.broadcast %c15_i32_138 : i32 to vector<20x20xi32>
    %339 = arith.cmpi sge, %245, %338 : vector<20x20xi32>
    %340 = arith.andi %337, %339 : vector<20x20xi1>
    %c20_i32_139 = arith.constant 20 : i32
    %341 = vector.broadcast %c20_i32_139 : i32 to vector<20x20xi32>
    %342 = arith.cmpi slt, %245, %341 : vector<20x20xi32>
    %343 = arith.andi %340, %342 : vector<20x20xi1>
    %cst_140 = arith.constant 1.000000e+00 : f32
    %344 = vector.broadcast %cst_140 : f32 to vector<20x20xf32>
    %345 = arith.select %343, %344, %321 : vector<20x20xi1>, vector<20x20xf32>
    %cst_141 = arith.constant 0.000000e+00 : f32
    %346 = vector.broadcast %cst_141 : f32 to vector<20x5xf32>
    %c0_i32_142 = arith.constant 0 : i32
    %347 = vector.broadcast %c0_i32_142 : i32 to vector<20x5xi32>
    %348 = arith.cmpi sge, %246, %347 : vector<20x5xi32>
    %c5_i32_143 = arith.constant 5 : i32
    %349 = vector.broadcast %c5_i32_143 : i32 to vector<20x5xi32>
    %350 = arith.cmpi slt, %246, %349 : vector<20x5xi32>
    %351 = arith.andi %348, %350 : vector<20x5xi1>
    %c0_i32_144 = arith.constant 0 : i32
    %352 = vector.broadcast %c0_i32_144 : i32 to vector<20x5xi32>
    %353 = arith.subi %246, %352 : vector<20x5xi32>
    %354 = arith.cmpi eq, %353, %247 : vector<20x5xi32>
    %355 = arith.andi %351, %354 : vector<20x5xi1>
    %cst_145 = arith.constant 1.000000e+00 : f32
    %356 = vector.broadcast %cst_145 : f32 to vector<20x5xf32>
    %357 = arith.select %355, %356, %346 : vector<20x5xi1>, vector<20x5xf32>
    %c10_i32_146 = arith.constant 10 : i32
    %358 = vector.broadcast %c10_i32_146 : i32 to vector<20x5xi32>
    %359 = arith.cmpi sge, %246, %358 : vector<20x5xi32>
    %c15_i32_147 = arith.constant 15 : i32
    %360 = vector.broadcast %c15_i32_147 : i32 to vector<20x5xi32>
    %361 = arith.cmpi slt, %246, %360 : vector<20x5xi32>
    %362 = arith.andi %359, %361 : vector<20x5xi1>
    %c10_i32_148 = arith.constant 10 : i32
    %363 = vector.broadcast %c10_i32_148 : i32 to vector<20x5xi32>
    %364 = arith.subi %246, %363 : vector<20x5xi32>
    %365 = arith.cmpi eq, %364, %247 : vector<20x5xi32>
    %366 = arith.andi %362, %365 : vector<20x5xi1>
    %cst_149 = arith.constant 1.000000e+00 : f32
    %367 = vector.broadcast %cst_149 : f32 to vector<20x5xf32>
    %368 = arith.select %366, %367, %357 : vector<20x5xi1>, vector<20x5xf32>
    %cst_150 = arith.constant 0.000000e+00 : f32
    %369 = vector.broadcast %cst_150 : f32 to vector<20x5xf32>
    %c5_i32_151 = arith.constant 5 : i32
    %370 = vector.broadcast %c5_i32_151 : i32 to vector<20x5xi32>
    %371 = arith.cmpi sge, %246, %370 : vector<20x5xi32>
    %c10_i32_152 = arith.constant 10 : i32
    %372 = vector.broadcast %c10_i32_152 : i32 to vector<20x5xi32>
    %373 = arith.cmpi slt, %246, %372 : vector<20x5xi32>
    %374 = arith.andi %371, %373 : vector<20x5xi1>
    %c5_i32_153 = arith.constant 5 : i32
    %375 = vector.broadcast %c5_i32_153 : i32 to vector<20x5xi32>
    %376 = arith.subi %246, %375 : vector<20x5xi32>
    %377 = arith.cmpi eq, %376, %247 : vector<20x5xi32>
    %378 = arith.andi %374, %377 : vector<20x5xi1>
    %cst_154 = arith.constant 1.000000e+00 : f32
    %379 = vector.broadcast %cst_154 : f32 to vector<20x5xf32>
    %380 = arith.select %378, %379, %369 : vector<20x5xi1>, vector<20x5xf32>
    %c15_i32_155 = arith.constant 15 : i32
    %381 = vector.broadcast %c15_i32_155 : i32 to vector<20x5xi32>
    %382 = arith.cmpi sge, %246, %381 : vector<20x5xi32>
    %c20_i32_156 = arith.constant 20 : i32
    %383 = vector.broadcast %c20_i32_156 : i32 to vector<20x5xi32>
    %384 = arith.cmpi slt, %246, %383 : vector<20x5xi32>
    %385 = arith.andi %382, %384 : vector<20x5xi1>
    %c15_i32_157 = arith.constant 15 : i32
    %386 = vector.broadcast %c15_i32_157 : i32 to vector<20x5xi32>
    %387 = arith.subi %246, %386 : vector<20x5xi32>
    %388 = arith.cmpi eq, %387, %247 : vector<20x5xi32>
    %389 = arith.andi %385, %388 : vector<20x5xi1>
    %cst_158 = arith.constant 1.000000e+00 : f32
    %390 = vector.broadcast %cst_158 : f32 to vector<20x5xf32>
    %391 = arith.select %389, %390, %380 : vector<20x5xi1>, vector<20x5xf32>
    %cst_159 = arith.constant 0.000000e+00 : f32
    %392 = vector.broadcast %cst_159 : f32 to vector<20x32xf32>
    %cst_160 = arith.constant dense<0.000000e+00> : vector<20x32xf32>
    %393 = tpu.matmul %368, %20, %cst_160 {dimension_numbers = #tpu.dot_dimension_numbers<[1], [0], [0], [1], [0, 0, 1, 1], [], []>} : vector<20x5xf32>, vector<5x32xf32>, vector<20x32xf32> -> vector<20x32xf32>
    %394 = arith.addf %392, %393 : vector<20x32xf32>
    %cst_161 = arith.constant dense<0.000000e+00> : vector<20x32xf32>
    %395 = tpu.matmul %391, %21, %cst_161 {dimension_numbers = #tpu.dot_dimension_numbers<[1], [0], [0], [1], [0, 0, 1, 1], [], []>} : vector<20x5xf32>, vector<5x32xf32>, vector<20x32xf32> -> vector<20x32xf32>
    %396 = arith.addf %394, %395 : vector<20x32xf32>
    %cst_162 = arith.constant dense<0.000000e+00> : vector<5x5xf32>
    %397 = tpu.matmul %20, %20, %cst_162 {dimension_numbers = #tpu.dot_dimension_numbers<[1], [1], [0], [0], [0, 0, 1, 0], [], []>} : vector<5x32xf32>, vector<5x32xf32>, vector<5x5xf32> -> vector<5x5xf32>
    %cst_163 = arith.constant dense<0.000000e+00> : vector<5x20xf32>
    %398 = tpu.matmul %397, %332, %cst_163 {dimension_numbers = #tpu.dot_dimension_numbers<[1], [0], [0], [1], [0, 0, 1, 1], [], []>} : vector<5x5xf32>, vector<5x20xf32>, vector<5x20xf32> -> vector<5x20xf32>
    %c0_164 = arith.constant 0 : index
    %c0_165 = arith.constant 0 : index
    %c0_166 = arith.constant 0 : index
    %399 = vector.load %arg4[%c0_164, %c0_165, %c0_166] : memref<4x5x20xf32, #tpu.memory_space<vmem>>, vector<1x5x20xf32>
    %400 = vector.shape_cast %399 : vector<1x5x20xf32> to vector<5x20xf32>
    %401 = arith.mulf %398, %400 : vector<5x20xf32>
    %cst_167 = arith.constant dense<0xFF800000> : vector<5xf32>
    %402 = vector.multi_reduction <maximumf>, %401, %cst_167 [1] : vector<5x20xf32> to vector<5xf32>
    %403 = vector.shape_cast %402 : vector<5xf32> to vector<5x1xf32>
    %404 = vector.broadcast %403 : vector<5x1xf32> to vector<5x20xf32>
    %405 = arith.subf %401, %404 : vector<5x20xf32>
    %406 = math.exp %405 : vector<5x20xf32>
    %cst_168 = arith.constant dense<0.000000e+00> : vector<5x20xf32>
    %407 = tpu.matmul %406, %345, %cst_168 {dimension_numbers = #tpu.dot_dimension_numbers<[1], [0], [0], [1], [0, 0, 1, 1], [], []>} : vector<5x20xf32>, vector<20x20xf32>, vector<5x20xf32> -> vector<5x20xf32>
    %408 = arith.divf %406, %407 : vector<5x20xf32>
    %cst_169 = arith.constant dense<0.000000e+00> : vector<5x32xf32>
    %409 = tpu.matmul %408, %396, %cst_169 {dimension_numbers = #tpu.dot_dimension_numbers<[1], [0], [0], [1], [0, 0, 1, 1], [], []>} : vector<5x20xf32>, vector<20x32xf32>, vector<5x32xf32> -> vector<5x32xf32>
    %cst_170 = arith.constant 2.500000e-01 : f32
    %410 = vector.broadcast %cst_170 : f32 to vector<5x32xf32>
    %411 = arith.mulf %409, %410 : vector<5x32xf32>
    %cst_171 = arith.constant dense<0.000000e+00> : vector<5x5xf32>
    %412 = tpu.matmul %21, %21, %cst_171 {dimension_numbers = #tpu.dot_dimension_numbers<[1], [1], [0], [0], [0, 0, 1, 0], [], []>} : vector<5x32xf32>, vector<5x32xf32>, vector<5x5xf32> -> vector<5x5xf32>
    %cst_172 = arith.constant dense<0.000000e+00> : vector<5x20xf32>
    %413 = tpu.matmul %412, %332, %cst_172 {dimension_numbers = #tpu.dot_dimension_numbers<[1], [0], [0], [1], [0, 0, 1, 1], [], []>} : vector<5x5xf32>, vector<5x20xf32>, vector<5x20xf32> -> vector<5x20xf32>
    %c1_173 = arith.constant 1 : index
    %c0_174 = arith.constant 0 : index
    %c0_175 = arith.constant 0 : index
    %414 = vector.load %arg4[%c1_173, %c0_174, %c0_175] : memref<4x5x20xf32, #tpu.memory_space<vmem>>, vector<1x5x20xf32>
    %415 = vector.shape_cast %414 : vector<1x5x20xf32> to vector<5x20xf32>
    %416 = arith.mulf %413, %415 : vector<5x20xf32>
    %cst_176 = arith.constant dense<0xFF800000> : vector<5xf32>
    %417 = vector.multi_reduction <maximumf>, %416, %cst_176 [1] : vector<5x20xf32> to vector<5xf32>
    %418 = vector.shape_cast %417 : vector<5xf32> to vector<5x1xf32>
    %419 = vector.broadcast %418 : vector<5x1xf32> to vector<5x20xf32>
    %420 = arith.subf %416, %419 : vector<5x20xf32>
    %421 = math.exp %420 : vector<5x20xf32>
    %cst_177 = arith.constant dense<0.000000e+00> : vector<5x20xf32>
    %422 = tpu.matmul %421, %345, %cst_177 {dimension_numbers = #tpu.dot_dimension_numbers<[1], [0], [0], [1], [0, 0, 1, 1], [], []>} : vector<5x20xf32>, vector<20x20xf32>, vector<5x20xf32> -> vector<5x20xf32>
    %423 = arith.divf %421, %422 : vector<5x20xf32>
    %cst_178 = arith.constant dense<0.000000e+00> : vector<5x32xf32>
    %424 = tpu.matmul %423, %396, %cst_178 {dimension_numbers = #tpu.dot_dimension_numbers<[1], [0], [0], [1], [0, 0, 1, 1], [], []>} : vector<5x20xf32>, vector<20x32xf32>, vector<5x32xf32> -> vector<5x32xf32>
    %cst_179 = arith.constant 2.500000e-01 : f32
    %425 = vector.broadcast %cst_179 : f32 to vector<5x32xf32>
    %426 = arith.mulf %424, %425 : vector<5x32xf32>
    %cst_180 = arith.constant 0.000000e+00 : f32
    %427 = vector.broadcast %cst_180 : f32 to vector<20x32xf32>
    %cst_181 = arith.constant dense<0.000000e+00> : vector<20x32xf32>
    %428 = tpu.matmul %368, %411, %cst_181 {dimension_numbers = #tpu.dot_dimension_numbers<[1], [0], [0], [1], [0, 0, 1, 1], [], []>} : vector<20x5xf32>, vector<5x32xf32>, vector<20x32xf32> -> vector<20x32xf32>
    %429 = arith.addf %427, %428 : vector<20x32xf32>
    %cst_182 = arith.constant dense<0.000000e+00> : vector<20x32xf32>
    %430 = tpu.matmul %391, %426, %cst_182 {dimension_numbers = #tpu.dot_dimension_numbers<[1], [0], [0], [1], [0, 0, 1, 1], [], []>} : vector<20x5xf32>, vector<5x32xf32>, vector<20x32xf32> -> vector<20x32xf32>
    %431 = arith.addf %429, %430 : vector<20x32xf32>
    %cst_183 = arith.constant dense<0.000000e+00> : vector<5x5xf32>
    %432 = tpu.matmul %411, %411, %cst_183 {dimension_numbers = #tpu.dot_dimension_numbers<[1], [1], [0], [0], [0, 0, 1, 0], [], []>} : vector<5x32xf32>, vector<5x32xf32>, vector<5x5xf32> -> vector<5x5xf32>
    %cst_184 = arith.constant dense<0.000000e+00> : vector<5x20xf32>
    %433 = tpu.matmul %432, %332, %cst_184 {dimension_numbers = #tpu.dot_dimension_numbers<[1], [0], [0], [1], [0, 0, 1, 1], [], []>} : vector<5x5xf32>, vector<5x20xf32>, vector<5x20xf32> -> vector<5x20xf32>
    %c2_185 = arith.constant 2 : index
    %c0_186 = arith.constant 0 : index
    %c0_187 = arith.constant 0 : index
    %434 = vector.load %arg4[%c2_185, %c0_186, %c0_187] : memref<4x5x20xf32, #tpu.memory_space<vmem>>, vector<1x5x20xf32>
    %435 = vector.shape_cast %434 : vector<1x5x20xf32> to vector<5x20xf32>
    %436 = arith.mulf %433, %435 : vector<5x20xf32>
    %cst_188 = arith.constant dense<0xFF800000> : vector<5xf32>
    %437 = vector.multi_reduction <maximumf>, %436, %cst_188 [1] : vector<5x20xf32> to vector<5xf32>
    %438 = vector.shape_cast %437 : vector<5xf32> to vector<5x1xf32>
    %439 = vector.broadcast %438 : vector<5x1xf32> to vector<5x20xf32>
    %440 = arith.subf %436, %439 : vector<5x20xf32>
    %441 = math.exp %440 : vector<5x20xf32>
    %cst_189 = arith.constant dense<0.000000e+00> : vector<5x20xf32>
    %442 = tpu.matmul %441, %345, %cst_189 {dimension_numbers = #tpu.dot_dimension_numbers<[1], [0], [0], [1], [0, 0, 1, 1], [], []>} : vector<5x20xf32>, vector<20x20xf32>, vector<5x20xf32> -> vector<5x20xf32>
    %443 = arith.divf %441, %442 : vector<5x20xf32>
    %cst_190 = arith.constant dense<0.000000e+00> : vector<5x32xf32>
    %444 = tpu.matmul %443, %431, %cst_190 {dimension_numbers = #tpu.dot_dimension_numbers<[1], [0], [0], [1], [0, 0, 1, 1], [], []>} : vector<5x20xf32>, vector<20x32xf32>, vector<5x32xf32> -> vector<5x32xf32>
    %cst_191 = arith.constant 2.500000e-01 : f32
    %445 = vector.broadcast %cst_191 : f32 to vector<5x32xf32>
    %446 = arith.mulf %444, %445 : vector<5x32xf32>
    %cst_192 = arith.constant dense<0.000000e+00> : vector<5x5xf32>
    %447 = tpu.matmul %426, %426, %cst_192 {dimension_numbers = #tpu.dot_dimension_numbers<[1], [1], [0], [0], [0, 0, 1, 0], [], []>} : vector<5x32xf32>, vector<5x32xf32>, vector<5x5xf32> -> vector<5x5xf32>
    %cst_193 = arith.constant dense<0.000000e+00> : vector<5x20xf32>
    %448 = tpu.matmul %447, %332, %cst_193 {dimension_numbers = #tpu.dot_dimension_numbers<[1], [0], [0], [1], [0, 0, 1, 1], [], []>} : vector<5x5xf32>, vector<5x20xf32>, vector<5x20xf32> -> vector<5x20xf32>
    %c3_194 = arith.constant 3 : index
    %c0_195 = arith.constant 0 : index
    %c0_196 = arith.constant 0 : index
    %449 = vector.load %arg4[%c3_194, %c0_195, %c0_196] : memref<4x5x20xf32, #tpu.memory_space<vmem>>, vector<1x5x20xf32>
    %450 = vector.shape_cast %449 : vector<1x5x20xf32> to vector<5x20xf32>
    %451 = arith.mulf %448, %450 : vector<5x20xf32>
    %cst_197 = arith.constant dense<0xFF800000> : vector<5xf32>
    %452 = vector.multi_reduction <maximumf>, %451, %cst_197 [1] : vector<5x20xf32> to vector<5xf32>
    %453 = vector.shape_cast %452 : vector<5xf32> to vector<5x1xf32>
    %454 = vector.broadcast %453 : vector<5x1xf32> to vector<5x20xf32>
    %455 = arith.subf %451, %454 : vector<5x20xf32>
    %456 = math.exp %455 : vector<5x20xf32>
    %cst_198 = arith.constant dense<0.000000e+00> : vector<5x20xf32>
    %457 = tpu.matmul %456, %345, %cst_198 {dimension_numbers = #tpu.dot_dimension_numbers<[1], [0], [0], [1], [0, 0, 1, 1], [], []>} : vector<5x20xf32>, vector<20x20xf32>, vector<5x20xf32> -> vector<5x20xf32>
    %458 = arith.divf %456, %457 : vector<5x20xf32>
    %cst_199 = arith.constant dense<0.000000e+00> : vector<5x32xf32>
    %459 = tpu.matmul %458, %431, %cst_199 {dimension_numbers = #tpu.dot_dimension_numbers<[1], [0], [0], [1], [0, 0, 1, 1], [], []>} : vector<5x20xf32>, vector<20x32xf32>, vector<5x32xf32> -> vector<5x32xf32>
    %cst_200 = arith.constant 2.500000e-01 : f32
    %460 = vector.broadcast %cst_200 : f32 to vector<5x32xf32>
    %461 = arith.mulf %459, %460 : vector<5x32xf32>
    %462 = tpu.iota {dimensions = array<i32: 0>} : vector<2x32xi32>
    %cst_201 = arith.constant 0.000000e+00 : f32
    %463 = vector.broadcast %cst_201 : f32 to vector<2x32xf32>
    %cst_202 = arith.constant 0.000000e+00 : f32
    %464 = vector.broadcast %cst_202 : f32 to vector<2x32xf32>
    %cst_203 = arith.constant 0.000000e+00 : f32
    %465 = vector.broadcast %cst_203 : f32 to vector<2x32xf32>
    %c0_i32_204 = arith.constant 0 : i32
    %466 = vector.broadcast %c0_i32_204 : i32 to vector<2x32xi32>
    %467 = arith.cmpi eq, %462, %466 : vector<2x32xi32>
    %cst_205 = arith.constant dense<0.000000e+00> : vector<32xf32>
    %468 = vector.multi_reduction <add>, %226, %cst_205 [0] : vector<9x32xf32> to vector<32xf32>
    %469 = vector.shape_cast %468 : vector<32xf32> to vector<1x32xf32>
    %cst_206 = arith.constant 9.000000e+00 : f32
    %470 = vector.broadcast %cst_206 : f32 to vector<1x32xf32>
    %471 = arith.divf %469, %470 : vector<1x32xf32>
    %472 = vector.shape_cast %471 : vector<1x32xf32> to vector<1x32xf32>
    %473 = vector.broadcast %472 : vector<1x32xf32> to vector<2x32xf32>
    %474 = arith.select %467, %473, %463 : vector<2x32xi1>, vector<2x32xf32>
    %c0_i32_207 = arith.constant 0 : i32
    %475 = vector.broadcast %c0_i32_207 : i32 to vector<2x32xi32>
    %476 = arith.cmpi eq, %462, %475 : vector<2x32xi32>
    %cst_208 = arith.constant dense<0.000000e+00> : vector<32xf32>
    %477 = vector.multi_reduction <add>, %446, %cst_208 [0] : vector<5x32xf32> to vector<32xf32>
    %478 = vector.shape_cast %477 : vector<32xf32> to vector<1x32xf32>
    %cst_209 = arith.constant 5.000000e+00 : f32
    %479 = vector.broadcast %cst_209 : f32 to vector<1x32xf32>
    %480 = arith.divf %478, %479 : vector<1x32xf32>
    %481 = vector.shape_cast %480 : vector<1x32xf32> to vector<1x32xf32>
    %482 = vector.broadcast %481 : vector<1x32xf32> to vector<2x32xf32>
    %483 = arith.select %476, %482, %464 : vector<2x32xi1>, vector<2x32xf32>
    %c0_i32_210 = arith.constant 0 : i32
    %484 = vector.broadcast %c0_i32_210 : i32 to vector<2x32xi32>
    %485 = arith.cmpi eq, %462, %484 : vector<2x32xi32>
    %486 = vector.extract_strided_slice %14 {offsets = [0, 0], sizes = [1, 32], strides = [1, 1]} : vector<18x32xf32> to vector<1x32xf32>
    %487 = vector.shape_cast %486 : vector<1x32xf32> to vector<1x32xf32>
    %488 = vector.broadcast %487 : vector<1x32xf32> to vector<2x32xf32>
    %489 = arith.select %485, %488, %465 : vector<2x32xi1>, vector<2x32xf32>
    %c1_i32 = arith.constant 1 : i32
    %490 = vector.broadcast %c1_i32 : i32 to vector<2x32xi32>
    %491 = arith.cmpi eq, %462, %490 : vector<2x32xi32>
    %cst_211 = arith.constant dense<0.000000e+00> : vector<32xf32>
    %492 = vector.multi_reduction <add>, %241, %cst_211 [0] : vector<9x32xf32> to vector<32xf32>
    %493 = vector.shape_cast %492 : vector<32xf32> to vector<1x32xf32>
    %cst_212 = arith.constant 9.000000e+00 : f32
    %494 = vector.broadcast %cst_212 : f32 to vector<1x32xf32>
    %495 = arith.divf %493, %494 : vector<1x32xf32>
    %496 = vector.shape_cast %495 : vector<1x32xf32> to vector<1x32xf32>
    %497 = vector.broadcast %496 : vector<1x32xf32> to vector<2x32xf32>
    %498 = arith.select %491, %497, %474 : vector<2x32xi1>, vector<2x32xf32>
    %c1_i32_213 = arith.constant 1 : i32
    %499 = vector.broadcast %c1_i32_213 : i32 to vector<2x32xi32>
    %500 = arith.cmpi eq, %462, %499 : vector<2x32xi32>
    %cst_214 = arith.constant dense<0.000000e+00> : vector<32xf32>
    %501 = vector.multi_reduction <add>, %461, %cst_214 [0] : vector<5x32xf32> to vector<32xf32>
    %502 = vector.shape_cast %501 : vector<32xf32> to vector<1x32xf32>
    %cst_215 = arith.constant 5.000000e+00 : f32
    %503 = vector.broadcast %cst_215 : f32 to vector<1x32xf32>
    %504 = arith.divf %502, %503 : vector<1x32xf32>
    %505 = vector.shape_cast %504 : vector<1x32xf32> to vector<1x32xf32>
    %506 = vector.broadcast %505 : vector<1x32xf32> to vector<2x32xf32>
    %507 = arith.select %500, %506, %483 : vector<2x32xi1>, vector<2x32xf32>
    %c1_i32_216 = arith.constant 1 : i32
    %508 = vector.broadcast %c1_i32_216 : i32 to vector<2x32xi32>
    %509 = arith.cmpi eq, %462, %508 : vector<2x32xi32>
    %510 = vector.extract_strided_slice %14 {offsets = [9, 0], sizes = [1, 32], strides = [1, 1]} : vector<18x32xf32> to vector<1x32xf32>
    %511 = vector.shape_cast %510 : vector<1x32xf32> to vector<1x32xf32>
    %512 = vector.broadcast %511 : vector<1x32xf32> to vector<2x32xf32>
    %513 = arith.select %509, %512, %489 : vector<2x32xi1>, vector<2x32xf32>
    %514 = vector.broadcast %5 : vector<1x32xf32> to vector<2x32xf32>
    %515 = arith.mulf %513, %514 : vector<2x32xf32>
    %cst_217 = arith.constant dense<0.000000e+00> : vector<2xf32>
    %516 = vector.multi_reduction <add>, %515, %cst_217 [1] : vector<2x32xf32> to vector<2xf32>
    %517 = vector.shape_cast %516 : vector<2xf32> to vector<2x1xf32>
    %518 = vector.broadcast %10 : vector<1x1xf32> to vector<2x1xf32>
    %519 = arith.addf %517, %518 : vector<2x1xf32>
    %520 = vector.broadcast %4 : vector<1x32xf32> to vector<2x32xf32>
    %521 = arith.mulf %498, %520 : vector<2x32xf32>
    %cst_218 = arith.constant dense<0.000000e+00> : vector<2xf32>
    %522 = vector.multi_reduction <add>, %521, %cst_218 [1] : vector<2x32xf32> to vector<2xf32>
    %523 = vector.shape_cast %522 : vector<2xf32> to vector<2x1xf32>
    %524 = arith.addf %523, %519 : vector<2x1xf32>
    %525 = vector.broadcast %4 : vector<1x32xf32> to vector<2x32xf32>
    %526 = arith.mulf %507, %525 : vector<2x32xf32>
    %cst_219 = arith.constant dense<0.000000e+00> : vector<2xf32>
    %527 = vector.multi_reduction <add>, %526, %cst_219 [1] : vector<2x32xf32> to vector<2xf32>
    %528 = vector.shape_cast %527 : vector<2xf32> to vector<2x1xf32>
    %529 = arith.addf %528, %519 : vector<2x1xf32>
    %530 = vector.broadcast %4 : vector<1x32xf32> to vector<2x32xf32>
    %531 = arith.mulf %513, %530 : vector<2x32xf32>
    %cst_220 = arith.constant dense<0.000000e+00> : vector<2xf32>
    %532 = vector.multi_reduction <add>, %531, %cst_220 [1] : vector<2x32xf32> to vector<2xf32>
    %533 = vector.shape_cast %532 : vector<2xf32> to vector<2x1xf32>
    %534 = arith.addf %533, %519 : vector<2x1xf32>
    %cst_221 = arith.constant 0.000000e+00 : f32
    %535 = vector.broadcast %cst_221 : f32 to vector<2x1xf32>
    %536 = arith.cmpf ogt, %524, %535 : vector<2x1xf32>
    %cst_222 = arith.constant 0.00999999977 : f32
    %537 = vector.broadcast %cst_222 : f32 to vector<2x1xf32>
    %538 = arith.mulf %537, %524 : vector<2x1xf32>
    %539 = arith.select %536, %524, %538 : vector<2x1xi1>, vector<2x1xf32>
    %cst_223 = arith.constant 0.000000e+00 : f32
    %540 = vector.broadcast %cst_223 : f32 to vector<2x1xf32>
    %541 = arith.cmpf ogt, %529, %540 : vector<2x1xf32>
    %cst_224 = arith.constant 0.00999999977 : f32
    %542 = vector.broadcast %cst_224 : f32 to vector<2x1xf32>
    %543 = arith.mulf %542, %529 : vector<2x1xf32>
    %544 = arith.select %541, %529, %543 : vector<2x1xi1>, vector<2x1xf32>
    %cst_225 = arith.constant 0.000000e+00 : f32
    %545 = vector.broadcast %cst_225 : f32 to vector<2x1xf32>
    %546 = arith.cmpf ogt, %534, %545 : vector<2x1xf32>
    %cst_226 = arith.constant 0.00999999977 : f32
    %547 = vector.broadcast %cst_226 : f32 to vector<2x1xf32>
    %548 = arith.mulf %547, %534 : vector<2x1xf32>
    %549 = arith.select %546, %534, %548 : vector<2x1xi1>, vector<2x1xf32>
    %550 = arith.maximumf %539, %544 : vector<2x1xf32>
    %551 = arith.maximumf %550, %549 : vector<2x1xf32>
    %552 = arith.subf %539, %551 : vector<2x1xf32>
    %553 = math.exp %552 : vector<2x1xf32>
    %554 = arith.subf %544, %551 : vector<2x1xf32>
    %555 = math.exp %554 : vector<2x1xf32>
    %556 = arith.subf %549, %551 : vector<2x1xf32>
    %557 = math.exp %556 : vector<2x1xf32>
    %558 = arith.addf %553, %555 : vector<2x1xf32>
    %559 = arith.addf %558, %557 : vector<2x1xf32>
    %560 = arith.divf %553, %559 : vector<2x1xf32>
    %561 = arith.divf %555, %559 : vector<2x1xf32>
    %562 = arith.divf %557, %559 : vector<2x1xf32>
    %563 = vector.broadcast %560 : vector<2x1xf32> to vector<2x32xf32>
    %564 = arith.mulf %563, %498 : vector<2x32xf32>
    %565 = vector.broadcast %561 : vector<2x1xf32> to vector<2x32xf32>
    %566 = arith.mulf %565, %507 : vector<2x32xf32>
    %567 = arith.addf %564, %566 : vector<2x32xf32>
    %568 = vector.broadcast %562 : vector<2x1xf32> to vector<2x32xf32>
    %569 = arith.mulf %568, %513 : vector<2x32xf32>
    %570 = arith.addf %567, %569 : vector<2x32xf32>
    %cst_227 = arith.constant 0.333333343 : f32
    %571 = vector.broadcast %cst_227 : f32 to vector<2x32xf32>
    %572 = arith.mulf %570, %571 : vector<2x32xf32>
    %573 = arith.addf %560, %561 : vector<2x1xf32>
    %574 = arith.addf %573, %562 : vector<2x1xf32>
    %575 = vector.broadcast %574 : vector<2x1xf32> to vector<2x32xf32>
    %576 = arith.mulf %575, %513 : vector<2x32xf32>
    %cst_228 = arith.constant 0.333333343 : f32
    %577 = vector.broadcast %cst_228 : f32 to vector<2x32xf32>
    %578 = arith.mulf %576, %577 : vector<2x32xf32>
    %c0_229 = arith.constant 0 : index
    %c0_230 = arith.constant 0 : index
    %579 = vector.load %arg7[%c0_229, %c0_230] : memref<2x32xf32, #tpu.memory_space<vmem>>, vector<2x32xf32>
    tpu.vector_store %arg7[%c0_229, %c0_230], %572 {strides = array<i32>} : memref<2x32xf32, #tpu.memory_space<vmem>>, vector<2x32xf32>,
    %c0_231 = arith.constant 0 : index
    %c0_232 = arith.constant 0 : index
    %580 = vector.load %arg8[%c0_231, %c0_232] : memref<2x32xf32, #tpu.memory_space<vmem>>, vector<2x32xf32>
    tpu.vector_store %arg8[%c0_231, %c0_232], %578 {strides = array<i32>} : memref<2x32xf32, #tpu.memory_space<vmem>>, vector<2x32xf32>,
    %cst_233 = arith.constant dense<0.000000e+00> : vector<2x5xf32>
    %581 = tpu.matmul %572, %6, %cst_233 {dimension_numbers = #tpu.dot_dimension_numbers<[1], [0], [0], [1], [0, 0, 1, 1], [], []>} : vector<2x32xf32>, vector<32x5xf32>, vector<2x5xf32> -> vector<2x5xf32>
    %cst_234 = arith.constant dense<0.000000e+00> : vector<2x5xf32>
    %582 = tpu.matmul %578, %7, %cst_234 {dimension_numbers = #tpu.dot_dimension_numbers<[1], [0], [0], [1], [0, 0, 1, 1], [], []>} : vector<2x32xf32>, vector<32x5xf32>, vector<2x5xf32> -> vector<2x5xf32>
    %583 = arith.addf %581, %582 : vector<2x5xf32>
    %584 = vector.broadcast %8 : vector<1x5xf32> to vector<2x5xf32>
    %585 = arith.addf %583, %584 : vector<2x5xf32>
    %c0_235 = arith.constant 0 : index
    %c0_236 = arith.constant 0 : index
    %586 = vector.load %arg9[%c0_235, %c0_236] : memref<2x5xf32, #tpu.memory_space<vmem>>, vector<2x5xf32>
    tpu.vector_store %arg9[%c0_235, %c0_236], %585 {strides = array<i32>} : memref<2x5xf32, #tpu.memory_space<vmem>>, vector<2x5xf32>,
    return
  }
  func.func @transform_0(%arg0: i32) -> (i32, i32) {
    %c0_i32 = arith.constant 0 : i32
    %c0_i32_0 = arith.constant 0 : i32
    %c0_i32_1 = arith.constant 0 : i32
    return %c0_i32, %c0_i32_0 : i32, i32
  }
  func.func @transform_1(%arg0: i32) -> (i32, i32) {
    %c0_i32 = arith.constant 0 : i32
    %c0_i32_0 = arith.constant 0 : i32
    %c0_i32_1 = arith.constant 0 : i32
    return %c0_i32, %c0_i32_0 : i32, i32
  }
  func.func @transform_2(%arg0: i32) -> (i32, i32, i32) {
    %c0_i32 = arith.constant 0 : i32
    %c0_i32_0 = arith.constant 0 : i32
    %c0_i32_1 = arith.constant 0 : i32
    %c0_i32_2 = arith.constant 0 : i32
    return %c0_i32, %c0_i32_0, %c0_i32_1 : i32, i32, i32
  }
  func.func @transform_3(%arg0: i32) -> (i32, i32, i32) {
    %c0_i32 = arith.constant 0 : i32
    %c0_i32_0 = arith.constant 0 : i32
    %c0_i32_1 = arith.constant 0 : i32
    %c0_i32_2 = arith.constant 0 : i32
    return %c0_i32, %c0_i32_0, %c0_i32_1 : i32, i32, i32
  }
  func.func @transform_4(%arg0: i32) -> (i32, i32) {
    %c0_i32 = arith.constant 0 : i32
    %c0_i32_0 = arith.constant 0 : i32
    %c0_i32_1 = arith.constant 0 : i32
    return %c0_i32, %c0_i32_0 : i32, i32
  }
  func.func @transform_5(%arg0: i32) -> (i32, i32) {
    %c0_i32 = arith.constant 0 : i32
    %c0_i32_0 = arith.constant 0 : i32
    %c0_i32_1 = arith.constant 0 : i32
    return %c0_i32, %c0_i32_0 : i32, i32
  }
  func.func @transform_6(%arg0: i32) -> (i32, i32) {
    %c0_i32 = arith.constant 0 : i32
    %c0_i32_0 = arith.constant 0 : i32
    %c0_i32_1 = arith.constant 0 : i32
    return %c0_i32, %c0_i32_0 : i32, i32
  }
  func.func @transform_7(%arg0: i32) -> (i32, i32) {
    %c0_i32 = arith.constant 0 : i32
    %c0_i32_0 = arith.constant 0 : i32
    %c0_i32_1 = arith.constant 0 : i32
    return %c0_i32, %c0_i32_0 : i32, i32
  }
  func.func @transform_8(%arg0: i32) -> (i32, i32) {
    %c0_i32 = arith.constant 0 : i32
    %c0_i32_0 = arith.constant 0 : i32
    %c0_i32_1 = arith.constant 0 : i32
    return %c0_i32, %c0_i32_0 : i32, i32
  }
}

</mosaic_0001>

<llo_original>
// kernel: tile.9
$region0: #{tile.9}
  %s0 = inlined_call_operand.vmem [shape: f32[2,5,32], index: 0, kind: input, shape index: {}]
  %s1 = inlined_call_operand.vmem [shape: f32[10,32], index: 1, kind: output, shape index: {}]
  %v2 = vld [vmem:[%s0] sm:$0x1f]
  %vm3 = vcmask 261120
  %4 = vst.msk [vmem:[%s1] sm:$0x1f] %vm3, %v2
  %s5 = scalar_lea.vmem %s0, 8
  %v6 = vld [vmem:[%s5] sm:$0x1f]
  %vm7 = vcmask 261120
  %s8 = scalar_lea.vmem %s1, 5
  %9 = vst.msk [vmem:[%s8] sm:$0x1f] %vm7, %v6

// kernel: hmm_forward.1
$region0: #{hmm_forward.1}
  #allocation0 [shape = 'u32[]', space=smem, size = 0x4, offset = 0x4, fixed_abs, tag = 'smem constant byte address 0x4 - core index']
  #allocation1 [shape = 'u32[144,128]{1,0:T(1,128)}', space=vmem, size = 0x12000, scoped, tag = 'internal scratch']
  %s0 = inlined_call_operand.vmem [shape: f32[18,16], index: 0, kind: input, shape index: {}]
  %s1 = inlined_call_operand.vmem [shape: f32[10,28], index: 1, kind: input, shape index: {}]
  %s2 = inlined_call_operand.vmem [shape: f32[4,9,36], index: 2, kind: input, shape index: {}]
  %s3 = inlined_call_operand.vmem [shape: f32[4,5,20], index: 3, kind: input, shape index: {}]
  %s4 = inlined_call_operand.vmem [shape: f32[88,32], index: 4, kind: input, shape index: {}]
  %s5 = inlined_call_operand.vmem [shape: f32[80,5], index: 5, kind: input, shape index: {}]
  %s6 = inlined_call_operand.vmem [shape: f32[2,32], index: 6, kind: output, shape index: {0}]
  %s7 = inlined_call_operand.vmem [shape: f32[2,32], index: 7, kind: output, shape index: {1}]
  %s8 = inlined_call_operand.hbm [shape: f32[2,5], index: 8, kind: output, shape index: {2}]
  %9 = xla_tuple %s6, %s7, %s8
  %s10 = sld [smem:[#allocation0]]
  $region50: #{hmm_forward.1} parent=0
    _
  %s12 = ssub.s32 1, %s10
  %s13 = scalar_select 0, %s12, %s10
  $region1: #{hmm_forward.1} parent=0
    #allocation2 [shape = 'u8[1024]{0}', space=vmem, size = 0x400, scoped, tag = 'output window, operand 2, single buffered']
    #allocation3 [shape = 's32[1]{0}', space=sflag, size = 0x4, scoped, tag = 'scoped memory for hmm_forward.1']
    %14 = vsyncpa [#allocation3], 0
    // Predicated region
    $region2: #{hmm_forward.1} parent=1 // pred_check
      _
    $region3: #{hmm_forward.1} parent=1 // pred_check_branch
      %16 = sbr.rel (0) target = $region5
    $region4: #{hmm_forward.1} parent=1 // pred_region
      _
    $region5: #{hmm_forward.1} parent=1 // pred_fallthru
      _
    // Predicated region
    $region6: #{hmm_forward.1} parent=1 // pred_check
      _
    $region7: #{hmm_forward.1} parent=1 // pred_check_branch
      %18 = sbr.rel (0) target = $region9
    $region8: #{hmm_forward.1} parent=1 // pred_region
      _
    $region9: #{hmm_forward.1} parent=1 // pred_fallthru
      _
    // Predicated region
    $region10: #{hmm_forward.1} parent=1 // pred_check
      _
    $region11: #{hmm_forward.1} parent=1 // pred_check_branch
      %20 = sbr.rel (0) target = $region13
    $region12: #{hmm_forward.1} parent=1 // pred_region
      _
    $region13: #{hmm_forward.1} parent=1 // pred_fallthru
      _
    // Predicated region
    $region14: #{hmm_forward.1} parent=1 // pred_check
      _
    $region15: #{hmm_forward.1} parent=1 // pred_check_branch
      %22 = sbr.rel (0) target = $region17
    $region16: #{hmm_forward.1} parent=1 // pred_region
      _
    $region17: #{hmm_forward.1} parent=1 // pred_fallthru
      _
    // Predicated region
    $region18: #{hmm_forward.1} parent=1 // pred_check
      _
    $region19: #{hmm_forward.1} parent=1 // pred_check_branch
      %24 = sbr.rel (0) target = $region21
    $region20: #{hmm_forward.1} parent=1 // pred_region
      _
    $region21: #{hmm_forward.1} parent=1 // pred_fallthru
      _
    // Predicated region
    $region22: #{hmm_forward.1} parent=1 // pred_check
      _
    $region23: #{hmm_forward.1} parent=1 // pred_check_branch
      %26 = sbr.rel (0) target = $region25
    $region24: #{hmm_forward.1} parent=1 // pred_region
      _
    $region25: #{hmm_forward.1} parent=1 // pred_fallthru
      _
    %v27 = vld [vmem:[%s4] sm:$0xff]
    %v28 = vld [vmem:[%s4 + $0x8] sm:$0xff]
    %v29 = vld [vmem:[%s4 + $0x10] sm:$0x1]
    %v30 = vld [vmem:[%s4 + $0x18] sm:$0xff]
    %v31 = vld [vmem:[%s4 + $0x20] sm:$0xff]
    %v32 = vld [vmem:[%s4 + $0x28] sm:$0xff]
    %v33 = vld [vmem:[%s4 + $0x30] sm:$0xf]
    %v34 = vld [vmem:[%s4 + $0x38] sm:$0xff]
    %v35 = vld [vmem:[%s4 + $0x40] sm:$0x3]
    %v36 = vld [vmem:[%s4 + $0x48] sm:$0x1]
    %v37 = vld [vmem:[%s4 + $0x50] sm:$0x1]
    %v38 = vld [vmem:[%s5] sm:$0xff]
    %v39 = vld [vmem:[%s5 + $0x8] sm:$0xff]
    %v40 = vld [vmem:[%s5 + $0x10] sm:$0xff]
    %v41 = vld [vmem:[%s5 + $0x18] sm:$0xff]
    %v42 = vld [vmem:[%s5 + $0x20] sm:$0xff]
    %v43 = vld [vmem:[%s5 + $0x28] sm:$0xff]
    %v44 = vld [vmem:[%s5 + $0x30] sm:$0xff]
    %v45 = vld [vmem:[%s5 + $0x38] sm:$0xff]
    %v46 = vld [vmem:[%s5 + $0x40] sm:$0x1]
    %v47 = vld [vmem:[%s5 + $0x48] sm:$0x1]
    %v48 = vld [vmem:[%s0] sm:$0xff]
    %v49 = vld [vmem:[%s0 + $0x8] sm:$0xff]
    %v50 = vld [vmem:[%s0 + $0x10] sm:$0x3]
    %v51 = vlaneseq
    %v52 = vshrl.u32 %v51, 7
    %v53 = vsub.s32 0, %v52
    %v54 = vrot.slane %v29, %v53
    %vm55 = vcmask 130048
    %v57 = vsel %vm55, %v48, 0
    %v60 = vsel %vm55, %v49, 0
    %v63 = vsel %vm55, %v50, 0
    %65 = vmatprep.subr.mxu0 0.0
    %66 = vmatpush1.msra.mxu0 %v27
    %67 = vmatprep.subr.mxu0 0.0
    %68 = vmatpush1.msra.mxu0 %v28
    %69 = vmatprep.subr.mxu0 0.0
    %70 = vmatpush1.msra.mxu0 0.0
    %71 = vmatprep.subr.mxu0 0.0
    %72 = vmatpush1.msra.mxu0 0.0
    %73 = vmatprep.subr.mxu0 0.0
    %74 = vmatpush1.msra.mxu0 0.0
    %75 = vmatprep.subr.mxu0 0.0
    %76 = vmatpush1.msra.mxu0 0.0
    %77 = vmatprep.subr.mxu0 0.0
    %78 = vmatpush1.msra.mxu0 0.0
    %79 = vmatprep.subr.mxu0 0.0
    %80 = vmatpush1.msra.mxu0 0.0
    %81 = vmatprep.subr.mxu0 0.0
    %82 = vmatpush1.msra.mxu0 0.0
    %83 = vmatprep.subr.mxu0 0.0
    %84 = vmatpush1.msra.mxu0 0.0
    %85 = vmatprep.subr.mxu0 0.0
    %86 = vmatpush1.msra.mxu0 0.0
    %87 = vmatprep.subr.mxu0 0.0
    %88 = vmatpush1.msra.mxu0 0.0
    %89 = vmatprep.subr.mxu0 0.0
    %90 = vmatpush1.msra.mxu0 0.0
    %91 = vmatprep.subr.mxu0 0.0
    %92 = vmatpush1.msra.mxu0 0.0
    %93 = vmatprep.subr.mxu0 0.0
    %94 = vmatpush1.msra.mxu0 0.0
    %95 = vmatprep.subr.mxu0 0.0
    %96 = vmatpush1.msra.mxu0 0.0
    %97 = vmatprep.subr.mxu0 0.0
    %98 = vmatpush1.msra.mxu0 0.0
    %99 = vmatprep.subr.mxu0 0.0
    %100 = vmatpush1.msra.mxu0 0.0
    %101 = vmatprep.subr.mxu0 0.0
    %102 = vmatpush1.msra.mxu0 0.0
    %103 = vmatprep.subr.mxu0 0.0
    %104 = vmatpush1.msra.mxu0 0.0
    %105 = vmatprep.subr.mxu0 0.0
    %106 = vmatpush1.msra.mxu0 0.0
    %107 = vmatprep.subr.mxu0 0.0
    %108 = vmatpush1.msra.mxu0 0.0
    %109 = vmatprep.subr.mxu0 0.0
    %110 = vmatpush1.msra.mxu0 0.0
    %111 = vmatprep.subr.mxu0 0.0
    %112 = vmatpush1.msra.mxu0 0.0
    %113 = vmatprep.subr.mxu0 0.0
    %114 = vmatpush1.msra.mxu0 0.0
    %115 = vmatprep.subr.mxu0 0.0
    %116 = vmatpush1.msra.mxu0 0.0
    %117 = vmatprep.subr.mxu0 0.0
    %118 = vmatpush1.msra.mxu0 0.0
    %119 = vmatprep.subr.mxu0 0.0
    %120 = vmatpush1.msra.mxu0 0.0
    %121 = vmatprep.subr.mxu0 0.0
    %122 = vmatpush1.msra.mxu0 0.0
    %123 = vmatprep.subr.mxu0 0.0
    %124 = vmatpush1.msra.mxu0 0.0
    %125 = vmatprep.subr.mxu0 0.0
    %126 = vmatpush1.msra.mxu0 0.0
    %127 = vmatprep.subr.mxu0 0.0
    %128 = vmatpush1.msra.mxu0 0.0
    %129 = vmatprep.mubr.f32.mxu0 0.0
    %130 = vmatmul.mubr.f32.gmra.mrb[0].mxu0 %v57
    %v131 = vpop.f32.mrb[0].mxu0
    %v132 = vadd.f32 %v54, %v131
    %v133 = vpop.f32.mrb[0].mxu0
    %134 = vmatprep.mubr.f32.mxu0 0.0
    %135 = vmatmul.mubr.f32.gmra.mrb[0].mxu0 %v60
    %v136 = vpop.f32.mrb[0].mxu0
    %v137 = vadd.f32 %v54, %v136
    %v138 = vpop.f32.mrb[0].mxu0
    %139 = vmatprep.mubr.f32.mxu0 0.0
    %140 = vmatmul.mubr.f32.gmra.mrb[0].mxu0 %v63
    %v141 = vpop.f32.mrb[0].mxu0
    %v142 = vadd.f32 %v54, %v141
    %v143 = vpop.f32.mrb[0].mxu0
    %144 = vdwg.mxu0
    %v145 = vld [vmem:[%s1] sm:$0xff]
    %v146 = vld [vmem:[%s1 + $0x8] sm:$0x3]
    %vm147 = vcmask 228352
    %v149 = vsel %vm147, %v145, 0
    %v152 = vsel %vm147, %v146, 0
    %vm154 = vcmask 1043456
    %v156 = vsel %vm154, %v33, 0
    %158 = vmatprep.subr.mxu0 0.0
    %159 = vmatpush1.msra.mxu0 %v30
    %160 = vmatprep.subr.mxu0 0.0
    %161 = vmatpush1.msra.mxu0 %v31
    %162 = vmatprep.subr.mxu0 0.0
    %163 = vmatpush1.msra.mxu0 %v32
    %164 = vmatprep.subr.mxu0 0.0
    %165 = vmatpush1.msra.mxu0 %v156
    %166 = vmatprep.subr.mxu0 0.0
    %167 = vmatpush1.msra.mxu0 0.0
    %168 = vmatprep.subr.mxu0 0.0
    %169 = vmatpush1.msra.mxu0 0.0
    %170 = vmatprep.subr.mxu0 0.0
    %171 = vmatpush1.msra.mxu0 0.0
    %172 = vmatprep.subr.mxu0 0.0
    %173 = vmatpush1.msra.mxu0 0.0
    %174 = vmatprep.subr.mxu0 0.0
    %175 = vmatpush1.msra.mxu0 0.0
    %176 = vmatprep.subr.mxu0 0.0
    %177 = vmatpush1.msra.mxu0 0.0
    %178 = vmatprep.subr.mxu0 0.0
    %179 = vmatpush1.msra.mxu0 0.0
    %180 = vmatprep.subr.mxu0 0.0
    %181 = vmatpush1.msra.mxu0 0.0
    %182 = vmatprep.subr.mxu0 0.0
    %183 = vmatpush1.msra.mxu0 0.0
    %184 = vmatprep.subr.mxu0 0.0
    %185 = vmatpush1.msra.mxu0 0.0
    %186 = vmatprep.subr.mxu0 0.0
    %187 = vmatpush1.msra.mxu0 0.0
    %188 = vmatprep.subr.mxu0 0.0
    %189 = vmatpush1.msra.mxu0 0.0
    %190 = vmatprep.subr.mxu0 0.0
    %191 = vmatpush1.msra.mxu0 0.0
    %192 = vmatprep.subr.mxu0 0.0
    %193 = vmatpush1.msra.mxu0 0.0
    %194 = vmatprep.subr.mxu0 0.0
    %195 = vmatpush1.msra.mxu0 0.0
    %196 = vmatprep.subr.mxu0 0.0
    %197 = vmatpush1.msra.mxu0 0.0
    %198 = vmatprep.subr.mxu0 0.0
    %199 = vmatpush1.msra.mxu0 0.0
    %200 = vmatprep.subr.mxu0 0.0
    %201 = vmatpush1.msra.mxu0 0.0
    %202 = vmatprep.subr.mxu0 0.0
    %203 = vmatpush1.msra.mxu0 0.0
    %204 = vmatprep.subr.mxu0 0.0
    %205 = vmatpush1.msra.mxu0 0.0
    %206 = vmatprep.subr.mxu0 0.0
    %207 = vmatpush1.msra.mxu0 0.0
    %208 = vmatprep.subr.mxu0 0.0
    %209 = vmatpush1.msra.mxu0 0.0
    %210 = vmatprep.subr.mxu0 0.0
    %211 = vmatpush1.msra.mxu0 0.0
    %212 = vmatprep.subr.mxu0 0.0
    %213 = vmatpush1.msra.mxu0 0.0
    %214 = vmatprep.subr.mxu0 0.0
    %215 = vmatpush1.msra.mxu0 0.0
    %216 = vmatprep.subr.mxu0 0.0
    %217 = vmatpush1.msra.mxu0 0.0
    %218 = vmatprep.subr.mxu0 0.0
    %219 = vmatpush1.msra.mxu0 0.0
    %220 = vmatprep.subr.mxu0 0.0
    %221 = vmatpush1.msra.mxu0 0.0
    %222 = vmatprep.mubr.f32.mxu0 0.0
    %223 = vmatmul.mubr.f32.gmra.mrb[0].mxu0 %v149
    %v224 = vpop.f32.mrb[0].mxu0
    %v225 = vadd.f32 %v34, %v224
    %v226 = vpop.f32.mrb[0].mxu0
    %227 = vmatprep.mubr.f32.mxu0 0.0
    %228 = vmatmul.mubr.f32.gmra.mrb[0].mxu0 %v152
    %v229 = vpop.f32.mrb[0].mxu0
    %v230 = vadd.f32 %v35, %v229
    %v231 = vpop.f32.mrb[0].mxu0
    %232 = vdwg.mxu0
    %v233 = vlaneseq
    %v234 = vshrl.u32 %v233, 7
    %v235 = vadd.s32 %v234, 8
    %v236 = vlaneseq
    %v237 = vand.u32 %v236, 127
    %v238 = vadd.s32 %v234, 16
    %v239 = vadd.s32 %v234, 24
    %v240 = vadd.s32 %v234, 32
    %vm241 = vcmp.ge.s32.totalorder %v237, 0
    %vm242 = vcmp.lt.s32.totalorder %v237, 9
    %vm243 = vmand %vm241, %vm242
    %vm244 = vcmp.eq.s32.totalorder %v237, %v234
    %vm245 = vcmp.eq.s32.totalorder %v237, %v235
    %vm246 = vmand %vm243, %vm244
    %vm247 = vmand %vm243, %vm245
    %v248 = vsel %vm246, 1.0, 0.0
    %v249 = vsel %vm247, 1.0, 0.0
    %vm250 = vcmp.ge.s32.totalorder %v234, 0
    %vm251 = vcmp.ge.s32.totalorder %v235, 0
    %vm252 = vcmp.ge.s32.totalorder %v238, 0
    %vm253 = vcmp.ge.s32.totalorder %v239, 0
    %vm254 = vcmp.ge.s32.totalorder %v240, 0
    %vm255 = vcmp.lt.s32.totalorder %v234, 9
    %vm256 = vcmp.lt.s32.totalorder %v235, 9
    %vm257 = vcmp.lt.s32.totalorder %v238, 9
    %vm258 = vcmp.lt.s32.totalorder %v239, 9
    %vm259 = vcmp.lt.s32.totalorder %v240, 9
    %vm260 = vmand %vm250, %vm255
    %vm261 = vmand %vm251, %vm256
    %vm262 = vmand %vm252, %vm257
    %vm263 = vmand %vm253, %vm258
    %vm264 = vmand %vm254, %vm259
    %vm265 = vmand %vm260, %vm241
    %vm266 = vmand %vm261, %vm241
    %vm267 = vmand %vm262, %vm241
    %vm268 = vmand %vm263, %vm241
    %vm269 = vmand %vm264, %vm241
    %vm270 = vmand %vm265, %vm242
    %vm271 = vmand %vm266, %vm242
    %vm272 = vmand %vm267, %vm242
    %vm273 = vmand %vm268, %vm242
    %vm274 = vmand %vm269, %vm242
    %v275 = vsel %vm270, 1.0, 0.0
    %v276 = vsel %vm271, 1.0, 0.0
    %v277 = vsel %vm272, 1.0, 0.0
    %v278 = vsel %vm273, 1.0, 0.0
    %v279 = vsel %vm274, 1.0, 0.0
    %vm280 = vcmp.ge.s32.totalorder %v237, 9
    %vm281 = vcmp.lt.s32.totalorder %v237, 18
    %vm282 = vmand %vm280, %vm281
    %v283 = vsub.s32 %v237, 9
    %vm284 = vcmp.eq.s32.totalorder %v283, %v234
    %vm285 = vcmp.eq.s32.totalorder %v283, %v235
    %vm286 = vmand %vm282, %vm284
    %vm287 = vmand %vm282, %vm285
    %v288 = vsel %vm286, 1.0, %v248
    %v289 = vsel %vm287, 1.0, %v249
    %vm290 = vcmp.ge.s32.totalorder %v234, 9
    %vm291 = vcmp.ge.s32.totalorder %v235, 9
    %vm292 = vcmp.ge.s32.totalorder %v238, 9
    %vm293 = vcmp.ge.s32.totalorder %v239, 9
    %vm294 = vcmp.ge.s32.totalorder %v240, 9
    %vm295 = vcmp.lt.s32.totalorder %v234, 18
    %vm296 = vcmp.lt.s32.totalorder %v235, 18
    %vm297 = vcmp.lt.s32.totalorder %v238, 18
    %vm298 = vcmp.lt.s32.totalorder %v239, 18
    %vm299 = vcmp.lt.s32.totalorder %v240, 18
    %vm300 = vmand %vm290, %vm295
    %vm301 = vmand %vm291, %vm296
    %vm302 = vmand %vm292, %vm297
    %vm303 = vmand %vm293, %vm298
    %vm304 = vmand %vm294, %vm299
    %vm305 = vmand %vm300, %vm280
    %vm306 = vmand %vm301, %vm280
    %vm307 = vmand %vm302, %vm280
    %vm308 = vmand %vm303, %vm280
    %vm309 = vmand %vm304, %vm280
    %vm310 = vmand %vm305, %vm281
    %vm311 = vmand %vm306, %vm281
    %vm312 = vmand %vm307, %vm281
    %vm313 = vmand %vm308, %vm281
    %vm314 = vmand %vm309, %vm281
    %v315 = vsel %vm310, 1.0, %v275
    %v316 = vsel %vm311, 1.0, %v276
    %v317 = vsel %vm312, 1.0, %v277
    %v318 = vsel %vm313, 1.0, %v278
    %v319 = vsel %vm314, 1.0, %v279
    %vm320 = vcmp.ge.s32.totalorder %v237, 18
    %vm321 = vcmp.lt.s32.totalorder %v237, 27
    %vm322 = vmand %vm320, %vm321
    %v323 = vsub.s32 %v237, 18
    %vm324 = vcmp.eq.s32.totalorder %v323, %v234
    %vm325 = vcmp.eq.s32.totalorder %v323, %v235
    %vm326 = vmand %vm322, %vm324
    %vm327 = vmand %vm322, %vm325
    %v328 = vsel %vm326, 1.0, %v288
    %v329 = vsel %vm327, 1.0, %v289
    %vm330 = vcmp.ge.s32.totalorder %v234, 18
    %vm331 = vcmp.ge.s32.totalorder %v235, 18
    %vm332 = vcmp.ge.s32.totalorder %v238, 18
    %vm333 = vcmp.ge.s32.totalorder %v239, 18
    %vm334 = vcmp.ge.s32.totalorder %v240, 18
    %vm335 = vcmp.lt.s32.totalorder %v234, 27
    %vm336 = vcmp.lt.s32.totalorder %v235, 27
    %vm337 = vcmp.lt.s32.totalorder %v238, 27
    %vm338 = vcmp.lt.s32.totalorder %v239, 27
    %vm339 = vcmp.lt.s32.totalorder %v240, 27
    %vm340 = vmand %vm330, %vm335
    %vm341 = vmand %vm331, %vm336
    %vm342 = vmand %vm332, %vm337
    %vm343 = vmand %vm333, %vm338
    %vm344 = vmand %vm334, %vm339
    %vm345 = vmand %vm340, %vm320
    %vm346 = vmand %vm341, %vm320
    %vm347 = vmand %vm342, %vm320
    %vm348 = vmand %vm343, %vm320
    %vm349 = vmand %vm344, %vm320
    %vm350 = vmand %vm345, %vm321
    %vm351 = vmand %vm346, %vm321
    %vm352 = vmand %vm347, %vm321
    %vm353 = vmand %vm348, %vm321
    %vm354 = vmand %vm349, %vm321
    %v355 = vsel %vm350, 1.0, %v315
    %v356 = vsel %vm351, 1.0, %v316
    %v357 = vsel %vm352, 1.0, %v317
    %v358 = vsel %vm353, 1.0, %v318
    %v359 = vsel %vm354, 1.0, %v319
    %vm360 = vcmp.ge.s32.totalorder %v237, 27
    %vm361 = vcmp.lt.s32.totalorder %v237, 36
    %vm362 = vmand %vm360, %vm361
    %v363 = vsub.s32 %v237, 27
    %vm364 = vcmp.eq.s32.totalorder %v363, %v234
    %vm365 = vcmp.eq.s32.totalorder %v363, %v235
    %vm366 = vmand %vm362, %vm364
    %vm367 = vmand %vm362, %vm365
    %v368 = vsel %vm366, 1.0, %v328
    %v369 = vsel %vm367, 1.0, %v329
    %vm370 = vcmp.ge.s32.totalorder %v234, 27
    %vm371 = vcmp.ge.s32.totalorder %v235, 27
    %vm372 = vcmp.ge.s32.totalorder %v238, 27
    %vm373 = vcmp.ge.s32.totalorder %v239, 27
    %vm374 = vcmp.ge.s32.totalorder %v240, 27
    %vm375 = vcmp.lt.s32.totalorder %v234, 36
    %vm376 = vcmp.lt.s32.totalorder %v235, 36
    %vm377 = vcmp.lt.s32.totalorder %v238, 36
    %vm378 = vcmp.lt.s32.totalorder %v239, 36
    %vm379 = vcmp.lt.s32.totalorder %v240, 36
    %vm380 = vmand %vm370, %vm375
    %vm381 = vmand %vm371, %vm376
    %vm382 = vmand %vm372, %vm377
    %vm383 = vmand %vm373, %vm378
    %vm384 = vmand %vm374, %vm379
    %vm385 = vmand %vm380, %vm360
    %vm386 = vmand %vm381, %vm360
    %vm387 = vmand %vm382, %vm360
    %vm388 = vmand %vm383, %vm360
    %vm389 = vmand %vm384, %vm360
    %vm390 = vmand %vm385, %vm361
    %vm391 = vmand %vm386, %vm361
    %vm392 = vmand %vm387, %vm361
    %vm393 = vmand %vm388, %vm361
    %vm394 = vmand %vm389, %vm361
    %v395 = vsel %vm390, 1.0, %v355
    %v396 = vsel %vm391, 1.0, %v356
    %v397 = vsel %vm392, 1.0, %v357
    %v398 = vsel %vm393, 1.0, %v358
    %v399 = vsel %vm394, 1.0, %v359
    %vm400 = vcmp.eq.s32.totalorder %v234, %v237
    %vm401 = vcmp.eq.s32.totalorder %v235, %v237
    %vm402 = vcmp.eq.s32.totalorder %v238, %v237
    %vm403 = vcmp.eq.s32.totalorder %v239, %v237
    %vm404 = vcmp.eq.s32.totalorder %v240, %v237
    %vm405 = vmand %vm260, %vm400
    %vm406 = vmand %vm261, %vm401
    %vm407 = vmand %vm262, %vm402
    %vm408 = vmand %vm263, %vm403
    %vm409 = vmand %vm264, %vm404
    %v410 = vsel %vm405, 1.0, 0.0
    %v411 = vsel %vm406, 1.0, 0.0
    %v412 = vsel %vm407, 1.0, 0.0
    %v413 = vsel %vm408, 1.0, 0.0
    %v414 = vsel %vm409, 1.0, 0.0
    %v415 = vsub.s32 %v234, 18
    %v416 = vsub.s32 %v235, 18
    %v417 = vsub.s32 %v238, 18
    %v418 = vsub.s32 %v239, 18
    %v419 = vsub.s32 %v240, 18
    %vm420 = vcmp.eq.s32.totalorder %v415, %v237
    %vm421 = vcmp.eq.s32.totalorder %v416, %v237
    %vm422 = vcmp.eq.s32.totalorder %v417, %v237
    %vm423 = vcmp.eq.s32.totalorder %v418, %v237
    %vm424 = vcmp.eq.s32.totalorder %v419, %v237
    %vm425 = vmand %vm340, %vm420
    %vm426 = vmand %vm341, %vm421
    %vm427 = vmand %vm342, %vm422
    %vm428 = vmand %vm343, %vm423
    %vm429 = vmand %vm344, %vm424
    %v430 = vsel %vm425, 1.0, %v410
    %v431 = vsel %vm426, 1.0, %v411
    %v432 = vsel %vm427, 1.0, %v412
    %v433 = vsel %vm428, 1.0, %v413
    %v434 = vsel %vm429, 1.0, %v414
    %v435 = vsub.s32 %v234, 9
    %v436 = vsub.s32 %v235, 9
    %v437 = vsub.s32 %v238, 9
    %v438 = vsub.s32 %v239, 9
    %v439 = vsub.s32 %v240, 9
    %vm440 = vcmp.eq.s32.totalorder %v435, %v237
    %vm441 = vcmp.eq.s32.totalorder %v436, %v237
    %vm442 = vcmp.eq.s32.totalorder %v437, %v237
    %vm443 = vcmp.eq.s32.totalorder %v438, %v237
    %vm444 = vcmp.eq.s32.totalorder %v439, %v237
    %vm445 = vmand %vm300, %vm440
    %vm446 = vmand %vm301, %vm441
    %vm447 = vmand %vm302, %vm442
    %vm448 = vmand %vm303, %vm443
    %vm449 = vmand %vm304, %vm444
    %v450 = vsel %vm445, 1.0, 0.0
    %v451 = vsel %vm446, 1.0, 0.0
    %v452 = vsel %vm447, 1.0, 0.0
    %v453 = vsel %vm448, 1.0, 0.0
    %v454 = vsel %vm449, 1.0, 0.0
    %v455 = vsub.s32 %v234, 27
    %v456 = vsub.s32 %v235, 27
    %v457 = vsub.s32 %v238, 27
    %v458 = vsub.s32 %v239, 27
    %v459 = vsub.s32 %v240, 27
    %vm460 = vcmp.eq.s32.totalorder %v455, %v237
    %vm461 = vcmp.eq.s32.totalorder %v456, %v237
    %vm462 = vcmp.eq.s32.totalorder %v457, %v237
    %vm463 = vcmp.eq.s32.totalorder %v458, %v237
    %vm464 = vcmp.eq.s32.totalorder %v459, %v237
    %vm465 = vmand %vm380, %vm460
    %vm466 = vmand %vm381, %vm461
    %vm467 = vmand %vm382, %vm462
    %vm468 = vmand %vm383, %vm463
    %vm469 = vmand %vm384, %vm464
    %v470 = vsel %vm465, 1.0, %v450
    %v471 = vsel %vm466, 1.0, %v451
    %v472 = vsel %vm467, 1.0, %v452
    %v473 = vsel %vm468, 1.0, %v453
    %v474 = vsel %vm469, 1.0, %v454
    %vm477 = vcmask 1046528
    %v478 = vrot.slane %v137, 1
    %v479 = vrot.slane %v142, 1
    %v480 = vsel %vm477, %v478, %v479
    %vm482 = vcmask 72704
    %v484 = vsel %vm482, %v470, 0
    %v487 = vsel %vm482, %v471, 0
    %v490 = vsel %vm482, %v472, 0
    %v493 = vsel %vm482, %v473, 0
    %v496 = vsel %vm482, %v474, 0
    %vm498 = vcmask 1040384
    %v499 = vsel %vm498, %v479, 0
    %501 = vmatprep.subr.mxu0 0.0
    %502 = vmatpush1.msra.mxu0 %v480
    %503 = vmatprep.subr.mxu0 0.0
    %504 = vmatpush1.msra.mxu0 %v499
    %505 = vmatprep.subr.mxu0 0.0
    %506 = vmatpush1.msra.mxu0 0.0
    %507 = vmatprep.subr.mxu0 0.0
    %508 = vmatpush1.msra.mxu0 0.0
    %509 = vmatprep.subr.mxu0 0.0
    %510 = vmatpush1.msra.mxu0 0.0
    %511 = vmatprep.subr.mxu0 0.0
    %512 = vmatpush1.msra.mxu0 0.0
    %513 = vmatprep.subr.mxu0 0.0
    %514 = vmatpush1.msra.mxu0 0.0
    %515 = vmatprep.subr.mxu0 0.0
    %516 = vmatpush1.msra.mxu0 0.0
    %517 = vmatprep.subr.mxu0 0.0
    %518 = vmatpush1.msra.mxu0 0.0
    %519 = vmatprep.subr.mxu0 0.0
    %520 = vmatpush1.msra.mxu0 0.0
    %521 = vmatprep.subr.mxu0 0.0
    %522 = vmatpush1.msra.mxu0 0.0
    %523 = vmatprep.subr.mxu0 0.0
    %524 = vmatpush1.msra.mxu0 0.0
    %525 = vmatprep.subr.mxu0 0.0
    %526 = vmatpush1.msra.mxu0 0.0
    %527 = vmatprep.subr.mxu0 0.0
    %528 = vmatpush1.msra.mxu0 0.0
    %529 = vmatprep.subr.mxu0 0.0
    %530 = vmatpush1.msra.mxu0 0.0
    %531 = vmatprep.subr.mxu0 0.0
    %532 = vmatpush1.msra.mxu0 0.0
    %533 = vmatprep.subr.mxu0 0.0
    %534 = vmatpush1.msra.mxu0 0.0
    %535 = vmatprep.subr.mxu0 0.0
    %536 = vmatpush1.msra.mxu0 0.0
    %537 = vmatprep.subr.mxu0 0.0
    %538 = vmatpush1.msra.mxu0 0.0
    %539 = vmatprep.subr.mxu0 0.0
    %540 = vmatpush1.msra.mxu0 0.0
    %541 = vmatprep.subr.mxu0 0.0
    %542 = vmatpush1.msra.mxu0 0.0
    %543 = vmatprep.subr.mxu0 0.0
    %544 = vmatpush1.msra.mxu0 0.0
    %545 = vmatprep.subr.mxu0 0.0
    %546 = vmatpush1.msra.mxu0 0.0
    %547 = vmatprep.subr.mxu0 0.0
    %548 = vmatpush1.msra.mxu0 0.0
    %549 = vmatprep.subr.mxu0 0.0
    %550 = vmatpush1.msra.mxu0 0.0
    %551 = vmatprep.subr.mxu0 0.0
    %552 = vmatpush1.msra.mxu0 0.0
    %553 = vmatprep.subr.mxu0 0.0
    %554 = vmatpush1.msra.mxu0 0.0
    %555 = vmatprep.subr.mxu0 0.0
    %556 = vmatpush1.msra.mxu0 0.0
    %557 = vmatprep.subr.mxu0 0.0
    %558 = vmatpush1.msra.mxu0 0.0
    %559 = vmatprep.subr.mxu0 0.0
    %560 = vmatpush1.msra.mxu0 0.0
    %561 = vmatprep.subr.mxu0 0.0
    %562 = vmatpush1.msra.mxu0 0.0
    %563 = vmatprep.subr.mxu0 0.0
    %564 = vmatpush1.msra.mxu0 0.0
    %565 = vmatprep.mubr.f32.mxu0 0.0
    %566 = vmatmul.mubr.f32.gmra.mrb[0].mxu0 %v484
    %v567 = vpop.f32.mrb[0].mxu0
    %v568 = vadd.f32 0.0, %v567
    %v569 = vpop.f32.mrb[0].mxu0
    %570 = vmatprep.mubr.f32.mxu0 0.0
    %571 = vmatmul.mubr.f32.gmra.mrb[0].mxu0 %v487
    %v572 = vpop.f32.mrb[0].mxu0
    %v573 = vadd.f32 0.0, %v572
    %v574 = vpop.f32.mrb[0].mxu0
    %575 = vmatprep.mubr.f32.mxu0 0.0
    %576 = vmatmul.mubr.f32.gmra.mrb[0].mxu0 %v490
    %v577 = vpop.f32.mrb[0].mxu0
    %v578 = vadd.f32 0.0, %v577
    %v579 = vpop.f32.mrb[0].mxu0
    %580 = vmatprep.mubr.f32.mxu0 0.0
    %581 = vmatmul.mubr.f32.gmra.mrb[0].mxu0 %v493
    %v582 = vpop.f32.mrb[0].mxu0
    %v583 = vadd.f32 0.0, %v582
    %v584 = vpop.f32.mrb[0].mxu0
    %585 = vmatprep.mubr.f32.mxu0 0.0
    %586 = vmatmul.mubr.f32.gmra.mrb[0].mxu0 %v496
    %v587 = vpop.f32.mrb[0].mxu0
    %v588 = vadd.f32 0.0, %v587
    %v589 = vpop.f32.mrb[0].mxu0
    %590 = vdwg.mxu0
    %v592 = vsel %vm482, %v430, 0
    %v595 = vsel %vm482, %v431, 0
    %v598 = vsel %vm482, %v432, 0
    %v601 = vsel %vm482, %v433, 0
    %v604 = vsel %vm482, %v434, 0
    %v606 = vsel %vm498, %v137, 0
    %608 = vmatprep.subr.mxu0 0.0
    %609 = vmatpush1.msra.mxu0 %v132
    %610 = vmatprep.subr.mxu0 0.0
    %611 = vmatpush1.msra.mxu0 %v606
    %612 = vmatprep.subr.mxu0 0.0
    %613 = vmatpush1.msra.mxu0 0.0
    %614 = vmatprep.subr.mxu0 0.0
    %615 = vmatpush1.msra.mxu0 0.0
    %616 = vmatprep.subr.mxu0 0.0
    %617 = vmatpush1.msra.mxu0 0.0
    %618 = vmatprep.subr.mxu0 0.0
    %619 = vmatpush1.msra.mxu0 0.0
    %620 = vmatprep.subr.mxu0 0.0
    %621 = vmatpush1.msra.mxu0 0.0
    %622 = vmatprep.subr.mxu0 0.0
    %623 = vmatpush1.msra.mxu0 0.0
    %624 = vmatprep.subr.mxu0 0.0
    %625 = vmatpush1.msra.mxu0 0.0
    %626 = vmatprep.subr.mxu0 0.0
    %627 = vmatpush1.msra.mxu0 0.0
    %628 = vmatprep.subr.mxu0 0.0
    %629 = vmatpush1.msra.mxu0 0.0
    %630 = vmatprep.subr.mxu0 0.0
    %631 = vmatpush1.msra.mxu0 0.0
    %632 = vmatprep.subr.mxu0 0.0
    %633 = vmatpush1.msra.mxu0 0.0
    %634 = vmatprep.subr.mxu0 0.0
    %635 = vmatpush1.msra.mxu0 0.0
    %636 = vmatprep.subr.mxu0 0.0
    %637 = vmatpush1.msra.mxu0 0.0
    %638 = vmatprep.subr.mxu0 0.0
    %639 = vmatpush1.msra.mxu0 0.0
    %640 = vmatprep.subr.mxu0 0.0
    %641 = vmatpush1.msra.mxu0 0.0
    %642 = vmatprep.subr.mxu0 0.0
    %643 = vmatpush1.msra.mxu0 0.0
    %644 = vmatprep.subr.mxu0 0.0
    %645 = vmatpush1.msra.mxu0 0.0
    %646 = vmatprep.subr.mxu0 0.0
    %647 = vmatpush1.msra.mxu0 0.0
    %648 = vmatprep.subr.mxu0 0.0
    %649 = vmatpush1.msra.mxu0 0.0
    %650 = vmatprep.subr.mxu0 0.0
    %651 = vmatpush1.msra.mxu0 0.0
    %652 = vmatprep.subr.mxu0 0.0
    %653 = vmatpush1.msra.mxu0 0.0
    %654 = vmatprep.subr.mxu0 0.0
    %655 = vmatpush1.msra.mxu0 0.0
    %656 = vmatprep.subr.mxu0 0.0
    %657 = vmatpush1.msra.mxu0 0.0
    %658 = vmatprep.subr.mxu0 0.0
    %659 = vmatpush1.msra.mxu0 0.0
    %660 = vmatprep.subr.mxu0 0.0
    %661 = vmatpush1.msra.mxu0 0.0
    %662 = vmatprep.subr.mxu0 0.0
    %663 = vmatpush1.msra.mxu0 0.0
    %664 = vmatprep.subr.mxu0 0.0
    %665 = vmatpush1.msra.mxu0 0.0
    %666 = vmatprep.subr.mxu0 0.0
    %667 = vmatpush1.msra.mxu0 0.0
    %668 = vmatprep.subr.mxu0 0.0
    %669 = vmatpush1.msra.mxu0 0.0
    %670 = vmatprep.subr.mxu0 0.0
    %671 = vmatpush1.msra.mxu0 0.0
    %672 = vmatprep.mubr.f32.mxu0 0.0
    %673 = vmatmul.mubr.f32.gmra.mrb[0].mxu0 %v592
    %v674 = vpop.f32.mrb[0].mxu0
    %v675 = vadd.f32 %v568, %v674
    %v676 = vpop.f32.mrb[0].mxu0
    %677 = vmatprep.mubr.f32.mxu0 0.0
    %678 = vmatmul.mubr.f32.gmra.mrb[0].mxu0 %v595
    %v679 = vpop.f32.mrb[0].mxu0
    %v680 = vadd.f32 %v573, %v679
    %v681 = vpop.f32.mrb[0].mxu0
    %682 = vmatprep.mubr.f32.mxu0 0.0
    %683 = vmatmul.mubr.f32.gmra.mrb[0].mxu0 %v598
    %v684 = vpop.f32.mrb[0].mxu0
    %v685 = vadd.f32 %v578, %v684
    %v686 = vpop.f32.mrb[0].mxu0
    %687 = vmatprep.mubr.f32.mxu0 0.0
    %688 = vmatmul.mubr.f32.gmra.mrb[0].mxu0 %v601
    %v689 = vpop.f32.mrb[0].mxu0
    %v690 = vadd.f32 %v583, %v689
    %v691 = vpop.f32.mrb[0].mxu0
    %692 = vmatprep.mubr.f32.mxu0 0.0
    %693 = vmatmul.mubr.f32.gmra.mrb[0].mxu0 %v604
    %v694 = vpop.f32.mrb[0].mxu0
    %v695 = vadd.f32 %v588, %v694
    %v696 = vpop.f32.mrb[0].mxu0
    %697 = vdwg.mxu0
    %vm698 = vcmask 261120
    %v700 = vsel %vm698, %v132, 0
    %v702 = vsel %vm698, %v137, 0
    %704 = vmatprep.subr.mxu0 0.0
    %705 = vmatpush1.xpose.msra.mxu0 %v700
    %706 = vmatprep.subr.mxu0 0.0
    %707 = vmatpush1.xpose.msra.mxu0 %v702
    %708 = vmatprep.subr.mxu0 0.0
    %709 = vmatpush1.xpose.msra.mxu0 0.0
    %710 = vmatprep.subr.mxu0 0.0
    %711 = vmatpush1.xpose.msra.mxu0 0.0
    %712 = vmatprep.subr.mxu0 0.0
    %713 = vmatpush1.xpose.msra.mxu0 0.0
    %714 = vmatprep.subr.mxu0 0.0
    %715 = vmatpush1.xpose.msra.mxu0 0.0
    %716 = vmatprep.subr.mxu0 0.0
    %717 = vmatpush1.xpose.msra.mxu0 0.0
    %718 = vmatprep.subr.mxu0 0.0
    %719 = vmatpush1.xpose.msra.mxu0 0.0
    %720 = vmatprep.subr.mxu0 0.0
    %721 = vmatpush1.xpose.msra.mxu0 0.0
    %722 = vmatprep.subr.mxu0 0.0
    %723 = vmatpush1.xpose.msra.mxu0 0.0
    %724 = vmatprep.subr.mxu0 0.0
    %725 = vmatpush1.xpose.msra.mxu0 0.0
    %726 = vmatprep.subr.mxu0 0.0
    %727 = vmatpush1.xpose.msra.mxu0 0.0
    %728 = vmatprep.subr.mxu0 0.0
    %729 = vmatpush1.xpose.msra.mxu0 0.0
    %730 = vmatprep.subr.mxu0 0.0
    %731 = vmatpush1.xpose.msra.mxu0 0.0
    %732 = vmatprep.subr.mxu0 0.0
    %733 = vmatpush1.xpose.msra.mxu0 0.0
    %734 = vmatprep.subr.mxu0 0.0
    %735 = vmatpush1.xpose.msra.mxu0 0.0
    %736 = vmatprep.subr.mxu0 0.0
    %737 = vmatpush1.xpose.msra.mxu0 0.0
    %738 = vmatprep.subr.mxu0 0.0
    %739 = vmatpush1.xpose.msra.mxu0 0.0
    %740 = vmatprep.subr.mxu0 0.0
    %741 = vmatpush1.xpose.msra.mxu0 0.0
    %742 = vmatprep.subr.mxu0 0.0
    %743 = vmatpush1.xpose.msra.mxu0 0.0
    %744 = vmatprep.subr.mxu0 0.0
    %745 = vmatpush1.xpose.msra.mxu0 0.0
    %746 = vmatprep.subr.mxu0 0.0
    %747 = vmatpush1.xpose.msra.mxu0 0.0
    %748 = vmatprep.subr.mxu0 0.0
    %749 = vmatpush1.xpose.msra.mxu0 0.0
    %750 = vmatprep.subr.mxu0 0.0
    %751 = vmatpush1.xpose.msra.mxu0 0.0
    %752 = vmatprep.subr.mxu0 0.0
    %753 = vmatpush1.xpose.msra.mxu0 0.0
    %754 = vmatprep.subr.mxu0 0.0
    %755 = vmatpush1.xpose.msra.mxu0 0.0
    %756 = vmatprep.subr.mxu0 0.0
    %757 = vmatpush1.xpose.msra.mxu0 0.0
    %758 = vmatprep.subr.mxu0 0.0
    %759 = vmatpush1.xpose.msra.mxu0 0.0
    %760 = vmatprep.subr.mxu0 0.0
    %761 = vmatpush1.xpose.msra.mxu0 0.0
    %762 = vmatprep.subr.mxu0 0.0
    %763 = vmatpush1.xpose.msra.mxu0 0.0
    %764 = vmatprep.subr.mxu0 0.0
    %765 = vmatpush1.xpose.msra.mxu0 0.0
    %766 = vmatprep.subr.mxu0 0.0
    %767 = vmatpush1.xpose.msra.mxu0 0.0
    %768 = vmatprep.mubr.f32.mxu0 0.0
    %769 = vmatmul.mubr.f32.gmra.mrb[0].mxu0 %v700
    %v770 = vpop.f32.mrb[0].mxu0
    %v771 = vadd.f32 0.0, %v770
    %v772 = vpop.f32.mrb[0].mxu0
    %773 = vmatprep.mubr.f32.mxu0 0.0
    %774 = vmatmul.mubr.f32.gmra.mrb[0].mxu0 %v702
    %v775 = vpop.f32.mrb[0].mxu0
    %v776 = vadd.f32 0.0, %v775
    %v777 = vpop.f32.mrb[0].mxu0
    %778 = vdwg.mxu0
    %v780 = vsel %vm482, %v771, 0
    %v783 = vsel %vm482, %v776, 0
    %v786 = vsel %vm498, %v369, 0
    %788 = vmatprep.subr.mxu0 0.0
    %789 = vmatpush1.msra.mxu0 %v368
    %790 = vmatprep.subr.mxu0 0.0
    %791 = vmatpush1.msra.mxu0 %v786
    %792 = vmatprep.subr.mxu0 0.0
    %793 = vmatpush1.msra.mxu0 0.0
    %794 = vmatprep.subr.mxu0 0.0
    %795 = vmatpush1.msra.mxu0 0.0
    %796 = vmatprep.subr.mxu0 0.0
    %797 = vmatpush1.msra.mxu0 0.0
    %798 = vmatprep.subr.mxu0 0.0
    %799 = vmatpush1.msra.mxu0 0.0
    %800 = vmatprep.subr.mxu0 0.0
    %801 = vmatpush1.msra.mxu0 0.0
    %802 = vmatprep.subr.mxu0 0.0
    %803 = vmatpush1.msra.mxu0 0.0
    %804 = vmatprep.subr.mxu0 0.0
    %805 = vmatpush1.msra.mxu0 0.0
    %806 = vmatprep.subr.mxu0 0.0
    %807 = vmatpush1.msra.mxu0 0.0
    %808 = vmatprep.subr.mxu0 0.0
    %809 = vmatpush1.msra.mxu0 0.0
    %810 = vmatprep.subr.mxu0 0.0
    %811 = vmatpush1.msra.mxu0 0.0
    %812 = vmatprep.subr.mxu0 0.0
    %813 = vmatpush1.msra.mxu0 0.0
    %814 = vmatprep.subr.mxu0 0.0
    %815 = vmatpush1.msra.mxu0 0.0
    %816 = vmatprep.subr.mxu0 0.0
    %817 = vmatpush1.msra.mxu0 0.0
    %818 = vmatprep.subr.mxu0 0.0
    %819 = vmatpush1.msra.mxu0 0.0
    %820 = vmatprep.subr.mxu0 0.0
    %821 = vmatpush1.msra.mxu0 0.0
    %822 = vmatprep.subr.mxu0 0.0
    %823 = vmatpush1.msra.mxu0 0.0
    %824 = vmatprep.subr.mxu0 0.0
    %825 = vmatpush1.msra.mxu0 0.0
    %826 = vmatprep.subr.mxu0 0.0
    %827 = vmatpush1.msra.mxu0 0.0
    %828 = vmatprep.subr.mxu0 0.0
    %829 = vmatpush1.msra.mxu0 0.0
    %830 = vmatprep.subr.mxu0 0.0
    %831 = vmatpush1.msra.mxu0 0.0
    %832 = vmatprep.subr.mxu0 0.0
    %833 = vmatpush1.msra.mxu0 0.0
    %834 = vmatprep.subr.mxu0 0.0
    %835 = vmatpush1.msra.mxu0 0.0
    %836 = vmatprep.subr.mxu0 0.0
    %837 = vmatpush1.msra.mxu0 0.0
    %838 = vmatprep.subr.mxu0 0.0
    %839 = vmatpush1.msra.mxu0 0.0
    %840 = vmatprep.subr.mxu0 0.0
    %841 = vmatpush1.msra.mxu0 0.0
    %842 = vmatprep.subr.mxu0 0.0
    %843 = vmatpush1.msra.mxu0 0.0
    %844 = vmatprep.subr.mxu0 0.0
    %845 = vmatpush1.msra.mxu0 0.0
    %846 = vmatprep.subr.mxu0 0.0
    %847 = vmatpush1.msra.mxu0 0.0
    %848 = vmatprep.subr.mxu0 0.0
    %849 = vmatpush1.msra.mxu0 0.0
    %850 = vmatprep.subr.mxu0 0.0
    %851 = vmatpush1.msra.mxu0 0.0
    %852 = vmatprep.mubr.f32.mxu0 0.0
    %853 = vmatmul.mubr.f32.gmra.mrb[0].mxu0 %v780
    %v854 = vpop.f32.mrb[0].mxu0
    %v855 = vadd.f32 0.0, %v854
    %v856 = vpop.f32.mrb[0].mxu0
    %857 = vmatprep.mubr.f32.mxu0 0.0
    %858 = vmatmul.mubr.f32.gmra.mrb[0].mxu0 %v783
    %v859 = vpop.f32.mrb[0].mxu0
    %v860 = vadd.f32 0.0, %v859
    %v861 = vpop.f32.mrb[0].mxu0
    %862 = vdwg.mxu0
    %v863 = vld [vmem:[%s2] sm:$0xff]
    %v864 = vld [vmem:[%s2 + $0x8] sm:$0x1]
    %v865 = vmul.f32 %v855, %v863
    %v866 = vmul.f32 %v860, %v864
    %vm867 = vcmask 293888
    %v868 = vsel %vm867, %v865, -inf
    %869 = vmax.xlane.f32.xlu0 %v868
    %v870 = vpop.xlane.xlu0 %869
    %vm871 = vcmask 286720
    %v872 = vsel %vm871, %v866, -inf
    %873 = vmax.xlane.f32.xlu0 %v872
    %v874 = vpop.xlane.xlu0 %873
    %v875 = vsub.f32 %v865, %v870
    %v876 = vsub.f32 %v866, %v874
    %v877 = vmul.f32 %v875, 1.442695
    %v878 = vpow.pop %v877
    %v879 = vmul.f32 %v876, 1.442695
    %v880 = vpow.pop %v879
    %v882 = vsel %vm867, %v878, 0
    %v885 = vsel %vm867, %v880, 0
    %v888 = vsel %vm154, %v399, 0
    %890 = vmatprep.subr.mxu0 0.0
    %891 = vmatpush1.msra.mxu0 %v395
    %892 = vmatprep.subr.mxu0 0.0
    %893 = vmatpush1.msra.mxu0 %v396
    %894 = vmatprep.subr.mxu0 0.0
    %895 = vmatpush1.msra.mxu0 %v397
    %896 = vmatprep.subr.mxu0 0.0
    %897 = vmatpush1.msra.mxu0 %v398
    %898 = vmatprep.subr.mxu0 0.0
    %899 = vmatpush1.msra.mxu0 %v888
    %900 = vmatprep.subr.mxu0 0.0
    %901 = vmatpush1.msra.mxu0 0.0
    %902 = vmatprep.subr.mxu0 0.0
    %903 = vmatpush1.msra.mxu0 0.0
    %904 = vmatprep.subr.mxu0 0.0
    %905 = vmatpush1.msra.mxu0 0.0
    %906 = vmatprep.subr.mxu0 0.0
    %907 = vmatpush1.msra.mxu0 0.0
    %908 = vmatprep.subr.mxu0 0.0
    %909 = vmatpush1.msra.mxu0 0.0
    %910 = vmatprep.subr.mxu0 0.0
    %911 = vmatpush1.msra.mxu0 0.0
    %912 = vmatprep.subr.mxu0 0.0
    %913 = vmatpush1.msra.mxu0 0.0
    %914 = vmatprep.subr.mxu0 0.0
    %915 = vmatpush1.msra.mxu0 0.0
    %916 = vmatprep.subr.mxu0 0.0
    %917 = vmatpush1.msra.mxu0 0.0
    %918 = vmatprep.subr.mxu0 0.0
    %919 = vmatpush1.msra.mxu0 0.0
    %920 = vmatprep.subr.mxu0 0.0
    %921 = vmatpush1.msra.mxu0 0.0
    %922 = vmatprep.subr.mxu0 0.0
    %923 = vmatpush1.msra.mxu0 0.0
    %924 = vmatprep.subr.mxu0 0.0
    %925 = vmatpush1.msra.mxu0 0.0
    %926 = vmatprep.subr.mxu0 0.0
    %927 = vmatpush1.msra.mxu0 0.0
    %928 = vmatprep.subr.mxu0 0.0
    %929 = vmatpush1.msra.mxu0 0.0
    %930 = vmatprep.subr.mxu0 0.0
    %931 = vmatpush1.msra.mxu0 0.0
    %932 = vmatprep.subr.mxu0 0.0
    %933 = vmatpush1.msra.mxu0 0.0
    %934 = vmatprep.subr.mxu0 0.0
    %935 = vmatpush1.msra.mxu0 0.0
    %936 = vmatprep.subr.mxu0 0.0
    %937 = vmatpush1.msra.mxu0 0.0
    %938 = vmatprep.subr.mxu0 0.0
    %939 = vmatpush1.msra.mxu0 0.0
    %940 = vmatprep.subr.mxu0 0.0
    %941 = vmatpush1.msra.mxu0 0.0
    %942 = vmatprep.subr.mxu0 0.0
    %943 = vmatpush1.msra.mxu0 0.0
    %944 = vmatprep.subr.mxu0 0.0
    %945 = vmatpush1.msra.mxu0 0.0
    %946 = vmatprep.subr.mxu0 0.0
    %947 = vmatpush1.msra.mxu0 0.0
    %948 = vmatprep.subr.mxu0 0.0
    %949 = vmatpush1.msra.mxu0 0.0
    %950 = vmatprep.subr.mxu0 0.0
    %951 = vmatpush1.msra.mxu0 0.0
    %952 = vmatprep.subr.mxu0 0.0
    %953 = vmatpush1.msra.mxu0 0.0
    %954 = vmatprep.mubr.f32.mxu0 0.0
    %955 = vmatmul.mubr.f32.gmra.mrb[0].mxu0 %v882
    %v956 = vpop.f32.mrb[0].mxu0
    %v957 = vadd.f32 0.0, %v956
    %v958 = vpop.f32.mrb[0].mxu0
    %959 = vmatprep.mubr.f32.mxu0 0.0
    %960 = vmatmul.mubr.f32.gmra.mrb[0].mxu0 %v885
    %v961 = vpop.f32.mrb[0].mxu0
    %v962 = vadd.f32 0.0, %v961
    %v963 = vpop.f32.mrb[0].mxu0
    %964 = vdwg.mxu0
    %v965 = vrcp.pop %v957
    %v966 = vmul.f32 %v878, %v965
    %v967 = vrcp.pop %v962
    %v968 = vmul.f32 %v880, %v967
    %v970 = vsel %vm867, %v966, 0
    %v973 = vsel %vm867, %v968, 0
    %v976 = vsel %vm154, %v695, 0
    %978 = vmatprep.subr.mxu0 0.0
    %979 = vmatpush1.msra.mxu0 %v675
    %980 = vmatprep.subr.mxu0 0.0
    %981 = vmatpush1.msra.mxu0 %v680
    %982 = vmatprep.subr.mxu0 0.0
    %983 = vmatpush1.msra.mxu0 %v685
    %984 = vmatprep.subr.mxu0 0.0
    %985 = vmatpush1.msra.mxu0 %v690
    %986 = vmatprep.subr.mxu0 0.0
    %987 = vmatpush1.msra.mxu0 %v976
    %988 = vmatprep.subr.mxu0 0.0
    %989 = vmatpush1.msra.mxu0 0.0
    %990 = vmatprep.subr.mxu0 0.0
    %991 = vmatpush1.msra.mxu0 0.0
    %992 = vmatprep.subr.mxu0 0.0
    %993 = vmatpush1.msra.mxu0 0.0
    %994 = vmatprep.subr.mxu0 0.0
    %995 = vmatpush1.msra.mxu0 0.0
    %996 = vmatprep.subr.mxu0 0.0
    %997 = vmatpush1.msra.mxu0 0.0
    %998 = vmatprep.subr.mxu0 0.0
    %999 = vmatpush1.msra.mxu0 0.0
    %1000 = vmatprep.subr.mxu0 0.0
    %1001 = vmatpush1.msra.mxu0 0.0
    %1002 = vmatprep.subr.mxu0 0.0
    %1003 = vmatpush1.msra.mxu0 0.0
    %1004 = vmatprep.subr.mxu0 0.0
    %1005 = vmatpush1.msra.mxu0 0.0
    %1006 = vmatprep.subr.mxu0 0.0
    %1007 = vmatpush1.msra.mxu0 0.0
    %1008 = vmatprep.subr.mxu0 0.0
    %1009 = vmatpush1.msra.mxu0 0.0
    %1010 = vmatprep.subr.mxu0 0.0
    %1011 = vmatpush1.msra.mxu0 0.0
    %1012 = vmatprep.subr.mxu0 0.0
    %1013 = vmatpush1.msra.mxu0 0.0
    %1014 = vmatprep.subr.mxu0 0.0
    %1015 = vmatpush1.msra.mxu0 0.0
    %1016 = vmatprep.subr.mxu0 0.0
    %1017 = vmatpush1.msra.mxu0 0.0
    %1018 = vmatprep.subr.mxu0 0.0
    %1019 = vmatpush1.msra.mxu0 0.0
    %1020 = vmatprep.subr.mxu0 0.0
    %1021 = vmatpush1.msra.mxu0 0.0
    %1022 = vmatprep.subr.mxu0 0.0
    %1023 = vmatpush1.msra.mxu0 0.0
    %1024 = vmatprep.subr.mxu0 0.0
    %1025 = vmatpush1.msra.mxu0 0.0
    %1026 = vmatprep.subr.mxu0 0.0
    %1027 = vmatpush1.msra.mxu0 0.0
    %1028 = vmatprep.subr.mxu0 0.0
    %1029 = vmatpush1.msra.mxu0 0.0
    %1030 = vmatprep.subr.mxu0 0.0
    %1031 = vmatpush1.msra.mxu0 0.0
    %1032 = vmatprep.subr.mxu0 0.0
    %1033 = vmatpush1.msra.mxu0 0.0
    %1034 = vmatprep.subr.mxu0 0.0
    %1035 = vmatpush1.msra.mxu0 0.0
    %1036 = vmatprep.subr.mxu0 0.0
    %1037 = vmatpush1.msra.mxu0 0.0
    %1038 = vmatprep.subr.mxu0 0.0
    %1039 = vmatpush1.msra.mxu0 0.0
    %1040 = vmatprep.subr.mxu0 0.0
    %1041 = vmatpush1.msra.mxu0 0.0
    %1042 = vmatprep.mubr.f32.mxu0 0.0
    %1043 = vmatmul.mubr.f32.gmra.mrb[0].mxu0 %v970
    %v1044 = vpop.f32.mrb[0].mxu0
    %v1045 = vadd.f32 0.0, %v1044
    %v1046 = vpop.f32.mrb[0].mxu0
    %1047 = vmatprep.mubr.f32.mxu0 0.0
    %1048 = vmatmul.mubr.f32.gmra.mrb[0].mxu0 %v973
    %v1049 = vpop.f32.mrb[0].mxu0
    %v1050 = vadd.f32 0.0, %v1049
    %v1051 = vpop.f32.mrb[0].mxu0
    %1052 = vdwg.mxu0
    %v1053 = vmul.f32 %v1045, 0.25
    %v1054 = vmul.f32 %v1050, 0.25
    %v1055 = vsel %vm698, %v480, 0
    %v1057 = vsel %vm698, %v479, 0
    %1059 = vmatprep.subr.mxu0 0.0
    %1060 = vmatpush1.xpose.msra.mxu0 %v1055
    %1061 = vmatprep.subr.mxu0 0.0
    %1062 = vmatpush1.xpose.msra.mxu0 %v1057
    %1063 = vmatprep.subr.mxu0 0.0
    %1064 = vmatpush1.xpose.msra.mxu0 0.0
    %1065 = vmatprep.subr.mxu0 0.0
    %1066 = vmatpush1.xpose.msra.mxu0 0.0
    %1067 = vmatprep.subr.mxu0 0.0
    %1068 = vmatpush1.xpose.msra.mxu0 0.0
    %1069 = vmatprep.subr.mxu0 0.0
    %1070 = vmatpush1.xpose.msra.mxu0 0.0
    %1071 = vmatprep.subr.mxu0 0.0
    %1072 = vmatpush1.xpose.msra.mxu0 0.0
    %1073 = vmatprep.subr.mxu0 0.0
    %1074 = vmatpush1.xpose.msra.mxu0 0.0
    %1075 = vmatprep.subr.mxu0 0.0
    %1076 = vmatpush1.xpose.msra.mxu0 0.0
    %1077 = vmatprep.subr.mxu0 0.0
    %1078 = vmatpush1.xpose.msra.mxu0 0.0
    %1079 = vmatprep.subr.mxu0 0.0
    %1080 = vmatpush1.xpose.msra.mxu0 0.0
    %1081 = vmatprep.subr.mxu0 0.0
    %1082 = vmatpush1.xpose.msra.mxu0 0.0
    %1083 = vmatprep.subr.mxu0 0.0
    %1084 = vmatpush1.xpose.msra.mxu0 0.0
    %1085 = vmatprep.subr.mxu0 0.0
    %1086 = vmatpush1.xpose.msra.mxu0 0.0
    %1087 = vmatprep.subr.mxu0 0.0
    %1088 = vmatpush1.xpose.msra.mxu0 0.0
    %1089 = vmatprep.subr.mxu0 0.0
    %1090 = vmatpush1.xpose.msra.mxu0 0.0
    %1091 = vmatprep.subr.mxu0 0.0
    %1092 = vmatpush1.xpose.msra.mxu0 0.0
    %1093 = vmatprep.subr.mxu0 0.0
    %1094 = vmatpush1.xpose.msra.mxu0 0.0
    %1095 = vmatprep.subr.mxu0 0.0
    %1096 = vmatpush1.xpose.msra.mxu0 0.0
    %1097 = vmatprep.subr.mxu0 0.0
    %1098 = vmatpush1.xpose.msra.mxu0 0.0
    %1099 = vmatprep.subr.mxu0 0.0
    %1100 = vmatpush1.xpose.msra.mxu0 0.0
    %1101 = vmatprep.subr.mxu0 0.0
    %1102 = vmatpush1.xpose.msra.mxu0 0.0
    %1103 = vmatprep.subr.mxu0 0.0
    %1104 = vmatpush1.xpose.msra.mxu0 0.0
    %1105 = vmatprep.subr.mxu0 0.0
    %1106 = vmatpush1.xpose.msra.mxu0 0.0
    %1107 = vmatprep.subr.mxu0 0.0
    %1108 = vmatpush1.xpose.msra.mxu0 0.0
    %1109 = vmatprep.subr.mxu0 0.0
    %1110 = vmatpush1.xpose.msra.mxu0 0.0
    %1111 = vmatprep.subr.mxu0 0.0
    %1112 = vmatpush1.xpose.msra.mxu0 0.0
    %1113 = vmatprep.subr.mxu0 0.0
    %1114 = vmatpush1.xpose.msra.mxu0 0.0
    %1115 = vmatprep.subr.mxu0 0.0
    %1116 = vmatpush1.xpose.msra.mxu0 0.0
    %1117 = vmatprep.subr.mxu0 0.0
    %1118 = vmatpush1.xpose.msra.mxu0 0.0
    %1119 = vmatprep.subr.mxu0 0.0
    %1120 = vmatpush1.xpose.msra.mxu0 0.0
    %1121 = vmatprep.subr.mxu0 0.0
    %1122 = vmatpush1.xpose.msra.mxu0 0.0
    %1123 = vmatprep.mubr.f32.mxu0 0.0
    %1124 = vmatmul.mubr.f32.gmra.mrb[0].mxu0 %v1055
    %v1125 = vpop.f32.mrb[0].mxu0
    %v1126 = vadd.f32 0.0, %v1125
    %v1127 = vpop.f32.mrb[0].mxu0
    %1128 = vmatprep.mubr.f32.mxu0 0.0
    %1129 = vmatmul.mubr.f32.gmra.mrb[0].mxu0 %v1057
    %v1130 = vpop.f32.mrb[0].mxu0
    %v1131 = vadd.f32 0.0, %v1130
    %v1132 = vpop.f32.mrb[0].mxu0
    %1133 = vdwg.mxu0
    %v1135 = vsel %vm482, %v1126, 0
    %v1138 = vsel %vm482, %v1131, 0
    %1140 = vmatprep.subr.mxu0 0.0
    %1141 = vmatpush1.msra.mxu0 %v368
    %1142 = vmatprep.subr.mxu0 0.0
    %1143 = vmatpush1.msra.mxu0 %v786
    %1144 = vmatprep.subr.mxu0 0.0
    %1145 = vmatpush1.msra.mxu0 0.0
    %1146 = vmatprep.subr.mxu0 0.0
    %1147 = vmatpush1.msra.mxu0 0.0
    %1148 = vmatprep.subr.mxu0 0.0
    %1149 = vmatpush1.msra.mxu0 0.0
    %1150 = vmatprep.subr.mxu0 0.0
    %1151 = vmatpush1.msra.mxu0 0.0
    %1152 = vmatprep.subr.mxu0 0.0
    %1153 = vmatpush1.msra.mxu0 0.0
    %1154 = vmatprep.subr.mxu0 0.0
    %1155 = vmatpush1.msra.mxu0 0.0
    %1156 = vmatprep.subr.mxu0 0.0
    %1157 = vmatpush1.msra.mxu0 0.0
    %1158 = vmatprep.subr.mxu0 0.0
    %1159 = vmatpush1.msra.mxu0 0.0
    %1160 = vmatprep.subr.mxu0 0.0
    %1161 = vmatpush1.msra.mxu0 0.0
    %1162 = vmatprep.subr.mxu0 0.0
    %1163 = vmatpush1.msra.mxu0 0.0
    %1164 = vmatprep.subr.mxu0 0.0
    %1165 = vmatpush1.msra.mxu0 0.0
    %1166 = vmatprep.subr.mxu0 0.0
    %1167 = vmatpush1.msra.mxu0 0.0
    %1168 = vmatprep.subr.mxu0 0.0
    %1169 = vmatpush1.msra.mxu0 0.0
    %1170 = vmatprep.subr.mxu0 0.0
    %1171 = vmatpush1.msra.mxu0 0.0
    %1172 = vmatprep.subr.mxu0 0.0
    %1173 = vmatpush1.msra.mxu0 0.0
    %1174 = vmatprep.subr.mxu0 0.0
    %1175 = vmatpush1.msra.mxu0 0.0
    %1176 = vmatprep.subr.mxu0 0.0
    %1177 = vmatpush1.msra.mxu0 0.0
    %1178 = vmatprep.subr.mxu0 0.0
    %1179 = vmatpush1.msra.mxu0 0.0
    %1180 = vmatprep.subr.mxu0 0.0
    %1181 = vmatpush1.msra.mxu0 0.0
    %1182 = vmatprep.subr.mxu0 0.0
    %1183 = vmatpush1.msra.mxu0 0.0
    %1184 = vmatprep.subr.mxu0 0.0
    %1185 = vmatpush1.msra.mxu0 0.0
    %1186 = vmatprep.subr.mxu0 0.0
    %1187 = vmatpush1.msra.mxu0 0.0
    %1188 = vmatprep.subr.mxu0 0.0
    %1189 = vmatpush1.msra.mxu0 0.0
    %1190 = vmatprep.subr.mxu0 0.0
    %1191 = vmatpush1.msra.mxu0 0.0
    %1192 = vmatprep.subr.mxu0 0.0
    %1193 = vmatpush1.msra.mxu0 0.0
    %1194 = vmatprep.subr.mxu0 0.0
    %1195 = vmatpush1.msra.mxu0 0.0
    %1196 = vmatprep.subr.mxu0 0.0
    %1197 = vmatpush1.msra.mxu0 0.0
    %1198 = vmatprep.subr.mxu0 0.0
    %1199 = vmatpush1.msra.mxu0 0.0
    %1200 = vmatprep.subr.mxu0 0.0
    %1201 = vmatpush1.msra.mxu0 0.0
    %1202 = vmatprep.subr.mxu0 0.0
    %1203 = vmatpush1.msra.mxu0 0.0
    %1204 = vmatprep.mubr.f32.mxu0 0.0
    %1205 = vmatmul.mubr.f32.gmra.mrb[0].mxu0 %v1135
    %v1206 = vpop.f32.mrb[0].mxu0
    %v1207 = vadd.f32 0.0, %v1206
    %v1208 = vpop.f32.mrb[0].mxu0
    %1209 = vmatprep.mubr.f32.mxu0 0.0
    %1210 = vmatmul.mubr.f32.gmra.mrb[0].mxu0 %v1138
    %v1211 = vpop.f32.mrb[0].mxu0
    %v1212 = vadd.f32 0.0, %v1211
    %v1213 = vpop.f32.mrb[0].mxu0
    %1214 = vdwg.mxu0
    %s1215 = scalar_lea.vmem %s2, 16
    %v1216 = vld [vmem:[%s1215] sm:$0xff]
    %v1217 = vld [vmem:[%s1215 + $0x8] sm:$0x1]
    %v1218 = vmul.f32 %v1207, %v1216
    %v1219 = vmul.f32 %v1212, %v1217
    %v1220 = vsel %vm867, %v1218, -inf
    %1221 = vmax.xlane.f32.xlu0 %v1220
    %v1222 = vpop.xlane.xlu0 %1221
    %v1223 = vsel %vm871, %v1219, -inf
    %1224 = vmax.xlane.f32.xlu0 %v1223
    %v1225 = vpop.xlane.xlu0 %1224
    %v1226 = vsub.f32 %v1218, %v1222
    %v1227 = vsub.f32 %v1219, %v1225
    %v1228 = vmul.f32 %v1226, 1.442695
    %v1229 = vpow.pop %v1228
    %v1230 = vmul.f32 %v1227, 1.442695
    %v1231 = vpow.pop %v1230
    %v1233 = vsel %vm867, %v1229, 0
    %v1236 = vsel %vm867, %v1231, 0
    %1238 = vmatprep.subr.mxu0 0.0
    %1239 = vmatpush1.msra.mxu0 %v395
    %1240 = vmatprep.subr.mxu0 0.0
    %1241 = vmatpush1.msra.mxu0 %v396
    %1242 = vmatprep.subr.mxu0 0.0
    %1243 = vmatpush1.msra.mxu0 %v397
    %1244 = vmatprep.subr.mxu0 0.0
    %1245 = vmatpush1.msra.mxu0 %v398
    %1246 = vmatprep.subr.mxu0 0.0
    %1247 = vmatpush1.msra.mxu0 %v888
    %1248 = vmatprep.subr.mxu0 0.0
    %1249 = vmatpush1.msra.mxu0 0.0
    %1250 = vmatprep.subr.mxu0 0.0
    %1251 = vmatpush1.msra.mxu0 0.0
    %1252 = vmatprep.subr.mxu0 0.0
    %1253 = vmatpush1.msra.mxu0 0.0
    %1254 = vmatprep.subr.mxu0 0.0
    %1255 = vmatpush1.msra.mxu0 0.0
    %1256 = vmatprep.subr.mxu0 0.0
    %1257 = vmatpush1.msra.mxu0 0.0
    %1258 = vmatprep.subr.mxu0 0.0
    %1259 = vmatpush1.msra.mxu0 0.0
    %1260 = vmatprep.subr.mxu0 0.0
    %1261 = vmatpush1.msra.mxu0 0.0
    %1262 = vmatprep.subr.mxu0 0.0
    %1263 = vmatpush1.msra.mxu0 0.0
    %1264 = vmatprep.subr.mxu0 0.0
    %1265 = vmatpush1.msra.mxu0 0.0
    %1266 = vmatprep.subr.mxu0 0.0
    %1267 = vmatpush1.msra.mxu0 0.0
    %1268 = vmatprep.subr.mxu0 0.0
    %1269 = vmatpush1.msra.mxu0 0.0
    %1270 = vmatprep.subr.mxu0 0.0
    %1271 = vmatpush1.msra.mxu0 0.0
    %1272 = vmatprep.subr.mxu0 0.0
    %1273 = vmatpush1.msra.mxu0 0.0
    %1274 = vmatprep.subr.mxu0 0.0
    %1275 = vmatpush1.msra.mxu0 0.0
    %1276 = vmatprep.subr.mxu0 0.0
    %1277 = vmatpush1.msra.mxu0 0.0
    %1278 = vmatprep.subr.mxu0 0.0
    %1279 = vmatpush1.msra.mxu0 0.0
    %1280 = vmatprep.subr.mxu0 0.0
    %1281 = vmatpush1.msra.mxu0 0.0
    %1282 = vmatprep.subr.mxu0 0.0
    %1283 = vmatpush1.msra.mxu0 0.0
    %1284 = vmatprep.subr.mxu0 0.0
    %1285 = vmatpush1.msra.mxu0 0.0
    %1286 = vmatprep.subr.mxu0 0.0
    %1287 = vmatpush1.msra.mxu0 0.0
    %1288 = vmatprep.subr.mxu0 0.0
    %1289 = vmatpush1.msra.mxu0 0.0
    %1290 = vmatprep.subr.mxu0 0.0
    %1291 = vmatpush1.msra.mxu0 0.0
    %1292 = vmatprep.subr.mxu0 0.0
    %1293 = vmatpush1.msra.mxu0 0.0
    %1294 = vmatprep.subr.mxu0 0.0
    %1295 = vmatpush1.msra.mxu0 0.0
    %1296 = vmatprep.subr.mxu0 0.0
    %1297 = vmatpush1.msra.mxu0 0.0
    %1298 = vmatprep.subr.mxu0 0.0
    %1299 = vmatpush1.msra.mxu0 0.0
    %1300 = vmatprep.subr.mxu0 0.0
    %1301 = vmatpush1.msra.mxu0 0.0
    %1302 = vmatprep.mubr.f32.mxu0 0.0
    %1303 = vmatmul.mubr.f32.gmra.mrb[0].mxu0 %v1233
    %v1304 = vpop.f32.mrb[0].mxu0
    %v1305 = vadd.f32 0.0, %v1304
    %v1306 = vpop.f32.mrb[0].mxu0
    %1307 = vmatprep.mubr.f32.mxu0 0.0
    %1308 = vmatmul.mubr.f32.gmra.mrb[0].mxu0 %v1236
    %v1309 = vpop.f32.mrb[0].mxu0
    %v1310 = vadd.f32 0.0, %v1309
    %v1311 = vpop.f32.mrb[0].mxu0
    %1312 = vdwg.mxu0
    %v1313 = vrcp.pop %v1305
    %v1314 = vmul.f32 %v1229, %v1313
    %v1315 = vrcp.pop %v1310
    %v1316 = vmul.f32 %v1231, %v1315
    %v1318 = vsel %vm867, %v1314, 0
    %v1321 = vsel %vm867, %v1316, 0
    %1323 = vmatprep.subr.mxu0 0.0
    %1324 = vmatpush1.msra.mxu0 %v675
    %1325 = vmatprep.subr.mxu0 0.0
    %1326 = vmatpush1.msra.mxu0 %v680
    %1327 = vmatprep.subr.mxu0 0.0
    %1328 = vmatpush1.msra.mxu0 %v685
    %1329 = vmatprep.subr.mxu0 0.0
    %1330 = vmatpush1.msra.mxu0 %v690
    %1331 = vmatprep.subr.mxu0 0.0
    %1332 = vmatpush1.msra.mxu0 %v976
    %1333 = vmatprep.subr.mxu0 0.0
    %1334 = vmatpush1.msra.mxu0 0.0
    %1335 = vmatprep.subr.mxu0 0.0
    %1336 = vmatpush1.msra.mxu0 0.0
    %1337 = vmatprep.subr.mxu0 0.0
    %1338 = vmatpush1.msra.mxu0 0.0
    %1339 = vmatprep.subr.mxu0 0.0
    %1340 = vmatpush1.msra.mxu0 0.0
    %1341 = vmatprep.subr.mxu0 0.0
    %1342 = vmatpush1.msra.mxu0 0.0
    %1343 = vmatprep.subr.mxu0 0.0
    %1344 = vmatpush1.msra.mxu0 0.0
    %1345 = vmatprep.subr.mxu0 0.0
    %1346 = vmatpush1.msra.mxu0 0.0
    %1347 = vmatprep.subr.mxu0 0.0
    %1348 = vmatpush1.msra.mxu0 0.0
    %1349 = vmatprep.subr.mxu0 0.0
    %1350 = vmatpush1.msra.mxu0 0.0
    %1351 = vmatprep.subr.mxu0 0.0
    %1352 = vmatpush1.msra.mxu0 0.0
    %1353 = vmatprep.subr.mxu0 0.0
    %1354 = vmatpush1.msra.mxu0 0.0
    %1355 = vmatprep.subr.mxu0 0.0
    %1356 = vmatpush1.msra.mxu0 0.0
    %1357 = vmatprep.subr.mxu0 0.0
    %1358 = vmatpush1.msra.mxu0 0.0
    %1359 = vmatprep.subr.mxu0 0.0
    %1360 = vmatpush1.msra.mxu0 0.0
    %1361 = vmatprep.subr.mxu0 0.0
    %1362 = vmatpush1.msra.mxu0 0.0
    %1363 = vmatprep.subr.mxu0 0.0
    %1364 = vmatpush1.msra.mxu0 0.0
    %1365 = vmatprep.subr.mxu0 0.0
    %1366 = vmatpush1.msra.mxu0 0.0
    %1367 = vmatprep.subr.mxu0 0.0
    %1368 = vmatpush1.msra.mxu0 0.0
    %1369 = vmatprep.subr.mxu0 0.0
    %1370 = vmatpush1.msra.mxu0 0.0
    %1371 = vmatprep.subr.mxu0 0.0
    %1372 = vmatpush1.msra.mxu0 0.0
    %1373 = vmatprep.subr.mxu0 0.0
    %1374 = vmatpush1.msra.mxu0 0.0
    %1375 = vmatprep.subr.mxu0 0.0
    %1376 = vmatpush1.msra.mxu0 0.0
    %1377 = vmatprep.subr.mxu0 0.0
    %1378 = vmatpush1.msra.mxu0 0.0
    %1379 = vmatprep.subr.mxu0 0.0
    %1380 = vmatpush1.msra.mxu0 0.0
    %1381 = vmatprep.subr.mxu0 0.0
    %1382 = vmatpush1.msra.mxu0 0.0
    %1383 = vmatprep.subr.mxu0 0.0
    %1384 = vmatpush1.msra.mxu0 0.0
    %1385 = vmatprep.subr.mxu0 0.0
    %1386 = vmatpush1.msra.mxu0 0.0
    %1387 = vmatprep.mubr.f32.mxu0 0.0
    %1388 = vmatmul.mubr.f32.gmra.mrb[0].mxu0 %v1318
    %v1389 = vpop.f32.mrb[0].mxu0
    %v1390 = vadd.f32 0.0, %v1389
    %v1391 = vpop.f32.mrb[0].mxu0
    %1392 = vmatprep.mubr.f32.mxu0 0.0
    %1393 = vmatmul.mubr.f32.gmra.mrb[0].mxu0 %v1321
    %v1394 = vpop.f32.mrb[0].mxu0
    %v1395 = vadd.f32 0.0, %v1394
    %v1396 = vpop.f32.mrb[0].mxu0
    %1397 = vdwg.mxu0
    %v1398 = vmul.f32 %v1390, 0.25
    %v1399 = vmul.f32 %v1395, 0.25
    %v1401 = vsel %vm498, %v1399, 0
    %1403 = vmatprep.subr.mxu0 0.0
    %1404 = vmatpush1.msra.mxu0 %v1398
    %1405 = vmatprep.subr.mxu0 0.0
    %1406 = vmatpush1.msra.mxu0 %v1401
    %1407 = vmatprep.subr.mxu0 0.0
    %1408 = vmatpush1.msra.mxu0 0.0
    %1409 = vmatprep.subr.mxu0 0.0
    %1410 = vmatpush1.msra.mxu0 0.0
    %1411 = vmatprep.subr.mxu0 0.0
    %1412 = vmatpush1.msra.mxu0 0.0
    %1413 = vmatprep.subr.mxu0 0.0
    %1414 = vmatpush1.msra.mxu0 0.0
    %1415 = vmatprep.subr.mxu0 0.0
    %1416 = vmatpush1.msra.mxu0 0.0
    %1417 = vmatprep.subr.mxu0 0.0
    %1418 = vmatpush1.msra.mxu0 0.0
    %1419 = vmatprep.subr.mxu0 0.0
    %1420 = vmatpush1.msra.mxu0 0.0
    %1421 = vmatprep.subr.mxu0 0.0
    %1422 = vmatpush1.msra.mxu0 0.0
    %1423 = vmatprep.subr.mxu0 0.0
    %1424 = vmatpush1.msra.mxu0 0.0
    %1425 = vmatprep.subr.mxu0 0.0
    %1426 = vmatpush1.msra.mxu0 0.0
    %1427 = vmatprep.subr.mxu0 0.0
    %1428 = vmatpush1.msra.mxu0 0.0
    %1429 = vmatprep.subr.mxu0 0.0
    %1430 = vmatpush1.msra.mxu0 0.0
    %1431 = vmatprep.subr.mxu0 0.0
    %1432 = vmatpush1.msra.mxu0 0.0
    %1433 = vmatprep.subr.mxu0 0.0
    %1434 = vmatpush1.msra.mxu0 0.0
    %1435 = vmatprep.subr.mxu0 0.0
    %1436 = vmatpush1.msra.mxu0 0.0
    %1437 = vmatprep.subr.mxu0 0.0
    %1438 = vmatpush1.msra.mxu0 0.0
    %1439 = vmatprep.subr.mxu0 0.0
    %1440 = vmatpush1.msra.mxu0 0.0
    %1441 = vmatprep.subr.mxu0 0.0
    %1442 = vmatpush1.msra.mxu0 0.0
    %1443 = vmatprep.subr.mxu0 0.0
    %1444 = vmatpush1.msra.mxu0 0.0
    %1445 = vmatprep.subr.mxu0 0.0
    %1446 = vmatpush1.msra.mxu0 0.0
    %1447 = vmatprep.subr.mxu0 0.0
    %1448 = vmatpush1.msra.mxu0 0.0
    %1449 = vmatprep.subr.mxu0 0.0
    %1450 = vmatpush1.msra.mxu0 0.0
    %1451 = vmatprep.subr.mxu0 0.0
    %1452 = vmatpush1.msra.mxu0 0.0
    %1453 = vmatprep.subr.mxu0 0.0
    %1454 = vmatpush1.msra.mxu0 0.0
    %1455 = vmatprep.subr.mxu0 0.0
    %1456 = vmatpush1.msra.mxu0 0.0
    %1457 = vmatprep.subr.mxu0 0.0
    %1458 = vmatpush1.msra.mxu0 0.0
    %1459 = vmatprep.subr.mxu0 0.0
    %1460 = vmatpush1.msra.mxu0 0.0
    %1461 = vmatprep.subr.mxu0 0.0
    %1462 = vmatpush1.msra.mxu0 0.0
    %1463 = vmatprep.subr.mxu0 0.0
    %1464 = vmatpush1.msra.mxu0 0.0
    %1465 = vmatprep.subr.mxu0 0.0
    %1466 = vmatpush1.msra.mxu0 0.0
    %1467 = vmatprep.mubr.f32.mxu0 0.0
    %1468 = vmatmul.mubr.f32.gmra.mrb[0].mxu0 %v484
    %v1469 = vpop.f32.mrb[0].mxu0
    %v1470 = vadd.f32 0.0, %v1469
    %v1471 = vpop.f32.mrb[0].mxu0
    %1472 = vmatprep.mubr.f32.mxu0 0.0
    %1473 = vmatmul.mubr.f32.gmra.mrb[0].mxu0 %v487
    %v1474 = vpop.f32.mrb[0].mxu0
    %v1475 = vadd.f32 0.0, %v1474
    %v1476 = vpop.f32.mrb[0].mxu0
    %1477 = vmatprep.mubr.f32.mxu0 0.0
    %1478 = vmatmul.mubr.f32.gmra.mrb[0].mxu0 %v490
    %v1479 = vpop.f32.mrb[0].mxu0
    %v1480 = vadd.f32 0.0, %v1479
    %v1481 = vpop.f32.mrb[0].mxu0
    %1482 = vmatprep.mubr.f32.mxu0 0.0
    %1483 = vmatmul.mubr.f32.gmra.mrb[0].mxu0 %v493
    %v1484 = vpop.f32.mrb[0].mxu0
    %v1485 = vadd.f32 0.0, %v1484
    %v1486 = vpop.f32.mrb[0].mxu0
    %1487 = vmatprep.mubr.f32.mxu0 0.0
    %1488 = vmatmul.mubr.f32.gmra.mrb[0].mxu0 %v496
    %v1489 = vpop.f32.mrb[0].mxu0
    %v1490 = vadd.f32 0.0, %v1489
    %v1491 = vpop.f32.mrb[0].mxu0
    %1492 = vdwg.mxu0
    %v1494 = vsel %vm498, %v1054, 0
    %1496 = vmatprep.subr.mxu0 0.0
    %1497 = vmatpush1.msra.mxu0 %v1053
    %1498 = vmatprep.subr.mxu0 0.0
    %1499 = vmatpush1.msra.mxu0 %v1494
    %1500 = vmatprep.subr.mxu0 0.0
    %1501 = vmatpush1.msra.mxu0 0.0
    %1502 = vmatprep.subr.mxu0 0.0
    %1503 = vmatpush1.msra.mxu0 0.0
    %1504 = vmatprep.subr.mxu0 0.0
    %1505 = vmatpush1.msra.mxu0 0.0
    %1506 = vmatprep.subr.mxu0 0.0
    %1507 = vmatpush1.msra.mxu0 0.0
    %1508 = vmatprep.subr.mxu0 0.0
    %1509 = vmatpush1.msra.mxu0 0.0
    %1510 = vmatprep.subr.mxu0 0.0
    %1511 = vmatpush1.msra.mxu0 0.0
    %1512 = vmatprep.subr.mxu0 0.0
    %1513 = vmatpush1.msra.mxu0 0.0
    %1514 = vmatprep.subr.mxu0 0.0
    %1515 = vmatpush1.msra.mxu0 0.0
    %1516 = vmatprep.subr.mxu0 0.0
    %1517 = vmatpush1.msra.mxu0 0.0
    %1518 = vmatprep.subr.mxu0 0.0
    %1519 = vmatpush1.msra.mxu0 0.0
    %1520 = vmatprep.subr.mxu0 0.0
    %1521 = vmatpush1.msra.mxu0 0.0
    %1522 = vmatprep.subr.mxu0 0.0
    %1523 = vmatpush1.msra.mxu0 0.0
    %1524 = vmatprep.subr.mxu0 0.0
    %1525 = vmatpush1.msra.mxu0 0.0
    %1526 = vmatprep.subr.mxu0 0.0
    %1527 = vmatpush1.msra.mxu0 0.0
    %1528 = vmatprep.subr.mxu0 0.0
    %1529 = vmatpush1.msra.mxu0 0.0
    %1530 = vmatprep.subr.mxu0 0.0
    %1531 = vmatpush1.msra.mxu0 0.0
    %1532 = vmatprep.subr.mxu0 0.0
    %1533 = vmatpush1.msra.mxu0 0.0
    %1534 = vmatprep.subr.mxu0 0.0
    %1535 = vmatpush1.msra.mxu0 0.0
    %1536 = vmatprep.subr.mxu0 0.0
    %1537 = vmatpush1.msra.mxu0 0.0
    %1538 = vmatprep.subr.mxu0 0.0
    %1539 = vmatpush1.msra.mxu0 0.0
    %1540 = vmatprep.subr.mxu0 0.0
    %1541 = vmatpush1.msra.mxu0 0.0
    %1542 = vmatprep.subr.mxu0 0.0
    %1543 = vmatpush1.msra.mxu0 0.0
    %1544 = vmatprep.subr.mxu0 0.0
    %1545 = vmatpush1.msra.mxu0 0.0
    %1546 = vmatprep.subr.mxu0 0.0
    %1547 = vmatpush1.msra.mxu0 0.0
    %1548 = vmatprep.subr.mxu0 0.0
    %1549 = vmatpush1.msra.mxu0 0.0
    %1550 = vmatprep.subr.mxu0 0.0
    %1551 = vmatpush1.msra.mxu0 0.0
    %1552 = vmatprep.subr.mxu0 0.0
    %1553 = vmatpush1.msra.mxu0 0.0
    %1554 = vmatprep.subr.mxu0 0.0
    %1555 = vmatpush1.msra.mxu0 0.0
    %1556 = vmatprep.subr.mxu0 0.0
    %1557 = vmatpush1.msra.mxu0 0.0
    %1558 = vmatprep.subr.mxu0 0.0
    %1559 = vmatpush1.msra.mxu0 0.0
    %1560 = vmatprep.mubr.f32.mxu0 0.0
    %1561 = vmatmul.mubr.f32.gmra.mrb[0].mxu0 %v592
    %v1562 = vpop.f32.mrb[0].mxu0
    %v1563 = vadd.f32 %v1470, %v1562
    %v1564 = vpop.f32.mrb[0].mxu0
    %1565 = vmatprep.mubr.f32.mxu0 0.0
    %1566 = vmatmul.mubr.f32.gmra.mrb[0].mxu0 %v595
    %v1567 = vpop.f32.mrb[0].mxu0
    %v1568 = vadd.f32 %v1475, %v1567
    %v1569 = vpop.f32.mrb[0].mxu0
    %1570 = vmatprep.mubr.f32.mxu0 0.0
    %1571 = vmatmul.mubr.f32.gmra.mrb[0].mxu0 %v598
    %v1572 = vpop.f32.mrb[0].mxu0
    %v1573 = vadd.f32 %v1480, %v1572
    %v1574 = vpop.f32.mrb[0].mxu0
    %1575 = vmatprep.mubr.f32.mxu0 0.0
    %1576 = vmatmul.mubr.f32.gmra.mrb[0].mxu0 %v601
    %v1577 = vpop.f32.mrb[0].mxu0
    %v1578 = vadd.f32 %v1485, %v1577
    %v1579 = vpop.f32.mrb[0].mxu0
    %1580 = vmatprep.mubr.f32.mxu0 0.0
    %1581 = vmatmul.mubr.f32.gmra.mrb[0].mxu0 %v604
    %v1582 = vpop.f32.mrb[0].mxu0
    %v1583 = vadd.f32 %v1490, %v1582
    %v1584 = vpop.f32.mrb[0].mxu0
    %1585 = vdwg.mxu0
    %v1587 = vsel %vm698, %v1053, 0
    %v1589 = vsel %vm698, %v1054, 0
    %1591 = vmatprep.subr.mxu0 0.0
    %1592 = vmatpush1.xpose.msra.mxu0 %v1587
    %1593 = vmatprep.subr.mxu0 0.0
    %1594 = vmatpush1.xpose.msra.mxu0 %v1589
    %1595 = vmatprep.subr.mxu0 0.0
    %1596 = vmatpush1.xpose.msra.mxu0 0.0
    %1597 = vmatprep.subr.mxu0 0.0
    %1598 = vmatpush1.xpose.msra.mxu0 0.0
    %1599 = vmatprep.subr.mxu0 0.0
    %1600 = vmatpush1.xpose.msra.mxu0 0.0
    %1601 = vmatprep.subr.mxu0 0.0
    %1602 = vmatpush1.xpose.msra.mxu0 0.0
    %1603 = vmatprep.subr.mxu0 0.0
    %1604 = vmatpush1.xpose.msra.mxu0 0.0
    %1605 = vmatprep.subr.mxu0 0.0
    %1606 = vmatpush1.xpose.msra.mxu0 0.0
    %1607 = vmatprep.subr.mxu0 0.0
    %1608 = vmatpush1.xpose.msra.mxu0 0.0
    %1609 = vmatprep.subr.mxu0 0.0
    %1610 = vmatpush1.xpose.msra.mxu0 0.0
    %1611 = vmatprep.subr.mxu0 0.0
    %1612 = vmatpush1.xpose.msra.mxu0 0.0
    %1613 = vmatprep.subr.mxu0 0.0
    %1614 = vmatpush1.xpose.msra.mxu0 0.0
    %1615 = vmatprep.subr.mxu0 0.0
    %1616 = vmatpush1.xpose.msra.mxu0 0.0
    %1617 = vmatprep.subr.mxu0 0.0
    %1618 = vmatpush1.xpose.msra.mxu0 0.0
    %1619 = vmatprep.subr.mxu0 0.0
    %1620 = vmatpush1.xpose.msra.mxu0 0.0
    %1621 = vmatprep.subr.mxu0 0.0
    %1622 = vmatpush1.xpose.msra.mxu0 0.0
    %1623 = vmatprep.subr.mxu0 0.0
    %1624 = vmatpush1.xpose.msra.mxu0 0.0
    %1625 = vmatprep.subr.mxu0 0.0
    %1626 = vmatpush1.xpose.msra.mxu0 0.0
    %1627 = vmatprep.subr.mxu0 0.0
    %1628 = vmatpush1.xpose.msra.mxu0 0.0
    %1629 = vmatprep.subr.mxu0 0.0
    %1630 = vmatpush1.xpose.msra.mxu0 0.0
    %1631 = vmatprep.subr.mxu0 0.0
    %1632 = vmatpush1.xpose.msra.mxu0 0.0
    %1633 = vmatprep.subr.mxu0 0.0
    %1634 = vmatpush1.xpose.msra.mxu0 0.0
    %1635 = vmatprep.subr.mxu0 0.0
    %1636 = vmatpush1.xpose.msra.mxu0 0.0
    %1637 = vmatprep.subr.mxu0 0.0
    %1638 = vmatpush1.xpose.msra.mxu0 0.0
    %1639 = vmatprep.subr.mxu0 0.0
    %1640 = vmatpush1.xpose.msra.mxu0 0.0
    %1641 = vmatprep.subr.mxu0 0.0
    %1642 = vmatpush1.xpose.msra.mxu0 0.0
    %1643 = vmatprep.subr.mxu0 0.0
    %1644 = vmatpush1.xpose.msra.mxu0 0.0
    %1645 = vmatprep.subr.mxu0 0.0
    %1646 = vmatpush1.xpose.msra.mxu0 0.0
    %1647 = vmatprep.subr.mxu0 0.0
    %1648 = vmatpush1.xpose.msra.mxu0 0.0
    %1649 = vmatprep.subr.mxu0 0.0
    %1650 = vmatpush1.xpose.msra.mxu0 0.0
    %1651 = vmatprep.subr.mxu0 0.0
    %1652 = vmatpush1.xpose.msra.mxu0 0.0
    %1653 = vmatprep.subr.mxu0 0.0
    %1654 = vmatpush1.xpose.msra.mxu0 0.0
    %1655 = vmatprep.mubr.f32.mxu0 0.0
    %1656 = vmatmul.mubr.f32.gmra.mrb[0].mxu0 %v1587
    %v1657 = vpop.f32.mrb[0].mxu0
    %v1658 = vadd.f32 0.0, %v1657
    %v1659 = vpop.f32.mrb[0].mxu0
    %1660 = vmatprep.mubr.f32.mxu0 0.0
    %1661 = vmatmul.mubr.f32.gmra.mrb[0].mxu0 %v1589
    %v1662 = vpop.f32.mrb[0].mxu0
    %v1663 = vadd.f32 0.0, %v1662
    %v1664 = vpop.f32.mrb[0].mxu0
    %1665 = vdwg.mxu0
    %v1667 = vsel %vm482, %v1658, 0
    %v1670 = vsel %vm482, %v1663, 0
    %1672 = vmatprep.subr.mxu0 0.0
    %1673 = vmatpush1.msra.mxu0 %v368
    %1674 = vmatprep.subr.mxu0 0.0
    %1675 = vmatpush1.msra.mxu0 %v786
    %1676 = vmatprep.subr.mxu0 0.0
    %1677 = vmatpush1.msra.mxu0 0.0
    %1678 = vmatprep.subr.mxu0 0.0
    %1679 = vmatpush1.msra.mxu0 0.0
    %1680 = vmatprep.subr.mxu0 0.0
    %1681 = vmatpush1.msra.mxu0 0.0
    %1682 = vmatprep.subr.mxu0 0.0
    %1683 = vmatpush1.msra.mxu0 0.0
    %1684 = vmatprep.subr.mxu0 0.0
    %1685 = vmatpush1.msra.mxu0 0.0
    %1686 = vmatprep.subr.mxu0 0.0
    %1687 = vmatpush1.msra.mxu0 0.0
    %1688 = vmatprep.subr.mxu0 0.0
    %1689 = vmatpush1.msra.mxu0 0.0
    %1690 = vmatprep.subr.mxu0 0.0
    %1691 = vmatpush1.msra.mxu0 0.0
    %1692 = vmatprep.subr.mxu0 0.0
    %1693 = vmatpush1.msra.mxu0 0.0
    %1694 = vmatprep.subr.mxu0 0.0
    %1695 = vmatpush1.msra.mxu0 0.0
    %1696 = vmatprep.subr.mxu0 0.0
    %1697 = vmatpush1.msra.mxu0 0.0
    %1698 = vmatprep.subr.mxu0 0.0
    %1699 = vmatpush1.msra.mxu0 0.0
    %1700 = vmatprep.subr.mxu0 0.0
    %1701 = vmatpush1.msra.mxu0 0.0
    %1702 = vmatprep.subr.mxu0 0.0
    %1703 = vmatpush1.msra.mxu0 0.0
    %1704 = vmatprep.subr.mxu0 0.0
    %1705 = vmatpush1.msra.mxu0 0.0
    %1706 = vmatprep.subr.mxu0 0.0
    %1707 = vmatpush1.msra.mxu0 0.0
    %1708 = vmatprep.subr.mxu0 0.0
    %1709 = vmatpush1.msra.mxu0 0.0
    %1710 = vmatprep.subr.mxu0 0.0
    %1711 = vmatpush1.msra.mxu0 0.0
    %1712 = vmatprep.subr.mxu0 0.0
    %1713 = vmatpush1.msra.mxu0 0.0
    %1714 = vmatprep.subr.mxu0 0.0
    %1715 = vmatpush1.msra.mxu0 0.0
    %1716 = vmatprep.subr.mxu0 0.0
    %1717 = vmatpush1.msra.mxu0 0.0
    %1718 = vmatprep.subr.mxu0 0.0
    %1719 = vmatpush1.msra.mxu0 0.0
    %1720 = vmatprep.subr.mxu0 0.0
    %1721 = vmatpush1.msra.mxu0 0.0
    %1722 = vmatprep.subr.mxu0 0.0
    %1723 = vmatpush1.msra.mxu0 0.0
    %1724 = vmatprep.subr.mxu0 0.0
    %1725 = vmatpush1.msra.mxu0 0.0
    %1726 = vmatprep.subr.mxu0 0.0
    %1727 = vmatpush1.msra.mxu0 0.0
    %1728 = vmatprep.subr.mxu0 0.0
    %1729 = vmatpush1.msra.mxu0 0.0
    %1730 = vmatprep.subr.mxu0 0.0
    %1731 = vmatpush1.msra.mxu0 0.0
    %1732 = vmatprep.subr.mxu0 0.0
    %1733 = vmatpush1.msra.mxu0 0.0
    %1734 = vmatprep.subr.mxu0 0.0
    %1735 = vmatpush1.msra.mxu0 0.0
    %1736 = vmatprep.mubr.f32.mxu0 0.0
    %1737 = vmatmul.mubr.f32.gmra.mrb[0].mxu0 %v1667
    %v1738 = vpop.f32.mrb[0].mxu0
    %v1739 = vadd.f32 0.0, %v1738
    %v1740 = vpop.f32.mrb[0].mxu0
    %1741 = vmatprep.mubr.f32.mxu0 0.0
    %1742 = vmatmul.mubr.f32.gmra.mrb[0].mxu0 %v1670
    %v1743 = vpop.f32.mrb[0].mxu0
    %v1744 = vadd.f32 0.0, %v1743
    %v1745 = vpop.f32.mrb[0].mxu0
    %1746 = vdwg.mxu0
    %s1747 = scalar_lea.vmem %s2, 32
    %v1748 = vld [vmem:[%s1747] sm:$0xff]
    %v1749 = vld [vmem:[%s1747 + $0x8] sm:$0x1]
    %v1750 = vmul.f32 %v1739, %v1748
    %v1751 = vmul.f32 %v1744, %v1749
    %v1752 = vsel %vm867, %v1750, -inf
    %1753 = vmax.xlane.f32.xlu0 %v1752
    %v1754 = vpop.xlane.xlu0 %1753
    %v1755 = vsel %vm871, %v1751, -inf
    %1756 = vmax.xlane.f32.xlu0 %v1755
    %v1757 = vpop.xlane.xlu0 %1756
    %v1758 = vsub.f32 %v1750, %v1754
    %v1759 = vsub.f32 %v1751, %v1757
    %v1760 = vmul.f32 %v1758, 1.442695
    %v1761 = vpow.pop %v1760
    %v1762 = vmul.f32 %v1759, 1.442695
    %v1763 = vpow.pop %v1762
    %v1765 = vsel %vm867, %v1761, 0
    %v1768 = vsel %vm867, %v1763, 0
    %1770 = vmatprep.subr.mxu0 0.0
    %1771 = vmatpush1.msra.mxu0 %v395
    %1772 = vmatprep.subr.mxu0 0.0
    %1773 = vmatpush1.msra.mxu0 %v396
    %1774 = vmatprep.subr.mxu0 0.0
    %1775 = vmatpush1.msra.mxu0 %v397
    %1776 = vmatprep.subr.mxu0 0.0
    %1777 = vmatpush1.msra.mxu0 %v398
    %1778 = vmatprep.subr.mxu0 0.0
    %1779 = vmatpush1.msra.mxu0 %v888
    %1780 = vmatprep.subr.mxu0 0.0
    %1781 = vmatpush1.msra.mxu0 0.0
    %1782 = vmatprep.subr.mxu0 0.0
    %1783 = vmatpush1.msra.mxu0 0.0
    %1784 = vmatprep.subr.mxu0 0.0
    %1785 = vmatpush1.msra.mxu0 0.0
    %1786 = vmatprep.subr.mxu0 0.0
    %1787 = vmatpush1.msra.mxu0 0.0
    %1788 = vmatprep.subr.mxu0 0.0
    %1789 = vmatpush1.msra.mxu0 0.0
    %1790 = vmatprep.subr.mxu0 0.0
    %1791 = vmatpush1.msra.mxu0 0.0
    %1792 = vmatprep.subr.mxu0 0.0
    %1793 = vmatpush1.msra.mxu0 0.0
    %1794 = vmatprep.subr.mxu0 0.0
    %1795 = vmatpush1.msra.mxu0 0.0
    %1796 = vmatprep.subr.mxu0 0.0
    %1797 = vmatpush1.msra.mxu0 0.0
    %1798 = vmatprep.subr.mxu0 0.0
    %1799 = vmatpush1.msra.mxu0 0.0
    %1800 = vmatprep.subr.mxu0 0.0
    %1801 = vmatpush1.msra.mxu0 0.0
    %1802 = vmatprep.subr.mxu0 0.0
    %1803 = vmatpush1.msra.mxu0 0.0
    %1804 = vmatprep.subr.mxu0 0.0
    %1805 = vmatpush1.msra.mxu0 0.0
    %1806 = vmatprep.subr.mxu0 0.0
    %1807 = vmatpush1.msra.mxu0 0.0
    %1808 = vmatprep.subr.mxu0 0.0
    %1809 = vmatpush1.msra.mxu0 0.0
    %1810 = vmatprep.subr.mxu0 0.0
    %1811 = vmatpush1.msra.mxu0 0.0
    %1812 = vmatprep.subr.mxu0 0.0
    %1813 = vmatpush1.msra.mxu0 0.0
    %1814 = vmatprep.subr.mxu0 0.0
    %1815 = vmatpush1.msra.mxu0 0.0
    %1816 = vmatprep.subr.mxu0 0.0
    %1817 = vmatpush1.msra.mxu0 0.0
    %1818 = vmatprep.subr.mxu0 0.0
    %1819 = vmatpush1.msra.mxu0 0.0
    %1820 = vmatprep.subr.mxu0 0.0
    %1821 = vmatpush1.msra.mxu0 0.0
    %1822 = vmatprep.subr.mxu0 0.0
    %1823 = vmatpush1.msra.mxu0 0.0
    %1824 = vmatprep.subr.mxu0 0.0
    %1825 = vmatpush1.msra.mxu0 0.0
    %1826 = vmatprep.subr.mxu0 0.0
    %1827 = vmatpush1.msra.mxu0 0.0
    %1828 = vmatprep.subr.mxu0 0.0
    %1829 = vmatpush1.msra.mxu0 0.0
    %1830 = vmatprep.subr.mxu0 0.0
    %1831 = vmatpush1.msra.mxu0 0.0
    %1832 = vmatprep.subr.mxu0 0.0
    %1833 = vmatpush1.msra.mxu0 0.0
    %1834 = vmatprep.mubr.f32.mxu0 0.0
    %1835 = vmatmul.mubr.f32.gmra.mrb[0].mxu0 %v1765
    %v1836 = vpop.f32.mrb[0].mxu0
    %v1837 = vadd.f32 0.0, %v1836
    %v1838 = vpop.f32.mrb[0].mxu0
    %1839 = vmatprep.mubr.f32.mxu0 0.0
    %1840 = vmatmul.mubr.f32.gmra.mrb[0].mxu0 %v1768
    %v1841 = vpop.f32.mrb[0].mxu0
    %v1842 = vadd.f32 0.0, %v1841
    %v1843 = vpop.f32.mrb[0].mxu0
    %1844 = vdwg.mxu0
    %v1845 = vrcp.pop %v1837
    %v1846 = vmul.f32 %v1761, %v1845
    %v1847 = vrcp.pop %v1842
    %v1848 = vmul.f32 %v1763, %v1847
    %v1850 = vsel %vm867, %v1846, 0
    %v1853 = vsel %vm867, %v1848, 0
    %v1856 = vsel %vm154, %v1583, 0
    %1858 = vmatprep.subr.mxu0 0.0
    %1859 = vmatpush1.msra.mxu0 %v1563
    %1860 = vmatprep.subr.mxu0 0.0
    %1861 = vmatpush1.msra.mxu0 %v1568
    %1862 = vmatprep.subr.mxu0 0.0
    %1863 = vmatpush1.msra.mxu0 %v1573
    %1864 = vmatprep.subr.mxu0 0.0
    %1865 = vmatpush1.msra.mxu0 %v1578
    %1866 = vmatprep.subr.mxu0 0.0
    %1867 = vmatpush1.msra.mxu0 %v1856
    %1868 = vmatprep.subr.mxu0 0.0
    %1869 = vmatpush1.msra.mxu0 0.0
    %1870 = vmatprep.subr.mxu0 0.0
    %1871 = vmatpush1.msra.mxu0 0.0
    %1872 = vmatprep.subr.mxu0 0.0
    %1873 = vmatpush1.msra.mxu0 0.0
    %1874 = vmatprep.subr.mxu0 0.0
    %1875 = vmatpush1.msra.mxu0 0.0
    %1876 = vmatprep.subr.mxu0 0.0
    %1877 = vmatpush1.msra.mxu0 0.0
    %1878 = vmatprep.subr.mxu0 0.0
    %1879 = vmatpush1.msra.mxu0 0.0
    %1880 = vmatprep.subr.mxu0 0.0
    %1881 = vmatpush1.msra.mxu0 0.0
    %1882 = vmatprep.subr.mxu0 0.0
    %1883 = vmatpush1.msra.mxu0 0.0
    %1884 = vmatprep.subr.mxu0 0.0
    %1885 = vmatpush1.msra.mxu0 0.0
    %1886 = vmatprep.subr.mxu0 0.0
    %1887 = vmatpush1.msra.mxu0 0.0
    %1888 = vmatprep.subr.mxu0 0.0
    %1889 = vmatpush1.msra.mxu0 0.0
    %1890 = vmatprep.subr.mxu0 0.0
    %1891 = vmatpush1.msra.mxu0 0.0
    %1892 = vmatprep.subr.mxu0 0.0
    %1893 = vmatpush1.msra.mxu0 0.0
    %1894 = vmatprep.subr.mxu0 0.0
    %1895 = vmatpush1.msra.mxu0 0.0
    %1896 = vmatprep.subr.mxu0 0.0
    %1897 = vmatpush1.msra.mxu0 0.0
    %1898 = vmatprep.subr.mxu0 0.0
    %1899 = vmatpush1.msra.mxu0 0.0
    %1900 = vmatprep.subr.mxu0 0.0
    %1901 = vmatpush1.msra.mxu0 0.0
    %1902 = vmatprep.subr.mxu0 0.0
    %1903 = vmatpush1.msra.mxu0 0.0
    %1904 = vmatprep.subr.mxu0 0.0
    %1905 = vmatpush1.msra.mxu0 0.0
    %1906 = vmatprep.subr.mxu0 0.0
    %1907 = vmatpush1.msra.mxu0 0.0
    %1908 = vmatprep.subr.mxu0 0.0
    %1909 = vmatpush1.msra.mxu0 0.0
    %1910 = vmatprep.subr.mxu0 0.0
    %1911 = vmatpush1.msra.mxu0 0.0
    %1912 = vmatprep.subr.mxu0 0.0
    %1913 = vmatpush1.msra.mxu0 0.0
    %1914 = vmatprep.subr.mxu0 0.0
    %1915 = vmatpush1.msra.mxu0 0.0
    %1916 = vmatprep.subr.mxu0 0.0
    %1917 = vmatpush1.msra.mxu0 0.0
    %1918 = vmatprep.subr.mxu0 0.0
    %1919 = vmatpush1.msra.mxu0 0.0
    %1920 = vmatprep.subr.mxu0 0.0
    %1921 = vmatpush1.msra.mxu0 0.0
    %1922 = vmatprep.mubr.f32.mxu0 0.0
    %1923 = vmatmul.mubr.f32.gmra.mrb[0].mxu0 %v1850
    %v1924 = vpop.f32.mrb[0].mxu0
    %v1925 = vadd.f32 0.0, %v1924
    %v1926 = vpop.f32.mrb[0].mxu0
    %1927 = vmatprep.mubr.f32.mxu0 0.0
    %1928 = vmatmul.mubr.f32.gmra.mrb[0].mxu0 %v1853
    %v1929 = vpop.f32.mrb[0].mxu0
    %v1930 = vadd.f32 0.0, %v1929
    %v1931 = vpop.f32.mrb[0].mxu0
    %1932 = vdwg.mxu0
    %v1933 = vmul.f32 %v1925, 0.25
    %v1934 = vmul.f32 %v1930, 0.25
    %v1936 = vsel %vm698, %v1398, 0
    %v1938 = vsel %vm698, %v1399, 0
    %1940 = vmatprep.subr.mxu0 0.0
    %1941 = vmatpush1.xpose.msra.mxu0 %v1936
    %1942 = vmatprep.subr.mxu0 0.0
    %1943 = vmatpush1.xpose.msra.mxu0 %v1938
    %1944 = vmatprep.subr.mxu0 0.0
    %1945 = vmatpush1.xpose.msra.mxu0 0.0
    %1946 = vmatprep.subr.mxu0 0.0
    %1947 = vmatpush1.xpose.msra.mxu0 0.0
    %1948 = vmatprep.subr.mxu0 0.0
    %1949 = vmatpush1.xpose.msra.mxu0 0.0
    %1950 = vmatprep.subr.mxu0 0.0
    %1951 = vmatpush1.xpose.msra.mxu0 0.0
    %1952 = vmatprep.subr.mxu0 0.0
    %1953 = vmatpush1.xpose.msra.mxu0 0.0
    %1954 = vmatprep.subr.mxu0 0.0
    %1955 = vmatpush1.xpose.msra.mxu0 0.0
    %1956 = vmatprep.subr.mxu0 0.0
    %1957 = vmatpush1.xpose.msra.mxu0 0.0
    %1958 = vmatprep.subr.mxu0 0.0
    %1959 = vmatpush1.xpose.msra.mxu0 0.0
    %1960 = vmatprep.subr.mxu0 0.0
    %1961 = vmatpush1.xpose.msra.mxu0 0.0
    %1962 = vmatprep.subr.mxu0 0.0
    %1963 = vmatpush1.xpose.msra.mxu0 0.0
    %1964 = vmatprep.subr.mxu0 0.0
    %1965 = vmatpush1.xpose.msra.mxu0 0.0
    %1966 = vmatprep.subr.mxu0 0.0
    %1967 = vmatpush1.xpose.msra.mxu0 0.0
    %1968 = vmatprep.subr.mxu0 0.0
    %1969 = vmatpush1.xpose.msra.mxu0 0.0
    %1970 = vmatprep.subr.mxu0 0.0
    %1971 = vmatpush1.xpose.msra.mxu0 0.0
    %1972 = vmatprep.subr.mxu0 0.0
    %1973 = vmatpush1.xpose.msra.mxu0 0.0
    %1974 = vmatprep.subr.mxu0 0.0
    %1975 = vmatpush1.xpose.msra.mxu0 0.0
    %1976 = vmatprep.subr.mxu0 0.0
    %1977 = vmatpush1.xpose.msra.mxu0 0.0
    %1978 = vmatprep.subr.mxu0 0.0
    %1979 = vmatpush1.xpose.msra.mxu0 0.0
    %1980 = vmatprep.subr.mxu0 0.0
    %1981 = vmatpush1.xpose.msra.mxu0 0.0
    %1982 = vmatprep.subr.mxu0 0.0
    %1983 = vmatpush1.xpose.msra.mxu0 0.0
    %1984 = vmatprep.subr.mxu0 0.0
    %1985 = vmatpush1.xpose.msra.mxu0 0.0
    %1986 = vmatprep.subr.mxu0 0.0
    %1987 = vmatpush1.xpose.msra.mxu0 0.0
    %1988 = vmatprep.subr.mxu0 0.0
    %1989 = vmatpush1.xpose.msra.mxu0 0.0
    %1990 = vmatprep.subr.mxu0 0.0
    %1991 = vmatpush1.xpose.msra.mxu0 0.0
    %1992 = vmatprep.subr.mxu0 0.0
    %1993 = vmatpush1.xpose.msra.mxu0 0.0
    %1994 = vmatprep.subr.mxu0 0.0
    %1995 = vmatpush1.xpose.msra.mxu0 0.0
    %1996 = vmatprep.subr.mxu0 0.0
    %1997 = vmatpush1.xpose.msra.mxu0 0.0
    %1998 = vmatprep.subr.mxu0 0.0
    %1999 = vmatpush1.xpose.msra.mxu0 0.0
    %2000 = vmatprep.subr.mxu0 0.0
    %2001 = vmatpush1.xpose.msra.mxu0 0.0
    %2002 = vmatprep.subr.mxu0 0.0
    %2003 = vmatpush1.xpose.msra.mxu0 0.0
    %2004 = vmatprep.mubr.f32.mxu0 0.0
    %2005 = vmatmul.mubr.f32.gmra.mrb[0].mxu0 %v1936
    %v2006 = vpop.f32.mrb[0].mxu0
    %v2007 = vadd.f32 0.0, %v2006
    %v2008 = vpop.f32.mrb[0].mxu0
    %2009 = vmatprep.mubr.f32.mxu0 0.0
    %2010 = vmatmul.mubr.f32.gmra.mrb[0].mxu0 %v1938
    %v2011 = vpop.f32.mrb[0].mxu0
    %v2012 = vadd.f32 0.0, %v2011
    %v2013 = vpop.f32.mrb[0].mxu0
    %2014 = vdwg.mxu0
    %v2016 = vsel %vm482, %v2007, 0
    %v2019 = vsel %vm482, %v2012, 0
    %2021 = vmatprep.subr.mxu0 0.0
    %2022 = vmatpush1.msra.mxu0 %v368
    %2023 = vmatprep.subr.mxu0 0.0
    %2024 = vmatpush1.msra.mxu0 %v786
    %2025 = vmatprep.subr.mxu0 0.0
    %2026 = vmatpush1.msra.mxu0 0.0
    %2027 = vmatprep.subr.mxu0 0.0
    %2028 = vmatpush1.msra.mxu0 0.0
    %2029 = vmatprep.subr.mxu0 0.0
    %2030 = vmatpush1.msra.mxu0 0.0
    %2031 = vmatprep.subr.mxu0 0.0
    %2032 = vmatpush1.msra.mxu0 0.0
    %2033 = vmatprep.subr.mxu0 0.0
    %2034 = vmatpush1.msra.mxu0 0.0
    %2035 = vmatprep.subr.mxu0 0.0
    %2036 = vmatpush1.msra.mxu0 0.0
    %2037 = vmatprep.subr.mxu0 0.0
    %2038 = vmatpush1.msra.mxu0 0.0
    %2039 = vmatprep.subr.mxu0 0.0
    %2040 = vmatpush1.msra.mxu0 0.0
    %2041 = vmatprep.subr.mxu0 0.0
    %2042 = vmatpush1.msra.mxu0 0.0
    %2043 = vmatprep.subr.mxu0 0.0
    %2044 = vmatpush1.msra.mxu0 0.0
    %2045 = vmatprep.subr.mxu0 0.0
    %2046 = vmatpush1.msra.mxu0 0.0
    %2047 = vmatprep.subr.mxu0 0.0
    %2048 = vmatpush1.msra.mxu0 0.0
    %2049 = vmatprep.subr.mxu0 0.0
    %2050 = vmatpush1.msra.mxu0 0.0
    %2051 = vmatprep.subr.mxu0 0.0
    %2052 = vmatpush1.msra.mxu0 0.0
    %2053 = vmatprep.subr.mxu0 0.0
    %2054 = vmatpush1.msra.mxu0 0.0
    %2055 = vmatprep.subr.mxu0 0.0
    %2056 = vmatpush1.msra.mxu0 0.0
    %2057 = vmatprep.subr.mxu0 0.0
    %2058 = vmatpush1.msra.mxu0 0.0
    %2059 = vmatprep.subr.mxu0 0.0
    %2060 = vmatpush1.msra.mxu0 0.0
    %2061 = vmatprep.subr.mxu0 0.0
    %2062 = vmatpush1.msra.mxu0 0.0
    %2063 = vmatprep.subr.mxu0 0.0
    %2064 = vmatpush1.msra.mxu0 0.0
    %2065 = vmatprep.subr.mxu0 0.0
    %2066 = vmatpush1.msra.mxu0 0.0
    %2067 = vmatprep.subr.mxu0 0.0
    %2068 = vmatpush1.msra.mxu0 0.0
    %2069 = vmatprep.subr.mxu0 0.0
    %2070 = vmatpush1.msra.mxu0 0.0
    %2071 = vmatprep.subr.mxu0 0.0
    %2072 = vmatpush1.msra.mxu0 0.0
    %2073 = vmatprep.subr.mxu0 0.0
    %2074 = vmatpush1.msra.mxu0 0.0
    %2075 = vmatprep.subr.mxu0 0.0
    %2076 = vmatpush1.msra.mxu0 0.0
    %2077 = vmatprep.subr.mxu0 0.0
    %2078 = vmatpush1.msra.mxu0 0.0
    %2079 = vmatprep.subr.mxu0 0.0
    %2080 = vmatpush1.msra.mxu0 0.0
    %2081 = vmatprep.subr.mxu0 0.0
    %2082 = vmatpush1.msra.mxu0 0.0
    %2083 = vmatprep.subr.mxu0 0.0
    %2084 = vmatpush1.msra.mxu0 0.0
    %2085 = vmatprep.mubr.f32.mxu0 0.0
    %2086 = vmatmul.mubr.f32.gmra.mrb[0].mxu0 %v2016
    %v2087 = vpop.f32.mrb[0].mxu0
    %v2088 = vadd.f32 0.0, %v2087
    %v2089 = vpop.f32.mrb[0].mxu0
    %2090 = vmatprep.mubr.f32.mxu0 0.0
    %2091 = vmatmul.mubr.f32.gmra.mrb[0].mxu0 %v2019
    %v2092 = vpop.f32.mrb[0].mxu0
    %v2093 = vadd.f32 0.0, %v2092
    %v2094 = vpop.f32.mrb[0].mxu0
    %2095 = vdwg.mxu0
    %s2096 = scalar_lea.vmem %s2, 48
    %v2097 = vld [vmem:[%s2096] sm:$0xff]
    %v2098 = vld [vmem:[%s2096 + $0x8] sm:$0x1]
    %v2099 = vmul.f32 %v2088, %v2097
    %v2100 = vmul.f32 %v2093, %v2098
    %v2101 = vsel %vm867, %v2099, -inf
    %2102 = vmax.xlane.f32.xlu0 %v2101
    %v2103 = vpop.xlane.xlu0 %2102
    %v2104 = vsel %vm871, %v2100, -inf
    %2105 = vmax.xlane.f32.xlu0 %v2104
    %v2106 = vpop.xlane.xlu0 %2105
    %v2107 = vsub.f32 %v2099, %v2103
    %v2108 = vsub.f32 %v2100, %v2106
    %v2109 = vmul.f32 %v2107, 1.442695
    %v2110 = vpow.pop %v2109
    %v2111 = vmul.f32 %v2108, 1.442695
    %v2112 = vpow.pop %v2111
    %v2114 = vsel %vm867, %v2110, 0
    %v2117 = vsel %vm867, %v2112, 0
    %2119 = vmatprep.subr.mxu0 0.0
    %2120 = vmatpush1.msra.mxu0 %v395
    %2121 = vmatprep.subr.mxu0 0.0
    %2122 = vmatpush1.msra.mxu0 %v396
    %2123 = vmatprep.subr.mxu0 0.0
    %2124 = vmatpush1.msra.mxu0 %v397
    %2125 = vmatprep.subr.mxu0 0.0
    %2126 = vmatpush1.msra.mxu0 %v398
    %2127 = vmatprep.subr.mxu0 0.0
    %2128 = vmatpush1.msra.mxu0 %v888
    %2129 = vmatprep.subr.mxu0 0.0
    %2130 = vmatpush1.msra.mxu0 0.0
    %2131 = vmatprep.subr.mxu0 0.0
    %2132 = vmatpush1.msra.mxu0 0.0
    %2133 = vmatprep.subr.mxu0 0.0
    %2134 = vmatpush1.msra.mxu0 0.0
    %2135 = vmatprep.subr.mxu0 0.0
    %2136 = vmatpush1.msra.mxu0 0.0
    %2137 = vmatprep.subr.mxu0 0.0
    %2138 = vmatpush1.msra.mxu0 0.0
    %2139 = vmatprep.subr.mxu0 0.0
    %2140 = vmatpush1.msra.mxu0 0.0
    %2141 = vmatprep.subr.mxu0 0.0
    %2142 = vmatpush1.msra.mxu0 0.0
    %2143 = vmatprep.subr.mxu0 0.0
    %2144 = vmatpush1.msra.mxu0 0.0
    %2145 = vmatprep.subr.mxu0 0.0
    %2146 = vmatpush1.msra.mxu0 0.0
    %2147 = vmatprep.subr.mxu0 0.0
    %2148 = vmatpush1.msra.mxu0 0.0
    %2149 = vmatprep.subr.mxu0 0.0
    %2150 = vmatpush1.msra.mxu0 0.0
    %2151 = vmatprep.subr.mxu0 0.0
    %2152 = vmatpush1.msra.mxu0 0.0
    %2153 = vmatprep.subr.mxu0 0.0
    %2154 = vmatpush1.msra.mxu0 0.0
    %2155 = vmatprep.subr.mxu0 0.0
    %2156 = vmatpush1.msra.mxu0 0.0
    %2157 = vmatprep.subr.mxu0 0.0
    %2158 = vmatpush1.msra.mxu0 0.0
    %2159 = vmatprep.subr.mxu0 0.0
    %2160 = vmatpush1.msra.mxu0 0.0
    %2161 = vmatprep.subr.mxu0 0.0
    %2162 = vmatpush1.msra.mxu0 0.0
    %2163 = vmatprep.subr.mxu0 0.0
    %2164 = vmatpush1.msra.mxu0 0.0
    %2165 = vmatprep.subr.mxu0 0.0
    %2166 = vmatpush1.msra.mxu0 0.0
    %2167 = vmatprep.subr.mxu0 0.0
    %2168 = vmatpush1.msra.mxu0 0.0
    %2169 = vmatprep.subr.mxu0 0.0
    %2170 = vmatpush1.msra.mxu0 0.0
    %2171 = vmatprep.subr.mxu0 0.0
    %2172 = vmatpush1.msra.mxu0 0.0
    %2173 = vmatprep.subr.mxu0 0.0
    %2174 = vmatpush1.msra.mxu0 0.0
    %2175 = vmatprep.subr.mxu0 0.0
    %2176 = vmatpush1.msra.mxu0 0.0
    %2177 = vmatprep.subr.mxu0 0.0
    %2178 = vmatpush1.msra.mxu0 0.0
    %2179 = vmatprep.subr.mxu0 0.0
    %2180 = vmatpush1.msra.mxu0 0.0
    %2181 = vmatprep.subr.mxu0 0.0
    %2182 = vmatpush1.msra.mxu0 0.0
    %2183 = vmatprep.mubr.f32.mxu0 0.0
    %2184 = vmatmul.mubr.f32.gmra.mrb[0].mxu0 %v2114
    %v2185 = vpop.f32.mrb[0].mxu0
    %v2186 = vadd.f32 0.0, %v2185
    %v2187 = vpop.f32.mrb[0].mxu0
    %2188 = vmatprep.mubr.f32.mxu0 0.0
    %2189 = vmatmul.mubr.f32.gmra.mrb[0].mxu0 %v2117
    %v2190 = vpop.f32.mrb[0].mxu0
    %v2191 = vadd.f32 0.0, %v2190
    %v2192 = vpop.f32.mrb[0].mxu0
    %2193 = vdwg.mxu0
    %v2194 = vrcp.pop %v2186
    %v2195 = vmul.f32 %v2110, %v2194
    %v2196 = vrcp.pop %v2191
    %v2197 = vmul.f32 %v2112, %v2196
    %v2199 = vsel %vm867, %v2195, 0
    %v2202 = vsel %vm867, %v2197, 0
    %2204 = vmatprep.subr.mxu0 0.0
    %2205 = vmatpush1.msra.mxu0 %v1563
    %2206 = vmatprep.subr.mxu0 0.0
    %2207 = vmatpush1.msra.mxu0 %v1568
    %2208 = vmatprep.subr.mxu0 0.0
    %2209 = vmatpush1.msra.mxu0 %v1573
    %2210 = vmatprep.subr.mxu0 0.0
    %2211 = vmatpush1.msra.mxu0 %v1578
    %2212 = vmatprep.subr.mxu0 0.0
    %2213 = vmatpush1.msra.mxu0 %v1856
    %2214 = vmatprep.subr.mxu0 0.0
    %2215 = vmatpush1.msra.mxu0 0.0
    %2216 = vmatprep.subr.mxu0 0.0
    %2217 = vmatpush1.msra.mxu0 0.0
    %2218 = vmatprep.subr.mxu0 0.0
    %2219 = vmatpush1.msra.mxu0 0.0
    %2220 = vmatprep.subr.mxu0 0.0
    %2221 = vmatpush1.msra.mxu0 0.0
    %2222 = vmatprep.subr.mxu0 0.0
    %2223 = vmatpush1.msra.mxu0 0.0
    %2224 = vmatprep.subr.mxu0 0.0
    %2225 = vmatpush1.msra.mxu0 0.0
    %2226 = vmatprep.subr.mxu0 0.0
    %2227 = vmatpush1.msra.mxu0 0.0
    %2228 = vmatprep.subr.mxu0 0.0
    %2229 = vmatpush1.msra.mxu0 0.0
    %2230 = vmatprep.subr.mxu0 0.0
    %2231 = vmatpush1.msra.mxu0 0.0
    %2232 = vmatprep.subr.mxu0 0.0
    %2233 = vmatpush1.msra.mxu0 0.0
    %2234 = vmatprep.subr.mxu0 0.0
    %2235 = vmatpush1.msra.mxu0 0.0
    %2236 = vmatprep.subr.mxu0 0.0
    %2237 = vmatpush1.msra.mxu0 0.0
    %2238 = vmatprep.subr.mxu0 0.0
    %2239 = vmatpush1.msra.mxu0 0.0
    %2240 = vmatprep.subr.mxu0 0.0
    %2241 = vmatpush1.msra.mxu0 0.0
    %2242 = vmatprep.subr.mxu0 0.0
    %2243 = vmatpush1.msra.mxu0 0.0
    %2244 = vmatprep.subr.mxu0 0.0
    %2245 = vmatpush1.msra.mxu0 0.0
    %2246 = vmatprep.subr.mxu0 0.0
    %2247 = vmatpush1.msra.mxu0 0.0
    %2248 = vmatprep.subr.mxu0 0.0
    %2249 = vmatpush1.msra.mxu0 0.0
    %2250 = vmatprep.subr.mxu0 0.0
    %2251 = vmatpush1.msra.mxu0 0.0
    %2252 = vmatprep.subr.mxu0 0.0
    %2253 = vmatpush1.msra.mxu0 0.0
    %2254 = vmatprep.subr.mxu0 0.0
    %2255 = vmatpush1.msra.mxu0 0.0
    %2256 = vmatprep.subr.mxu0 0.0
    %2257 = vmatpush1.msra.mxu0 0.0
    %2258 = vmatprep.subr.mxu0 0.0
    %2259 = vmatpush1.msra.mxu0 0.0
    %2260 = vmatprep.subr.mxu0 0.0
    %2261 = vmatpush1.msra.mxu0 0.0
    %2262 = vmatprep.subr.mxu0 0.0
    %2263 = vmatpush1.msra.mxu0 0.0
    %2264 = vmatprep.subr.mxu0 0.0
    %2265 = vmatpush1.msra.mxu0 0.0
    %2266 = vmatprep.subr.mxu0 0.0
    %2267 = vmatpush1.msra.mxu0 0.0
    %2268 = vmatprep.mubr.f32.mxu0 0.0
    %2269 = vmatmul.mubr.f32.gmra.mrb[0].mxu0 %v2199
    %v2270 = vpop.f32.mrb[0].mxu0
    %v2271 = vadd.f32 0.0, %v2270
    %v2272 = vpop.f32.mrb[0].mxu0
    %2273 = vmatprep.mubr.f32.mxu0 0.0
    %2274 = vmatmul.mubr.f32.gmra.mrb[0].mxu0 %v2202
    %v2275 = vpop.f32.mrb[0].mxu0
    %v2276 = vadd.f32 0.0, %v2275
    %v2277 = vpop.f32.mrb[0].mxu0
    %2278 = vdwg.mxu0
    %v2279 = vmul.f32 %v2271, 0.25
    %v2280 = vmul.f32 %v2276, 0.25
    %vm2281 = vcmp.lt.s32.totalorder %v237, 5
    %vm2282 = vmand %vm241, %vm2281
    %vm2283 = vmand %vm2282, %vm244
    %v2284 = vsel %vm2283, 1.0, 0.0
    %vm2285 = vcmp.lt.s32.totalorder %v234, 5
    %vm2286 = vcmp.lt.s32.totalorder %v235, 5
    %vm2287 = vcmp.lt.s32.totalorder %v238, 5
    %vm2288 = vmand %vm250, %vm2285
    %vm2289 = vmand %vm251, %vm2286
    %vm2290 = vmand %vm252, %vm2287
    %vm2291 = vmand %vm2288, %vm241
    %vm2292 = vmand %vm2289, %vm241
    %vm2293 = vmand %vm2290, %vm241
    %vm2294 = vmand %vm2291, %vm2281
    %vm2295 = vmand %vm2292, %vm2281
    %vm2296 = vmand %vm2293, %vm2281
    %v2297 = vsel %vm2294, 1.0, 0.0
    %v2298 = vsel %vm2295, 1.0, 0.0
    %v2299 = vsel %vm2296, 1.0, 0.0
    %vm2300 = vcmp.ge.s32.totalorder %v237, 5
    %vm2301 = vcmp.lt.s32.totalorder %v237, 10
    %vm2302 = vmand %vm2300, %vm2301
    %v2303 = vsub.s32 %v237, 5
    %vm2304 = vcmp.eq.s32.totalorder %v2303, %v234
    %vm2305 = vmand %vm2302, %vm2304
    %v2306 = vsel %vm2305, 1.0, %v2284
    %vm2307 = vcmp.ge.s32.totalorder %v234, 5
    %vm2308 = vcmp.ge.s32.totalorder %v235, 5
    %vm2309 = vcmp.ge.s32.totalorder %v238, 5
    %vm2310 = vcmp.lt.s32.totalorder %v234, 10
    %vm2311 = vcmp.lt.s32.totalorder %v235, 10
    %vm2312 = vcmp.lt.s32.totalorder %v238, 10
    %vm2313 = vmand %vm2307, %vm2310
    %vm2314 = vmand %vm2308, %vm2311
    %vm2315 = vmand %vm2309, %vm2312
    %vm2316 = vmand %vm2313, %vm2300
    %vm2317 = vmand %vm2314, %vm2300
    %vm2318 = vmand %vm2315, %vm2300
    %vm2319 = vmand %vm2316, %vm2301
    %vm2320 = vmand %vm2317, %vm2301
    %vm2321 = vmand %vm2318, %vm2301
    %v2322 = vsel %vm2319, 1.0, %v2297
    %v2323 = vsel %vm2320, 1.0, %v2298
    %v2324 = vsel %vm2321, 1.0, %v2299
    %vm2325 = vcmp.ge.s32.totalorder %v237, 10
    %vm2326 = vcmp.lt.s32.totalorder %v237, 15
    %vm2327 = vmand %vm2325, %vm2326
    %v2328 = vsub.s32 %v237, 10
    %vm2329 = vcmp.eq.s32.totalorder %v2328, %v234
    %vm2330 = vmand %vm2327, %vm2329
    %v2331 = vsel %vm2330, 1.0, %v2306
    %vm2332 = vcmp.ge.s32.totalorder %v234, 10
    %vm2333 = vcmp.ge.s32.totalorder %v235, 10
    %vm2334 = vcmp.ge.s32.totalorder %v238, 10
    %vm2335 = vcmp.lt.s32.totalorder %v234, 15
    %vm2336 = vcmp.lt.s32.totalorder %v235, 15
    %vm2337 = vcmp.lt.s32.totalorder %v238, 15
    %vm2338 = vmand %vm2332, %vm2335
    %vm2339 = vmand %vm2333, %vm2336
    %vm2340 = vmand %vm2334, %vm2337
    %vm2341 = vmand %vm2338, %vm2325
    %vm2342 = vmand %vm2339, %vm2325
    %vm2343 = vmand %vm2340, %vm2325
    %vm2344 = vmand %vm2341, %vm2326
    %vm2345 = vmand %vm2342, %vm2326
    %vm2346 = vmand %vm2343, %vm2326
    %v2347 = vsel %vm2344, 1.0, %v2322
    %v2348 = vsel %vm2345, 1.0, %v2323
    %v2349 = vsel %vm2346, 1.0, %v2324
    %vm2350 = vcmp.ge.s32.totalorder %v237, 15
    %vm2351 = vcmp.lt.s32.totalorder %v237, 20
    %vm2352 = vmand %vm2350, %vm2351
    %v2353 = vsub.s32 %v237, 15
    %vm2354 = vcmp.eq.s32.totalorder %v2353, %v234
    %vm2355 = vmand %vm2352, %vm2354
    %v2356 = vsel %vm2355, 1.0, %v2331
    %vm2357 = vcmp.ge.s32.totalorder %v234, 15
    %vm2358 = vcmp.ge.s32.totalorder %v235, 15
    %vm2359 = vcmp.ge.s32.totalorder %v238, 15
    %vm2360 = vcmp.lt.s32.totalorder %v234, 20
    %vm2361 = vcmp.lt.s32.totalorder %v235, 20
    %vm2362 = vcmp.lt.s32.totalorder %v238, 20
    %vm2363 = vmand %vm2357, %vm2360
    %vm2364 = vmand %vm2358, %vm2361
    %vm2365 = vmand %vm2359, %vm2362
    %vm2366 = vmand %vm2363, %vm2350
    %vm2367 = vmand %vm2364, %vm2350
    %vm2368 = vmand %vm2365, %vm2350
    %vm2369 = vmand %vm2366, %vm2351
    %vm2370 = vmand %vm2367, %vm2351
    %vm2371 = vmand %vm2368, %vm2351
    %v2372 = vsel %vm2369, 1.0, %v2347
    %v2373 = vsel %vm2370, 1.0, %v2348
    %v2374 = vsel %vm2371, 1.0, %v2349
    %vm2375 = vmand %vm2288, %vm400
    %vm2376 = vmand %vm2289, %vm401
    %vm2377 = vmand %vm2290, %vm402
    %v2378 = vsel %vm2375, 1.0, 0.0
    %v2379 = vsel %vm2376, 1.0, 0.0
    %v2380 = vsel %vm2377, 1.0, 0.0
    %v2381 = vsub.s32 %v234, 10
    %v2382 = vsub.s32 %v235, 10
    %v2383 = vsub.s32 %v238, 10
    %vm2384 = vcmp.eq.s32.totalorder %v2381, %v237
    %vm2385 = vcmp.eq.s32.totalorder %v2382, %v237
    %vm2386 = vcmp.eq.s32.totalorder %v2383, %v237
    %vm2387 = vmand %vm2338, %vm2384
    %vm2388 = vmand %vm2339, %vm2385
    %vm2389 = vmand %vm2340, %vm2386
    %v2390 = vsel %vm2387, 1.0, %v2378
    %v2391 = vsel %vm2388, 1.0, %v2379
    %v2392 = vsel %vm2389, 1.0, %v2380
    %v2393 = vsub.s32 %v234, 5
    %v2394 = vsub.s32 %v235, 5
    %v2395 = vsub.s32 %v238, 5
    %vm2396 = vcmp.eq.s32.totalorder %v2393, %v237
    %vm2397 = vcmp.eq.s32.totalorder %v2394, %v237
    %vm2398 = vcmp.eq.s32.totalorder %v2395, %v237
    %vm2399 = vmand %vm2313, %vm2396
    %vm2400 = vmand %vm2314, %vm2397
    %vm2401 = vmand %vm2315, %vm2398
    %v2402 = vsel %vm2399, 1.0, 0.0
    %v2403 = vsel %vm2400, 1.0, 0.0
    %v2404 = vsel %vm2401, 1.0, 0.0
    %v2405 = vsub.s32 %v234, 15
    %v2406 = vsub.s32 %v235, 15
    %v2407 = vsub.s32 %v238, 15
    %vm2408 = vcmp.eq.s32.totalorder %v2405, %v237
    %vm2409 = vcmp.eq.s32.totalorder %v2406, %v237
    %vm2410 = vcmp.eq.s32.totalorder %v2407, %v237
    %vm2411 = vmand %vm2363, %vm2408
    %vm2412 = vmand %vm2364, %vm2409
    %vm2413 = vmand %vm2365, %vm2410
    %v2414 = vsel %vm2411, 1.0, %v2402
    %v2415 = vsel %vm2412, 1.0, %v2403
    %v2416 = vsel %vm2413, 1.0, %v2404
    %vm2419 = vcmask 1042432
    %v2420 = vrot.slane %v225, 5
    %v2421 = vrot.slane %v230, 5
    %v2422 = vsel %vm2419, %v2420, %v2421
    %vm2423 = vcmask 39936
    %v2425 = vsel %vm2423, %v2414, 0
    %v2428 = vsel %vm2423, %v2415, 0
    %v2431 = vsel %vm2423, %v2416, 0
    %vm2433 = vcmask 1044480
    %v2434 = vsel %vm2433, %v2422, 0
    %2436 = vmatprep.subr.mxu0 0.0
    %2437 = vmatpush1.msra.mxu0 %v2434
    %2438 = vmatprep.subr.mxu0 0.0
    %2439 = vmatpush1.msra.mxu0 0.0
    %2440 = vmatprep.subr.mxu0 0.0
    %2441 = vmatpush1.msra.mxu0 0.0
    %2442 = vmatprep.subr.mxu0 0.0
    %2443 = vmatpush1.msra.mxu0 0.0
    %2444 = vmatprep.subr.mxu0 0.0
    %2445 = vmatpush1.msra.mxu0 0.0
    %2446 = vmatprep.subr.mxu0 0.0
    %2447 = vmatpush1.msra.mxu0 0.0
    %2448 = vmatprep.subr.mxu0 0.0
    %2449 = vmatpush1.msra.mxu0 0.0
    %2450 = vmatprep.subr.mxu0 0.0
    %2451 = vmatpush1.msra.mxu0 0.0
    %2452 = vmatprep.subr.mxu0 0.0
    %2453 = vmatpush1.msra.mxu0 0.0
    %2454 = vmatprep.subr.mxu0 0.0
    %2455 = vmatpush1.msra.mxu0 0.0
    %2456 = vmatprep.subr.mxu0 0.0
    %2457 = vmatpush1.msra.mxu0 0.0
    %2458 = vmatprep.subr.mxu0 0.0
    %2459 = vmatpush1.msra.mxu0 0.0
    %2460 = vmatprep.subr.mxu0 0.0
    %2461 = vmatpush1.msra.mxu0 0.0
    %2462 = vmatprep.subr.mxu0 0.0
    %2463 = vmatpush1.msra.mxu0 0.0
    %2464 = vmatprep.subr.mxu0 0.0
    %2465 = vmatpush1.msra.mxu0 0.0
    %2466 = vmatprep.subr.mxu0 0.0
    %2467 = vmatpush1.msra.mxu0 0.0
    %2468 = vmatprep.subr.mxu0 0.0
    %2469 = vmatpush1.msra.mxu0 0.0
    %2470 = vmatprep.subr.mxu0 0.0
    %2471 = vmatpush1.msra.mxu0 0.0
    %2472 = vmatprep.subr.mxu0 0.0
    %2473 = vmatpush1.msra.mxu0 0.0
    %2474 = vmatprep.subr.mxu0 0.0
    %2475 = vmatpush1.msra.mxu0 0.0
    %2476 = vmatprep.subr.mxu0 0.0
    %2477 = vmatpush1.msra.mxu0 0.0
    %2478 = vmatprep.subr.mxu0 0.0
    %2479 = vmatpush1.msra.mxu0 0.0
    %2480 = vmatprep.subr.mxu0 0.0
    %2481 = vmatpush1.msra.mxu0 0.0
    %2482 = vmatprep.subr.mxu0 0.0
    %2483 = vmatpush1.msra.mxu0 0.0
    %2484 = vmatprep.subr.mxu0 0.0
    %2485 = vmatpush1.msra.mxu0 0.0
    %2486 = vmatprep.subr.mxu0 0.0
    %2487 = vmatpush1.msra.mxu0 0.0
    %2488 = vmatprep.subr.mxu0 0.0
    %2489 = vmatpush1.msra.mxu0 0.0
    %2490 = vmatprep.subr.mxu0 0.0
    %2491 = vmatpush1.msra.mxu0 0.0
    %2492 = vmatprep.subr.mxu0 0.0
    %2493 = vmatpush1.msra.mxu0 0.0
    %2494 = vmatprep.subr.mxu0 0.0
    %2495 = vmatpush1.msra.mxu0 0.0
    %2496 = vmatprep.subr.mxu0 0.0
    %2497 = vmatpush1.msra.mxu0 0.0
    %2498 = vmatprep.subr.mxu0 0.0
    %2499 = vmatpush1.msra.mxu0 0.0
    %2500 = vmatprep.mubr.f32.mxu0 0.0
    %2501 = vmatmul.mubr.f32.gmra.mrb[0].mxu0 %v2425
    %v2502 = vpop.f32.mrb[0].mxu0
    %v2503 = vadd.f32 0.0, %v2502
    %v2504 = vpop.f32.mrb[0].mxu0
    %2505 = vmatprep.mubr.f32.mxu0 0.0
    %2506 = vmatmul.mubr.f32.gmra.mrb[0].mxu0 %v2428
    %v2507 = vpop.f32.mrb[0].mxu0
    %v2508 = vadd.f32 0.0, %v2507
    %v2509 = vpop.f32.mrb[0].mxu0
    %2510 = vmatprep.mubr.f32.mxu0 0.0
    %2511 = vmatmul.mubr.f32.gmra.mrb[0].mxu0 %v2431
    %v2512 = vpop.f32.mrb[0].mxu0
    %v2513 = vadd.f32 0.0, %v2512
    %v2514 = vpop.f32.mrb[0].mxu0
    %2515 = vdwg.mxu0
    %v2517 = vsel %vm2423, %v2390, 0
    %v2520 = vsel %vm2423, %v2391, 0
    %v2523 = vsel %vm2423, %v2392, 0
    %v2525 = vsel %vm2433, %v225, 0
    %2527 = vmatprep.subr.mxu0 0.0
    %2528 = vmatpush1.msra.mxu0 %v2525
    %2529 = vmatprep.subr.mxu0 0.0
    %2530 = vmatpush1.msra.mxu0 0.0
    %2531 = vmatprep.subr.mxu0 0.0
    %2532 = vmatpush1.msra.mxu0 0.0
    %2533 = vmatprep.subr.mxu0 0.0
    %2534 = vmatpush1.msra.mxu0 0.0
    %2535 = vmatprep.subr.mxu0 0.0
    %2536 = vmatpush1.msra.mxu0 0.0
    %2537 = vmatprep.subr.mxu0 0.0
    %2538 = vmatpush1.msra.mxu0 0.0
    %2539 = vmatprep.subr.mxu0 0.0
    %2540 = vmatpush1.msra.mxu0 0.0
    %2541 = vmatprep.subr.mxu0 0.0
    %2542 = vmatpush1.msra.mxu0 0.0
    %2543 = vmatprep.subr.mxu0 0.0
    %2544 = vmatpush1.msra.mxu0 0.0
    %2545 = vmatprep.subr.mxu0 0.0
    %2546 = vmatpush1.msra.mxu0 0.0
    %2547 = vmatprep.subr.mxu0 0.0
    %2548 = vmatpush1.msra.mxu0 0.0
    %2549 = vmatprep.subr.mxu0 0.0
    %2550 = vmatpush1.msra.mxu0 0.0
    %2551 = vmatprep.subr.mxu0 0.0
    %2552 = vmatpush1.msra.mxu0 0.0
    %2553 = vmatprep.subr.mxu0 0.0
    %2554 = vmatpush1.msra.mxu0 0.0
    %2555 = vmatprep.subr.mxu0 0.0
    %2556 = vmatpush1.msra.mxu0 0.0
    %2557 = vmatprep.subr.mxu0 0.0
    %2558 = vmatpush1.msra.mxu0 0.0
    %2559 = vmatprep.subr.mxu0 0.0
    %2560 = vmatpush1.msra.mxu0 0.0
    %2561 = vmatprep.subr.mxu0 0.0
    %2562 = vmatpush1.msra.mxu0 0.0
    %2563 = vmatprep.subr.mxu0 0.0
    %2564 = vmatpush1.msra.mxu0 0.0
    %2565 = vmatprep.subr.mxu0 0.0
    %2566 = vmatpush1.msra.mxu0 0.0
    %2567 = vmatprep.subr.mxu0 0.0
    %2568 = vmatpush1.msra.mxu0 0.0
    %2569 = vmatprep.subr.mxu0 0.0
    %2570 = vmatpush1.msra.mxu0 0.0
    %2571 = vmatprep.subr.mxu0 0.0
    %2572 = vmatpush1.msra.mxu0 0.0
    %2573 = vmatprep.subr.mxu0 0.0
    %2574 = vmatpush1.msra.mxu0 0.0
    %2575 = vmatprep.subr.mxu0 0.0
    %2576 = vmatpush1.msra.mxu0 0.0
    %2577 = vmatprep.subr.mxu0 0.0
    %2578 = vmatpush1.msra.mxu0 0.0
    %2579 = vmatprep.subr.mxu0 0.0
    %2580 = vmatpush1.msra.mxu0 0.0
    %2581 = vmatprep.subr.mxu0 0.0
    %2582 = vmatpush1.msra.mxu0 0.0
    %2583 = vmatprep.subr.mxu0 0.0
    %2584 = vmatpush1.msra.mxu0 0.0
    %2585 = vmatprep.subr.mxu0 0.0
    %2586 = vmatpush1.msra.mxu0 0.0
    %2587 = vmatprep.subr.mxu0 0.0
    %2588 = vmatpush1.msra.mxu0 0.0
    %2589 = vmatprep.subr.mxu0 0.0
    %2590 = vmatpush1.msra.mxu0 0.0
    %2591 = vmatprep.mubr.f32.mxu0 0.0
    %2592 = vmatmul.mubr.f32.gmra.mrb[0].mxu0 %v2517
    %v2593 = vpop.f32.mrb[0].mxu0
    %v2594 = vadd.f32 %v2503, %v2593
    %v2595 = vpop.f32.mrb[0].mxu0
    %2596 = vmatprep.mubr.f32.mxu0 0.0
    %2597 = vmatmul.mubr.f32.gmra.mrb[0].mxu0 %v2520
    %v2598 = vpop.f32.mrb[0].mxu0
    %v2599 = vadd.f32 %v2508, %v2598
    %v2600 = vpop.f32.mrb[0].mxu0
    %2601 = vmatprep.mubr.f32.mxu0 0.0
    %2602 = vmatmul.mubr.f32.gmra.mrb[0].mxu0 %v2523
    %v2603 = vpop.f32.mrb[0].mxu0
    %v2604 = vadd.f32 %v2513, %v2603
    %v2605 = vpop.f32.mrb[0].mxu0
    %2606 = vdwg.mxu0
    %v2607 = vsel %vm698, %v225, 0
    %2609 = vmatprep.subr.mxu0 0.0
    %2610 = vmatpush1.xpose.msra.mxu0 %v2607
    %2611 = vmatprep.subr.mxu0 0.0
    %2612 = vmatpush1.xpose.msra.mxu0 0.0
    %2613 = vmatprep.subr.mxu0 0.0
    %2614 = vmatpush1.xpose.msra.mxu0 0.0
    %2615 = vmatprep.subr.mxu0 0.0
    %2616 = vmatpush1.xpose.msra.mxu0 0.0
    %2617 = vmatprep.subr.mxu0 0.0
    %2618 = vmatpush1.xpose.msra.mxu0 0.0
    %2619 = vmatprep.subr.mxu0 0.0
    %2620 = vmatpush1.xpose.msra.mxu0 0.0
    %2621 = vmatprep.subr.mxu0 0.0
    %2622 = vmatpush1.xpose.msra.mxu0 0.0
    %2623 = vmatprep.subr.mxu0 0.0
    %2624 = vmatpush1.xpose.msra.mxu0 0.0
    %2625 = vmatprep.subr.mxu0 0.0
    %2626 = vmatpush1.xpose.msra.mxu0 0.0
    %2627 = vmatprep.subr.mxu0 0.0
    %2628 = vmatpush1.xpose.msra.mxu0 0.0
    %2629 = vmatprep.subr.mxu0 0.0
    %2630 = vmatpush1.xpose.msra.mxu0 0.0
    %2631 = vmatprep.subr.mxu0 0.0
    %2632 = vmatpush1.xpose.msra.mxu0 0.0
    %2633 = vmatprep.subr.mxu0 0.0
    %2634 = vmatpush1.xpose.msra.mxu0 0.0
    %2635 = vmatprep.subr.mxu0 0.0
    %2636 = vmatpush1.xpose.msra.mxu0 0.0
    %2637 = vmatprep.subr.mxu0 0.0
    %2638 = vmatpush1.xpose.msra.mxu0 0.0
    %2639 = vmatprep.subr.mxu0 0.0
    %2640 = vmatpush1.xpose.msra.mxu0 0.0
    %2641 = vmatprep.subr.mxu0 0.0
    %2642 = vmatpush1.xpose.msra.mxu0 0.0
    %2643 = vmatprep.subr.mxu0 0.0
    %2644 = vmatpush1.xpose.msra.mxu0 0.0
    %2645 = vmatprep.subr.mxu0 0.0
    %2646 = vmatpush1.xpose.msra.mxu0 0.0
    %2647 = vmatprep.subr.mxu0 0.0
    %2648 = vmatpush1.xpose.msra.mxu0 0.0
    %2649 = vmatprep.subr.mxu0 0.0
    %2650 = vmatpush1.xpose.msra.mxu0 0.0
    %2651 = vmatprep.subr.mxu0 0.0
    %2652 = vmatpush1.xpose.msra.mxu0 0.0
    %2653 = vmatprep.subr.mxu0 0.0
    %2654 = vmatpush1.xpose.msra.mxu0 0.0
    %2655 = vmatprep.subr.mxu0 0.0
    %2656 = vmatpush1.xpose.msra.mxu0 0.0
    %2657 = vmatprep.subr.mxu0 0.0
    %2658 = vmatpush1.xpose.msra.mxu0 0.0
    %2659 = vmatprep.subr.mxu0 0.0
    %2660 = vmatpush1.xpose.msra.mxu0 0.0
    %2661 = vmatprep.subr.mxu0 0.0
    %2662 = vmatpush1.xpose.msra.mxu0 0.0
    %2663 = vmatprep.subr.mxu0 0.0
    %2664 = vmatpush1.xpose.msra.mxu0 0.0
    %2665 = vmatprep.subr.mxu0 0.0
    %2666 = vmatpush1.xpose.msra.mxu0 0.0
    %2667 = vmatprep.subr.mxu0 0.0
    %2668 = vmatpush1.xpose.msra.mxu0 0.0
    %2669 = vmatprep.subr.mxu0 0.0
    %2670 = vmatpush1.xpose.msra.mxu0 0.0
    %2671 = vmatprep.subr.mxu0 0.0
    %2672 = vmatpush1.xpose.msra.mxu0 0.0
    %2673 = vmatprep.mubr.f32.mxu0 0.0
    %2674 = vmatmul.mubr.f32.gmra.mrb[0].mxu0 %v2607
    %v2675 = vpop.f32.mrb[0].mxu0
    %v2676 = vadd.f32 0.0, %v2675
    %v2677 = vpop.f32.mrb[0].mxu0
    %2678 = vdwg.mxu0
    %v2680 = vsel %vm2423, %v2676, 0
    %v2683 = vsel %vm2433, %v2356, 0
    %2685 = vmatprep.subr.mxu0 0.0
    %2686 = vmatpush1.msra.mxu0 %v2683
    %2687 = vmatprep.subr.mxu0 0.0
    %2688 = vmatpush1.msra.mxu0 0.0
    %2689 = vmatprep.subr.mxu0 0.0
    %2690 = vmatpush1.msra.mxu0 0.0
    %2691 = vmatprep.subr.mxu0 0.0
    %2692 = vmatpush1.msra.mxu0 0.0
    %2693 = vmatprep.subr.mxu0 0.0
    %2694 = vmatpush1.msra.mxu0 0.0
    %2695 = vmatprep.subr.mxu0 0.0
    %2696 = vmatpush1.msra.mxu0 0.0
    %2697 = vmatprep.subr.mxu0 0.0
    %2698 = vmatpush1.msra.mxu0 0.0
    %2699 = vmatprep.subr.mxu0 0.0
    %2700 = vmatpush1.msra.mxu0 0.0
    %2701 = vmatprep.subr.mxu0 0.0
    %2702 = vmatpush1.msra.mxu0 0.0
    %2703 = vmatprep.subr.mxu0 0.0
    %2704 = vmatpush1.msra.mxu0 0.0
    %2705 = vmatprep.subr.mxu0 0.0
    %2706 = vmatpush1.msra.mxu0 0.0
    %2707 = vmatprep.subr.mxu0 0.0
    %2708 = vmatpush1.msra.mxu0 0.0
    %2709 = vmatprep.subr.mxu0 0.0
    %2710 = vmatpush1.msra.mxu0 0.0
    %2711 = vmatprep.subr.mxu0 0.0
    %2712 = vmatpush1.msra.mxu0 0.0
    %2713 = vmatprep.subr.mxu0 0.0
    %2714 = vmatpush1.msra.mxu0 0.0
    %2715 = vmatprep.subr.mxu0 0.0
    %2716 = vmatpush1.msra.mxu0 0.0
    %2717 = vmatprep.subr.mxu0 0.0
    %2718 = vmatpush1.msra.mxu0 0.0
    %2719 = vmatprep.subr.mxu0 0.0
    %2720 = vmatpush1.msra.mxu0 0.0
    %2721 = vmatprep.subr.mxu0 0.0
    %2722 = vmatpush1.msra.mxu0 0.0
    %2723 = vmatprep.subr.mxu0 0.0
    %2724 = vmatpush1.msra.mxu0 0.0
    %2725 = vmatprep.subr.mxu0 0.0
    %2726 = vmatpush1.msra.mxu0 0.0
    %2727 = vmatprep.subr.mxu0 0.0
    %2728 = vmatpush1.msra.mxu0 0.0
    %2729 = vmatprep.subr.mxu0 0.0
    %2730 = vmatpush1.msra.mxu0 0.0
    %2731 = vmatprep.subr.mxu0 0.0
    %2732 = vmatpush1.msra.mxu0 0.0
    %2733 = vmatprep.subr.mxu0 0.0
    %2734 = vmatpush1.msra.mxu0 0.0
    %2735 = vmatprep.subr.mxu0 0.0
    %2736 = vmatpush1.msra.mxu0 0.0
    %2737 = vmatprep.subr.mxu0 0.0
    %2738 = vmatpush1.msra.mxu0 0.0
    %2739 = vmatprep.subr.mxu0 0.0
    %2740 = vmatpush1.msra.mxu0 0.0
    %2741 = vmatprep.subr.mxu0 0.0
    %2742 = vmatpush1.msra.mxu0 0.0
    %2743 = vmatprep.subr.mxu0 0.0
    %2744 = vmatpush1.msra.mxu0 0.0
    %2745 = vmatprep.subr.mxu0 0.0
    %2746 = vmatpush1.msra.mxu0 0.0
    %2747 = vmatprep.subr.mxu0 0.0
    %2748 = vmatpush1.msra.mxu0 0.0
    %2749 = vmatprep.mubr.f32.mxu0 0.0
    %2750 = vmatmul.mubr.f32.gmra.mrb[0].mxu0 %v2680
    %v2751 = vpop.f32.mrb[0].mxu0
    %v2752 = vadd.f32 0.0, %v2751
    %v2753 = vpop.f32.mrb[0].mxu0
    %2754 = vdwg.mxu0
    %v2755 = vld [vmem:[%s3] sm:$0x1f]
    %v2756 = vmul.f32 %v2752, %v2755
    %vm2757 = vcmask 159744
    %v2758 = vsel %vm2757, %v2756, -inf
    %2759 = vmax.xlane.f32.xlu0 %v2758
    %v2760 = vpop.xlane.xlu0 %2759
    %v2761 = vsub.f32 %v2756, %v2760
    %v2762 = vmul.f32 %v2761, 1.442695
    %v2763 = vpow.pop %v2762
    %vm2764 = vcmask 162816
    %v2766 = vsel %vm2764, %v2763, 0
    %v2769 = vsel %vm154, %v2374, 0
    %2771 = vmatprep.subr.mxu0 0.0
    %2772 = vmatpush1.msra.mxu0 %v2372
    %2773 = vmatprep.subr.mxu0 0.0
    %2774 = vmatpush1.msra.mxu0 %v2373
    %2775 = vmatprep.subr.mxu0 0.0
    %2776 = vmatpush1.msra.mxu0 %v2769
    %2777 = vmatprep.subr.mxu0 0.0
    %2778 = vmatpush1.msra.mxu0 0.0
    %2779 = vmatprep.subr.mxu0 0.0
    %2780 = vmatpush1.msra.mxu0 0.0
    %2781 = vmatprep.subr.mxu0 0.0
    %2782 = vmatpush1.msra.mxu0 0.0
    %2783 = vmatprep.subr.mxu0 0.0
    %2784 = vmatpush1.msra.mxu0 0.0
    %2785 = vmatprep.subr.mxu0 0.0
    %2786 = vmatpush1.msra.mxu0 0.0
    %2787 = vmatprep.subr.mxu0 0.0
    %2788 = vmatpush1.msra.mxu0 0.0
    %2789 = vmatprep.subr.mxu0 0.0
    %2790 = vmatpush1.msra.mxu0 0.0
    %2791 = vmatprep.subr.mxu0 0.0
    %2792 = vmatpush1.msra.mxu0 0.0
    %2793 = vmatprep.subr.mxu0 0.0
    %2794 = vmatpush1.msra.mxu0 0.0
    %2795 = vmatprep.subr.mxu0 0.0
    %2796 = vmatpush1.msra.mxu0 0.0
    %2797 = vmatprep.subr.mxu0 0.0
    %2798 = vmatpush1.msra.mxu0 0.0
    %2799 = vmatprep.subr.mxu0 0.0
    %2800 = vmatpush1.msra.mxu0 0.0
    %2801 = vmatprep.subr.mxu0 0.0
    %2802 = vmatpush1.msra.mxu0 0.0
    %2803 = vmatprep.subr.mxu0 0.0
    %2804 = vmatpush1.msra.mxu0 0.0
    %2805 = vmatprep.subr.mxu0 0.0
    %2806 = vmatpush1.msra.mxu0 0.0
    %2807 = vmatprep.subr.mxu0 0.0
    %2808 = vmatpush1.msra.mxu0 0.0
    %2809 = vmatprep.subr.mxu0 0.0
    %2810 = vmatpush1.msra.mxu0 0.0
    %2811 = vmatprep.subr.mxu0 0.0
    %2812 = vmatpush1.msra.mxu0 0.0
    %2813 = vmatprep.subr.mxu0 0.0
    %2814 = vmatpush1.msra.mxu0 0.0
    %2815 = vmatprep.subr.mxu0 0.0
    %2816 = vmatpush1.msra.mxu0 0.0
    %2817 = vmatprep.subr.mxu0 0.0
    %2818 = vmatpush1.msra.mxu0 0.0
    %2819 = vmatprep.subr.mxu0 0.0
    %2820 = vmatpush1.msra.mxu0 0.0
    %2821 = vmatprep.subr.mxu0 0.0
    %2822 = vmatpush1.msra.mxu0 0.0
    %2823 = vmatprep.subr.mxu0 0.0
    %2824 = vmatpush1.msra.mxu0 0.0
    %2825 = vmatprep.subr.mxu0 0.0
    %2826 = vmatpush1.msra.mxu0 0.0
    %2827 = vmatprep.subr.mxu0 0.0
    %2828 = vmatpush1.msra.mxu0 0.0
    %2829 = vmatprep.subr.mxu0 0.0
    %2830 = vmatpush1.msra.mxu0 0.0
    %2831 = vmatprep.subr.mxu0 0.0
    %2832 = vmatpush1.msra.mxu0 0.0
    %2833 = vmatprep.subr.mxu0 0.0
    %2834 = vmatpush1.msra.mxu0 0.0
    %2835 = vmatprep.mubr.f32.mxu0 0.0
    %2836 = vmatmul.mubr.f32.gmra.mrb[0].mxu0 %v2766
    %v2837 = vpop.f32.mrb[0].mxu0
    %v2838 = vadd.f32 0.0, %v2837
    %v2839 = vpop.f32.mrb[0].mxu0
    %2840 = vdwg.mxu0
    %v2841 = vrcp.pop %v2838
    %v2842 = vmul.f32 %v2763, %v2841
    %v2844 = vsel %vm2764, %v2842, 0
    %v2847 = vsel %vm154, %v2604, 0
    %2849 = vmatprep.subr.mxu0 0.0
    %2850 = vmatpush1.msra.mxu0 %v2594
    %2851 = vmatprep.subr.mxu0 0.0
    %2852 = vmatpush1.msra.mxu0 %v2599
    %2853 = vmatprep.subr.mxu0 0.0
    %2854 = vmatpush1.msra.mxu0 %v2847
    %2855 = vmatprep.subr.mxu0 0.0
    %2856 = vmatpush1.msra.mxu0 0.0
    %2857 = vmatprep.subr.mxu0 0.0
    %2858 = vmatpush1.msra.mxu0 0.0
    %2859 = vmatprep.subr.mxu0 0.0
    %2860 = vmatpush1.msra.mxu0 0.0
    %2861 = vmatprep.subr.mxu0 0.0
    %2862 = vmatpush1.msra.mxu0 0.0
    %2863 = vmatprep.subr.mxu0 0.0
    %2864 = vmatpush1.msra.mxu0 0.0
    %2865 = vmatprep.subr.mxu0 0.0
    %2866 = vmatpush1.msra.mxu0 0.0
    %2867 = vmatprep.subr.mxu0 0.0
    %2868 = vmatpush1.msra.mxu0 0.0
    %2869 = vmatprep.subr.mxu0 0.0
    %2870 = vmatpush1.msra.mxu0 0.0
    %2871 = vmatprep.subr.mxu0 0.0
    %2872 = vmatpush1.msra.mxu0 0.0
    %2873 = vmatprep.subr.mxu0 0.0
    %2874 = vmatpush1.msra.mxu0 0.0
    %2875 = vmatprep.subr.mxu0 0.0
    %2876 = vmatpush1.msra.mxu0 0.0
    %2877 = vmatprep.subr.mxu0 0.0
    %2878 = vmatpush1.msra.mxu0 0.0
    %2879 = vmatprep.subr.mxu0 0.0
    %2880 = vmatpush1.msra.mxu0 0.0
    %2881 = vmatprep.subr.mxu0 0.0
    %2882 = vmatpush1.msra.mxu0 0.0
    %2883 = vmatprep.subr.mxu0 0.0
    %2884 = vmatpush1.msra.mxu0 0.0
    %2885 = vmatprep.subr.mxu0 0.0
    %2886 = vmatpush1.msra.mxu0 0.0
    %2887 = vmatprep.subr.mxu0 0.0
    %2888 = vmatpush1.msra.mxu0 0.0
    %2889 = vmatprep.subr.mxu0 0.0
    %2890 = vmatpush1.msra.mxu0 0.0
    %2891 = vmatprep.subr.mxu0 0.0
    %2892 = vmatpush1.msra.mxu0 0.0
    %2893 = vmatprep.subr.mxu0 0.0
    %2894 = vmatpush1.msra.mxu0 0.0
    %2895 = vmatprep.subr.mxu0 0.0
    %2896 = vmatpush1.msra.mxu0 0.0
    %2897 = vmatprep.subr.mxu0 0.0
    %2898 = vmatpush1.msra.mxu0 0.0
    %2899 = vmatprep.subr.mxu0 0.0
    %2900 = vmatpush1.msra.mxu0 0.0
    %2901 = vmatprep.subr.mxu0 0.0
    %2902 = vmatpush1.msra.mxu0 0.0
    %2903 = vmatprep.subr.mxu0 0.0
    %2904 = vmatpush1.msra.mxu0 0.0
    %2905 = vmatprep.subr.mxu0 0.0
    %2906 = vmatpush1.msra.mxu0 0.0
    %2907 = vmatprep.subr.mxu0 0.0
    %2908 = vmatpush1.msra.mxu0 0.0
    %2909 = vmatprep.subr.mxu0 0.0
    %2910 = vmatpush1.msra.mxu0 0.0
    %2911 = vmatprep.subr.mxu0 0.0
    %2912 = vmatpush1.msra.mxu0 0.0
    %2913 = vmatprep.mubr.f32.mxu0 0.0
    %2914 = vmatmul.mubr.f32.gmra.mrb[0].mxu0 %v2844
    %v2915 = vpop.f32.mrb[0].mxu0
    %v2916 = vadd.f32 0.0, %v2915
    %v2917 = vpop.f32.mrb[0].mxu0
    %2918 = vdwg.mxu0
    %v2919 = vmul.f32 %v2916, 0.25
    %v2920 = vsel %vm698, %v2422, 0
    %2922 = vmatprep.subr.mxu0 0.0
    %2923 = vmatpush1.xpose.msra.mxu0 %v2920
    %2924 = vmatprep.subr.mxu0 0.0
    %2925 = vmatpush1.xpose.msra.mxu0 0.0
    %2926 = vmatprep.subr.mxu0 0.0
    %2927 = vmatpush1.xpose.msra.mxu0 0.0
    %2928 = vmatprep.subr.mxu0 0.0
    %2929 = vmatpush1.xpose.msra.mxu0 0.0
    %2930 = vmatprep.subr.mxu0 0.0
    %2931 = vmatpush1.xpose.msra.mxu0 0.0
    %2932 = vmatprep.subr.mxu0 0.0
    %2933 = vmatpush1.xpose.msra.mxu0 0.0
    %2934 = vmatprep.subr.mxu0 0.0
    %2935 = vmatpush1.xpose.msra.mxu0 0.0
    %2936 = vmatprep.subr.mxu0 0.0
    %2937 = vmatpush1.xpose.msra.mxu0 0.0
    %2938 = vmatprep.subr.mxu0 0.0
    %2939 = vmatpush1.xpose.msra.mxu0 0.0
    %2940 = vmatprep.subr.mxu0 0.0
    %2941 = vmatpush1.xpose.msra.mxu0 0.0
    %2942 = vmatprep.subr.mxu0 0.0
    %2943 = vmatpush1.xpose.msra.mxu0 0.0
    %2944 = vmatprep.subr.mxu0 0.0
    %2945 = vmatpush1.xpose.msra.mxu0 0.0
    %2946 = vmatprep.subr.mxu0 0.0
    %2947 = vmatpush1.xpose.msra.mxu0 0.0
    %2948 = vmatprep.subr.mxu0 0.0
    %2949 = vmatpush1.xpose.msra.mxu0 0.0
    %2950 = vmatprep.subr.mxu0 0.0
    %2951 = vmatpush1.xpose.msra.mxu0 0.0
    %2952 = vmatprep.subr.mxu0 0.0
    %2953 = vmatpush1.xpose.msra.mxu0 0.0
    %2954 = vmatprep.subr.mxu0 0.0
    %2955 = vmatpush1.xpose.msra.mxu0 0.0
    %2956 = vmatprep.subr.mxu0 0.0
    %2957 = vmatpush1.xpose.msra.mxu0 0.0
    %2958 = vmatprep.subr.mxu0 0.0
    %2959 = vmatpush1.xpose.msra.mxu0 0.0
    %2960 = vmatprep.subr.mxu0 0.0
    %2961 = vmatpush1.xpose.msra.mxu0 0.0
    %2962 = vmatprep.subr.mxu0 0.0
    %2963 = vmatpush1.xpose.msra.mxu0 0.0
    %2964 = vmatprep.subr.mxu0 0.0
    %2965 = vmatpush1.xpose.msra.mxu0 0.0
    %2966 = vmatprep.subr.mxu0 0.0
    %2967 = vmatpush1.xpose.msra.mxu0 0.0
    %2968 = vmatprep.subr.mxu0 0.0
    %2969 = vmatpush1.xpose.msra.mxu0 0.0
    %2970 = vmatprep.subr.mxu0 0.0
    %2971 = vmatpush1.xpose.msra.mxu0 0.0
    %2972 = vmatprep.subr.mxu0 0.0
    %2973 = vmatpush1.xpose.msra.mxu0 0.0
    %2974 = vmatprep.subr.mxu0 0.0
    %2975 = vmatpush1.xpose.msra.mxu0 0.0
    %2976 = vmatprep.subr.mxu0 0.0
    %2977 = vmatpush1.xpose.msra.mxu0 0.0
    %2978 = vmatprep.subr.mxu0 0.0
    %2979 = vmatpush1.xpose.msra.mxu0 0.0
    %2980 = vmatprep.subr.mxu0 0.0
    %2981 = vmatpush1.xpose.msra.mxu0 0.0
    %2982 = vmatprep.subr.mxu0 0.0
    %2983 = vmatpush1.xpose.msra.mxu0 0.0
    %2984 = vmatprep.subr.mxu0 0.0
    %2985 = vmatpush1.xpose.msra.mxu0 0.0
    %2986 = vmatprep.mubr.f32.mxu0 0.0
    %2987 = vmatmul.mubr.f32.gmra.mrb[0].mxu0 %v2920
    %v2988 = vpop.f32.mrb[0].mxu0
    %v2989 = vadd.f32 0.0, %v2988
    %v2990 = vpop.f32.mrb[0].mxu0
    %2991 = vdwg.mxu0
    %v2993 = vsel %vm2423, %v2989, 0
    %2995 = vmatprep.subr.mxu0 0.0
    %2996 = vmatpush1.msra.mxu0 %v2683
    %2997 = vmatprep.subr.mxu0 0.0
    %2998 = vmatpush1.msra.mxu0 0.0
    %2999 = vmatprep.subr.mxu0 0.0
    %3000 = vmatpush1.msra.mxu0 0.0
    %3001 = vmatprep.subr.mxu0 0.0
    %3002 = vmatpush1.msra.mxu0 0.0
    %3003 = vmatprep.subr.mxu0 0.0
    %3004 = vmatpush1.msra.mxu0 0.0
    %3005 = vmatprep.subr.mxu0 0.0
    %3006 = vmatpush1.msra.mxu0 0.0
    %3007 = vmatprep.subr.mxu0 0.0
    %3008 = vmatpush1.msra.mxu0 0.0
    %3009 = vmatprep.subr.mxu0 0.0
    %3010 = vmatpush1.msra.mxu0 0.0
    %3011 = vmatprep.subr.mxu0 0.0
    %3012 = vmatpush1.msra.mxu0 0.0
    %3013 = vmatprep.subr.mxu0 0.0
    %3014 = vmatpush1.msra.mxu0 0.0
    %3015 = vmatprep.subr.mxu0 0.0
    %3016 = vmatpush1.msra.mxu0 0.0
    %3017 = vmatprep.subr.mxu0 0.0
    %3018 = vmatpush1.msra.mxu0 0.0
    %3019 = vmatprep.subr.mxu0 0.0
    %3020 = vmatpush1.msra.mxu0 0.0
    %3021 = vmatprep.subr.mxu0 0.0
    %3022 = vmatpush1.msra.mxu0 0.0
    %3023 = vmatprep.subr.mxu0 0.0
    %3024 = vmatpush1.msra.mxu0 0.0
    %3025 = vmatprep.subr.mxu0 0.0
    %3026 = vmatpush1.msra.mxu0 0.0
    %3027 = vmatprep.subr.mxu0 0.0
    %3028 = vmatpush1.msra.mxu0 0.0
    %3029 = vmatprep.subr.mxu0 0.0
    %3030 = vmatpush1.msra.mxu0 0.0
    %3031 = vmatprep.subr.mxu0 0.0
    %3032 = vmatpush1.msra.mxu0 0.0
    %3033 = vmatprep.subr.mxu0 0.0
    %3034 = vmatpush1.msra.mxu0 0.0
    %3035 = vmatprep.subr.mxu0 0.0
    %3036 = vmatpush1.msra.mxu0 0.0
    %3037 = vmatprep.subr.mxu0 0.0
    %3038 = vmatpush1.msra.mxu0 0.0
    %3039 = vmatprep.subr.mxu0 0.0
    %3040 = vmatpush1.msra.mxu0 0.0
    %3041 = vmatprep.subr.mxu0 0.0
    %3042 = vmatpush1.msra.mxu0 0.0
    %3043 = vmatprep.subr.mxu0 0.0
    %3044 = vmatpush1.msra.mxu0 0.0
    %3045 = vmatprep.subr.mxu0 0.0
    %3046 = vmatpush1.msra.mxu0 0.0
    %3047 = vmatprep.subr.mxu0 0.0
    %3048 = vmatpush1.msra.mxu0 0.0
    %3049 = vmatprep.subr.mxu0 0.0
    %3050 = vmatpush1.msra.mxu0 0.0
    %3051 = vmatprep.subr.mxu0 0.0
    %3052 = vmatpush1.msra.mxu0 0.0
    %3053 = vmatprep.subr.mxu0 0.0
    %3054 = vmatpush1.msra.mxu0 0.0
    %3055 = vmatprep.subr.mxu0 0.0
    %3056 = vmatpush1.msra.mxu0 0.0
    %3057 = vmatprep.subr.mxu0 0.0
    %3058 = vmatpush1.msra.mxu0 0.0
    %3059 = vmatprep.mubr.f32.mxu0 0.0
    %3060 = vmatmul.mubr.f32.gmra.mrb[0].mxu0 %v2993
    %v3061 = vpop.f32.mrb[0].mxu0
    %v3062 = vadd.f32 0.0, %v3061
    %v3063 = vpop.f32.mrb[0].mxu0
    %3064 = vdwg.mxu0
    %s3065 = scalar_lea.vmem %s3, 8
    %v3066 = vld [vmem:[%s3065] sm:$0x1f]
    %v3067 = vmul.f32 %v3062, %v3066
    %v3068 = vsel %vm2757, %v3067, -inf
    %3069 = vmax.xlane.f32.xlu0 %v3068
    %v3070 = vpop.xlane.xlu0 %3069
    %v3071 = vsub.f32 %v3067, %v3070
    %v3072 = vmul.f32 %v3071, 1.442695
    %v3073 = vpow.pop %v3072
    %v3075 = vsel %vm2764, %v3073, 0
    %3077 = vmatprep.subr.mxu0 0.0
    %3078 = vmatpush1.msra.mxu0 %v2372
    %3079 = vmatprep.subr.mxu0 0.0
    %3080 = vmatpush1.msra.mxu0 %v2373
    %3081 = vmatprep.subr.mxu0 0.0
    %3082 = vmatpush1.msra.mxu0 %v2769
    %3083 = vmatprep.subr.mxu0 0.0
    %3084 = vmatpush1.msra.mxu0 0.0
    %3085 = vmatprep.subr.mxu0 0.0
    %3086 = vmatpush1.msra.mxu0 0.0
    %3087 = vmatprep.subr.mxu0 0.0
    %3088 = vmatpush1.msra.mxu0 0.0
    %3089 = vmatprep.subr.mxu0 0.0
    %3090 = vmatpush1.msra.mxu0 0.0
    %3091 = vmatprep.subr.mxu0 0.0
    %3092 = vmatpush1.msra.mxu0 0.0
    %3093 = vmatprep.subr.mxu0 0.0
    %3094 = vmatpush1.msra.mxu0 0.0
    %3095 = vmatprep.subr.mxu0 0.0
    %3096 = vmatpush1.msra.mxu0 0.0
    %3097 = vmatprep.subr.mxu0 0.0
    %3098 = vmatpush1.msra.mxu0 0.0
    %3099 = vmatprep.subr.mxu0 0.0
    %3100 = vmatpush1.msra.mxu0 0.0
    %3101 = vmatprep.subr.mxu0 0.0
    %3102 = vmatpush1.msra.mxu0 0.0
    %3103 = vmatprep.subr.mxu0 0.0
    %3104 = vmatpush1.msra.mxu0 0.0
    %3105 = vmatprep.subr.mxu0 0.0
    %3106 = vmatpush1.msra.mxu0 0.0
    %3107 = vmatprep.subr.mxu0 0.0
    %3108 = vmatpush1.msra.mxu0 0.0
    %3109 = vmatprep.subr.mxu0 0.0
    %3110 = vmatpush1.msra.mxu0 0.0
    %3111 = vmatprep.subr.mxu0 0.0
    %3112 = vmatpush1.msra.mxu0 0.0
    %3113 = vmatprep.subr.mxu0 0.0
    %3114 = vmatpush1.msra.mxu0 0.0
    %3115 = vmatprep.subr.mxu0 0.0
    %3116 = vmatpush1.msra.mxu0 0.0
    %3117 = vmatprep.subr.mxu0 0.0
    %3118 = vmatpush1.msra.mxu0 0.0
    %3119 = vmatprep.subr.mxu0 0.0
    %3120 = vmatpush1.msra.mxu0 0.0
    %3121 = vmatprep.subr.mxu0 0.0
    %3122 = vmatpush1.msra.mxu0 0.0
    %3123 = vmatprep.subr.mxu0 0.0
    %3124 = vmatpush1.msra.mxu0 0.0
    %3125 = vmatprep.subr.mxu0 0.0
    %3126 = vmatpush1.msra.mxu0 0.0
    %3127 = vmatprep.subr.mxu0 0.0
    %3128 = vmatpush1.msra.mxu0 0.0
    %3129 = vmatprep.subr.mxu0 0.0
    %3130 = vmatpush1.msra.mxu0 0.0
    %3131 = vmatprep.subr.mxu0 0.0
    %3132 = vmatpush1.msra.mxu0 0.0
    %3133 = vmatprep.subr.mxu0 0.0
    %3134 = vmatpush1.msra.mxu0 0.0
    %3135 = vmatprep.subr.mxu0 0.0
    %3136 = vmatpush1.msra.mxu0 0.0
    %3137 = vmatprep.subr.mxu0 0.0
    %3138 = vmatpush1.msra.mxu0 0.0
    %3139 = vmatprep.subr.mxu0 0.0
    %3140 = vmatpush1.msra.mxu0 0.0
    %3141 = vmatprep.mubr.f32.mxu0 0.0
    %3142 = vmatmul.mubr.f32.gmra.mrb[0].mxu0 %v3075
    %v3143 = vpop.f32.mrb[0].mxu0
    %v3144 = vadd.f32 0.0, %v3143
    %v3145 = vpop.f32.mrb[0].mxu0
    %3146 = vdwg.mxu0
    %v3147 = vrcp.pop %v3144
    %v3148 = vmul.f32 %v3073, %v3147
    %v3150 = vsel %vm2764, %v3148, 0
    %3152 = vmatprep.subr.mxu0 0.0
    %3153 = vmatpush1.msra.mxu0 %v2594
    %3154 = vmatprep.subr.mxu0 0.0
    %3155 = vmatpush1.msra.mxu0 %v2599
    %3156 = vmatprep.subr.mxu0 0.0
    %3157 = vmatpush1.msra.mxu0 %v2847
    %3158 = vmatprep.subr.mxu0 0.0
    %3159 = vmatpush1.msra.mxu0 0.0
    %3160 = vmatprep.subr.mxu0 0.0
    %3161 = vmatpush1.msra.mxu0 0.0
    %3162 = vmatprep.subr.mxu0 0.0
    %3163 = vmatpush1.msra.mxu0 0.0
    %3164 = vmatprep.subr.mxu0 0.0
    %3165 = vmatpush1.msra.mxu0 0.0
    %3166 = vmatprep.subr.mxu0 0.0
    %3167 = vmatpush1.msra.mxu0 0.0
    %3168 = vmatprep.subr.mxu0 0.0
    %3169 = vmatpush1.msra.mxu0 0.0
    %3170 = vmatprep.subr.mxu0 0.0
    %3171 = vmatpush1.msra.mxu0 0.0
    %3172 = vmatprep.subr.mxu0 0.0
    %3173 = vmatpush1.msra.mxu0 0.0
    %3174 = vmatprep.subr.mxu0 0.0
    %3175 = vmatpush1.msra.mxu0 0.0
    %3176 = vmatprep.subr.mxu0 0.0
    %3177 = vmatpush1.msra.mxu0 0.0
    %3178 = vmatprep.subr.mxu0 0.0
    %3179 = vmatpush1.msra.mxu0 0.0
    %3180 = vmatprep.subr.mxu0 0.0
    %3181 = vmatpush1.msra.mxu0 0.0
    %3182 = vmatprep.subr.mxu0 0.0
    %3183 = vmatpush1.msra.mxu0 0.0
    %3184 = vmatprep.subr.mxu0 0.0
    %3185 = vmatpush1.msra.mxu0 0.0
    %3186 = vmatprep.subr.mxu0 0.0
    %3187 = vmatpush1.msra.mxu0 0.0
    %3188 = vmatprep.subr.mxu0 0.0
    %3189 = vmatpush1.msra.mxu0 0.0
    %3190 = vmatprep.subr.mxu0 0.0
    %3191 = vmatpush1.msra.mxu0 0.0
    %3192 = vmatprep.subr.mxu0 0.0
    %3193 = vmatpush1.msra.mxu0 0.0
    %3194 = vmatprep.subr.mxu0 0.0
    %3195 = vmatpush1.msra.mxu0 0.0
    %3196 = vmatprep.subr.mxu0 0.0
    %3197 = vmatpush1.msra.mxu0 0.0
    %3198 = vmatprep.subr.mxu0 0.0
    %3199 = vmatpush1.msra.mxu0 0.0
    %3200 = vmatprep.subr.mxu0 0.0
    %3201 = vmatpush1.msra.mxu0 0.0
    %3202 = vmatprep.subr.mxu0 0.0
    %3203 = vmatpush1.msra.mxu0 0.0
    %3204 = vmatprep.subr.mxu0 0.0
    %3205 = vmatpush1.msra.mxu0 0.0
    %3206 = vmatprep.subr.mxu0 0.0
    %3207 = vmatpush1.msra.mxu0 0.0
    %3208 = vmatprep.subr.mxu0 0.0
    %3209 = vmatpush1.msra.mxu0 0.0
    %3210 = vmatprep.subr.mxu0 0.0
    %3211 = vmatpush1.msra.mxu0 0.0
    %3212 = vmatprep.subr.mxu0 0.0
    %3213 = vmatpush1.msra.mxu0 0.0
    %3214 = vmatprep.subr.mxu0 0.0
    %3215 = vmatpush1.msra.mxu0 0.0
    %3216 = vmatprep.mubr.f32.mxu0 0.0
    %3217 = vmatmul.mubr.f32.gmra.mrb[0].mxu0 %v3150
    %v3218 = vpop.f32.mrb[0].mxu0
    %v3219 = vadd.f32 0.0, %v3218
    %v3220 = vpop.f32.mrb[0].mxu0
    %3221 = vdwg.mxu0
    %v3222 = vmul.f32 %v3219, 0.25
    %v3224 = vsel %vm2433, %v3222, 0
    %3226 = vmatprep.subr.mxu0 0.0
    %3227 = vmatpush1.msra.mxu0 %v3224
    %3228 = vmatprep.subr.mxu0 0.0
    %3229 = vmatpush1.msra.mxu0 0.0
    %3230 = vmatprep.subr.mxu0 0.0
    %3231 = vmatpush1.msra.mxu0 0.0
    %3232 = vmatprep.subr.mxu0 0.0
    %3233 = vmatpush1.msra.mxu0 0.0
    %3234 = vmatprep.subr.mxu0 0.0
    %3235 = vmatpush1.msra.mxu0 0.0
    %3236 = vmatprep.subr.mxu0 0.0
    %3237 = vmatpush1.msra.mxu0 0.0
    %3238 = vmatprep.subr.mxu0 0.0
    %3239 = vmatpush1.msra.mxu0 0.0
    %3240 = vmatprep.subr.mxu0 0.0
    %3241 = vmatpush1.msra.mxu0 0.0
    %3242 = vmatprep.subr.mxu0 0.0
    %3243 = vmatpush1.msra.mxu0 0.0
    %3244 = vmatprep.subr.mxu0 0.0
    %3245 = vmatpush1.msra.mxu0 0.0
    %3246 = vmatprep.subr.mxu0 0.0
    %3247 = vmatpush1.msra.mxu0 0.0
    %3248 = vmatprep.subr.mxu0 0.0
    %3249 = vmatpush1.msra.mxu0 0.0
    %3250 = vmatprep.subr.mxu0 0.0
    %3251 = vmatpush1.msra.mxu0 0.0
    %3252 = vmatprep.subr.mxu0 0.0
    %3253 = vmatpush1.msra.mxu0 0.0
    %3254 = vmatprep.subr.mxu0 0.0
    %3255 = vmatpush1.msra.mxu0 0.0
    %3256 = vmatprep.subr.mxu0 0.0
    %3257 = vmatpush1.msra.mxu0 0.0
    %3258 = vmatprep.subr.mxu0 0.0
    %3259 = vmatpush1.msra.mxu0 0.0
    %3260 = vmatprep.subr.mxu0 0.0
    %3261 = vmatpush1.msra.mxu0 0.0
    %3262 = vmatprep.subr.mxu0 0.0
    %3263 = vmatpush1.msra.mxu0 0.0
    %3264 = vmatprep.subr.mxu0 0.0
    %3265 = vmatpush1.msra.mxu0 0.0
    %3266 = vmatprep.subr.mxu0 0.0
    %3267 = vmatpush1.msra.mxu0 0.0
    %3268 = vmatprep.subr.mxu0 0.0
    %3269 = vmatpush1.msra.mxu0 0.0
    %3270 = vmatprep.subr.mxu0 0.0
    %3271 = vmatpush1.msra.mxu0 0.0
    %3272 = vmatprep.subr.mxu0 0.0
    %3273 = vmatpush1.msra.mxu0 0.0
    %3274 = vmatprep.subr.mxu0 0.0
    %3275 = vmatpush1.msra.mxu0 0.0
    %3276 = vmatprep.subr.mxu0 0.0
    %3277 = vmatpush1.msra.mxu0 0.0
    %3278 = vmatprep.subr.mxu0 0.0
    %3279 = vmatpush1.msra.mxu0 0.0
    %3280 = vmatprep.subr.mxu0 0.0
    %3281 = vmatpush1.msra.mxu0 0.0
    %3282 = vmatprep.subr.mxu0 0.0
    %3283 = vmatpush1.msra.mxu0 0.0
    %3284 = vmatprep.subr.mxu0 0.0
    %3285 = vmatpush1.msra.mxu0 0.0
    %3286 = vmatprep.subr.mxu0 0.0
    %3287 = vmatpush1.msra.mxu0 0.0
    %3288 = vmatprep.subr.mxu0 0.0
    %3289 = vmatpush1.msra.mxu0 0.0
    %3290 = vmatprep.mubr.f32.mxu0 0.0
    %3291 = vmatmul.mubr.f32.gmra.mrb[0].mxu0 %v2425
    %v3292 = vpop.f32.mrb[0].mxu0
    %v3293 = vadd.f32 0.0, %v3292
    %v3294 = vpop.f32.mrb[0].mxu0
    %3295 = vmatprep.mubr.f32.mxu0 0.0
    %3296 = vmatmul.mubr.f32.gmra.mrb[0].mxu0 %v2428
    %v3297 = vpop.f32.mrb[0].mxu0
    %v3298 = vadd.f32 0.0, %v3297
    %v3299 = vpop.f32.mrb[0].mxu0
    %3300 = vmatprep.mubr.f32.mxu0 0.0
    %3301 = vmatmul.mubr.f32.gmra.mrb[0].mxu0 %v2431
    %v3302 = vpop.f32.mrb[0].mxu0
    %v3303 = vadd.f32 0.0, %v3302
    %v3304 = vpop.f32.mrb[0].mxu0
    %3305 = vdwg.mxu0
    %v3307 = vsel %vm2433, %v2919, 0
    %3309 = vmatprep.subr.mxu0 0.0
    %3310 = vmatpush1.msra.mxu0 %v3307
    %3311 = vmatprep.subr.mxu0 0.0
    %3312 = vmatpush1.msra.mxu0 0.0
    %3313 = vmatprep.subr.mxu0 0.0
    %3314 = vmatpush1.msra.mxu0 0.0
    %3315 = vmatprep.subr.mxu0 0.0
    %3316 = vmatpush1.msra.mxu0 0.0
    %3317 = vmatprep.subr.mxu0 0.0
    %3318 = vmatpush1.msra.mxu0 0.0
    %3319 = vmatprep.subr.mxu0 0.0
    %3320 = vmatpush1.msra.mxu0 0.0
    %3321 = vmatprep.subr.mxu0 0.0
    %3322 = vmatpush1.msra.mxu0 0.0
    %3323 = vmatprep.subr.mxu0 0.0
    %3324 = vmatpush1.msra.mxu0 0.0
    %3325 = vmatprep.subr.mxu0 0.0
    %3326 = vmatpush1.msra.mxu0 0.0
    %3327 = vmatprep.subr.mxu0 0.0
    %3328 = vmatpush1.msra.mxu0 0.0
    %3329 = vmatprep.subr.mxu0 0.0
    %3330 = vmatpush1.msra.mxu0 0.0
    %3331 = vmatprep.subr.mxu0 0.0
    %3332 = vmatpush1.msra.mxu0 0.0
    %3333 = vmatprep.subr.mxu0 0.0
    %3334 = vmatpush1.msra.mxu0 0.0
    %3335 = vmatprep.subr.mxu0 0.0
    %3336 = vmatpush1.msra.mxu0 0.0
    %3337 = vmatprep.subr.mxu0 0.0
    %3338 = vmatpush1.msra.mxu0 0.0
    %3339 = vmatprep.subr.mxu0 0.0
    %3340 = vmatpush1.msra.mxu0 0.0
    %3341 = vmatprep.subr.mxu0 0.0
    %3342 = vmatpush1.msra.mxu0 0.0
    %3343 = vmatprep.subr.mxu0 0.0
    %3344 = vmatpush1.msra.mxu0 0.0
    %3345 = vmatprep.subr.mxu0 0.0
    %3346 = vmatpush1.msra.mxu0 0.0
    %3347 = vmatprep.subr.mxu0 0.0
    %3348 = vmatpush1.msra.mxu0 0.0
    %3349 = vmatprep.subr.mxu0 0.0
    %3350 = vmatpush1.msra.mxu0 0.0
    %3351 = vmatprep.subr.mxu0 0.0
    %3352 = vmatpush1.msra.mxu0 0.0
    %3353 = vmatprep.subr.mxu0 0.0
    %3354 = vmatpush1.msra.mxu0 0.0
    %3355 = vmatprep.subr.mxu0 0.0
    %3356 = vmatpush1.msra.mxu0 0.0
    %3357 = vmatprep.subr.mxu0 0.0
    %3358 = vmatpush1.msra.mxu0 0.0
    %3359 = vmatprep.subr.mxu0 0.0
    %3360 = vmatpush1.msra.mxu0 0.0
    %3361 = vmatprep.subr.mxu0 0.0
    %3362 = vmatpush1.msra.mxu0 0.0
    %3363 = vmatprep.subr.mxu0 0.0
    %3364 = vmatpush1.msra.mxu0 0.0
    %3365 = vmatprep.subr.mxu0 0.0
    %3366 = vmatpush1.msra.mxu0 0.0
    %3367 = vmatprep.subr.mxu0 0.0
    %3368 = vmatpush1.msra.mxu0 0.0
    %3369 = vmatprep.subr.mxu0 0.0
    %3370 = vmatpush1.msra.mxu0 0.0
    %3371 = vmatprep.subr.mxu0 0.0
    %3372 = vmatpush1.msra.mxu0 0.0
    %3373 = vmatprep.mubr.f32.mxu0 0.0
    %3374 = vmatmul.mubr.f32.gmra.mrb[0].mxu0 %v2517
    %v3375 = vpop.f32.mrb[0].mxu0
    %v3376 = vadd.f32 %v3293, %v3375
    %v3377 = vpop.f32.mrb[0].mxu0
    %3378 = vmatprep.mubr.f32.mxu0 0.0
    %3379 = vmatmul.mubr.f32.gmra.mrb[0].mxu0 %v2520
    %v3380 = vpop.f32.mrb[0].mxu0
    %v3381 = vadd.f32 %v3298, %v3380
    %v3382 = vpop.f32.mrb[0].mxu0
    %3383 = vmatprep.mubr.f32.mxu0 0.0
    %3384 = vmatmul.mubr.f32.gmra.mrb[0].mxu0 %v2523
    %v3385 = vpop.f32.mrb[0].mxu0
    %v3386 = vadd.f32 %v3303, %v3385
    %v3387 = vpop.f32.mrb[0].mxu0
    %3388 = vdwg.mxu0
    %v3389 = vsel %vm698, %v2919, 0
    %3391 = vmatprep.subr.mxu0 0.0
    %3392 = vmatpush1.xpose.msra.mxu0 %v3389
    %3393 = vmatprep.subr.mxu0 0.0
    %3394 = vmatpush1.xpose.msra.mxu0 0.0
    %3395 = vmatprep.subr.mxu0 0.0
    %3396 = vmatpush1.xpose.msra.mxu0 0.0
    %3397 = vmatprep.subr.mxu0 0.0
    %3398 = vmatpush1.xpose.msra.mxu0 0.0
    %3399 = vmatprep.subr.mxu0 0.0
    %3400 = vmatpush1.xpose.msra.mxu0 0.0
    %3401 = vmatprep.subr.mxu0 0.0
    %3402 = vmatpush1.xpose.msra.mxu0 0.0
    %3403 = vmatprep.subr.mxu0 0.0
    %3404 = vmatpush1.xpose.msra.mxu0 0.0
    %3405 = vmatprep.subr.mxu0 0.0
    %3406 = vmatpush1.xpose.msra.mxu0 0.0
    %3407 = vmatprep.subr.mxu0 0.0
    %3408 = vmatpush1.xpose.msra.mxu0 0.0
    %3409 = vmatprep.subr.mxu0 0.0
    %3410 = vmatpush1.xpose.msra.mxu0 0.0
    %3411 = vmatprep.subr.mxu0 0.0
    %3412 = vmatpush1.xpose.msra.mxu0 0.0
    %3413 = vmatprep.subr.mxu0 0.0
    %3414 = vmatpush1.xpose.msra.mxu0 0.0
    %3415 = vmatprep.subr.mxu0 0.0
    %3416 = vmatpush1.xpose.msra.mxu0 0.0
    %3417 = vmatprep.subr.mxu0 0.0
    %3418 = vmatpush1.xpose.msra.mxu0 0.0
    %3419 = vmatprep.subr.mxu0 0.0
    %3420 = vmatpush1.xpose.msra.mxu0 0.0
    %3421 = vmatprep.subr.mxu0 0.0
    %3422 = vmatpush1.xpose.msra.mxu0 0.0
    %3423 = vmatprep.subr.mxu0 0.0
    %3424 = vmatpush1.xpose.msra.mxu0 0.0
    %3425 = vmatprep.subr.mxu0 0.0
    %3426 = vmatpush1.xpose.msra.mxu0 0.0
    %3427 = vmatprep.subr.mxu0 0.0
    %3428 = vmatpush1.xpose.msra.mxu0 0.0
    %3429 = vmatprep.subr.mxu0 0.0
    %3430 = vmatpush1.xpose.msra.mxu0 0.0
    %3431 = vmatprep.subr.mxu0 0.0
    %3432 = vmatpush1.xpose.msra.mxu0 0.0
    %3433 = vmatprep.subr.mxu0 0.0
    %3434 = vmatpush1.xpose.msra.mxu0 0.0
    %3435 = vmatprep.subr.mxu0 0.0
    %3436 = vmatpush1.xpose.msra.mxu0 0.0
    %3437 = vmatprep.subr.mxu0 0.0
    %3438 = vmatpush1.xpose.msra.mxu0 0.0
    %3439 = vmatprep.subr.mxu0 0.0
    %3440 = vmatpush1.xpose.msra.mxu0 0.0
    %3441 = vmatprep.subr.mxu0 0.0
    %3442 = vmatpush1.xpose.msra.mxu0 0.0
    %3443 = vmatprep.subr.mxu0 0.0
    %3444 = vmatpush1.xpose.msra.mxu0 0.0
    %3445 = vmatprep.subr.mxu0 0.0
    %3446 = vmatpush1.xpose.msra.mxu0 0.0
    %3447 = vmatprep.subr.mxu0 0.0
    %3448 = vmatpush1.xpose.msra.mxu0 0.0
    %3449 = vmatprep.subr.mxu0 0.0
    %3450 = vmatpush1.xpose.msra.mxu0 0.0
    %3451 = vmatprep.subr.mxu0 0.0
    %3452 = vmatpush1.xpose.msra.mxu0 0.0
    %3453 = vmatprep.subr.mxu0 0.0
    %3454 = vmatpush1.xpose.msra.mxu0 0.0
    %3455 = vmatprep.mubr.f32.mxu0 0.0
    %3456 = vmatmul.mubr.f32.gmra.mrb[0].mxu0 %v3389
    %v3457 = vpop.f32.mrb[0].mxu0
    %v3458 = vadd.f32 0.0, %v3457
    %v3459 = vpop.f32.mrb[0].mxu0
    %3460 = vdwg.mxu0
    %v3462 = vsel %vm2423, %v3458, 0
    %3464 = vmatprep.subr.mxu0 0.0
    %3465 = vmatpush1.msra.mxu0 %v2683
    %3466 = vmatprep.subr.mxu0 0.0
    %3467 = vmatpush1.msra.mxu0 0.0
    %3468 = vmatprep.subr.mxu0 0.0
    %3469 = vmatpush1.msra.mxu0 0.0
    %3470 = vmatprep.subr.mxu0 0.0
    %3471 = vmatpush1.msra.mxu0 0.0
    %3472 = vmatprep.subr.mxu0 0.0
    %3473 = vmatpush1.msra.mxu0 0.0
    %3474 = vmatprep.subr.mxu0 0.0
    %3475 = vmatpush1.msra.mxu0 0.0
    %3476 = vmatprep.subr.mxu0 0.0
    %3477 = vmatpush1.msra.mxu0 0.0
    %3478 = vmatprep.subr.mxu0 0.0
    %3479 = vmatpush1.msra.mxu0 0.0
    %3480 = vmatprep.subr.mxu0 0.0
    %3481 = vmatpush1.msra.mxu0 0.0
    %3482 = vmatprep.subr.mxu0 0.0
    %3483 = vmatpush1.msra.mxu0 0.0
    %3484 = vmatprep.subr.mxu0 0.0
    %3485 = vmatpush1.msra.mxu0 0.0
    %3486 = vmatprep.subr.mxu0 0.0
    %3487 = vmatpush1.msra.mxu0 0.0
    %3488 = vmatprep.subr.mxu0 0.0
    %3489 = vmatpush1.msra.mxu0 0.0
    %3490 = vmatprep.subr.mxu0 0.0
    %3491 = vmatpush1.msra.mxu0 0.0
    %3492 = vmatprep.subr.mxu0 0.0
    %3493 = vmatpush1.msra.mxu0 0.0
    %3494 = vmatprep.subr.mxu0 0.0
    %3495 = vmatpush1.msra.mxu0 0.0
    %3496 = vmatprep.subr.mxu0 0.0
    %3497 = vmatpush1.msra.mxu0 0.0
    %3498 = vmatprep.subr.mxu0 0.0
    %3499 = vmatpush1.msra.mxu0 0.0
    %3500 = vmatprep.subr.mxu0 0.0
    %3501 = vmatpush1.msra.mxu0 0.0
    %3502 = vmatprep.subr.mxu0 0.0
    %3503 = vmatpush1.msra.mxu0 0.0
    %3504 = vmatprep.subr.mxu0 0.0
    %3505 = vmatpush1.msra.mxu0 0.0
    %3506 = vmatprep.subr.mxu0 0.0
    %3507 = vmatpush1.msra.mxu0 0.0
    %3508 = vmatprep.subr.mxu0 0.0
    %3509 = vmatpush1.msra.mxu0 0.0
    %3510 = vmatprep.subr.mxu0 0.0
    %3511 = vmatpush1.msra.mxu0 0.0
    %3512 = vmatprep.subr.mxu0 0.0
    %3513 = vmatpush1.msra.mxu0 0.0
    %3514 = vmatprep.subr.mxu0 0.0
    %3515 = vmatpush1.msra.mxu0 0.0
    %3516 = vmatprep.subr.mxu0 0.0
    %3517 = vmatpush1.msra.mxu0 0.0
    %3518 = vmatprep.subr.mxu0 0.0
    %3519 = vmatpush1.msra.mxu0 0.0
    %3520 = vmatprep.subr.mxu0 0.0
    %3521 = vmatpush1.msra.mxu0 0.0
    %3522 = vmatprep.subr.mxu0 0.0
    %3523 = vmatpush1.msra.mxu0 0.0
    %3524 = vmatprep.subr.mxu0 0.0
    %3525 = vmatpush1.msra.mxu0 0.0
    %3526 = vmatprep.subr.mxu0 0.0
    %3527 = vmatpush1.msra.mxu0 0.0
    %3528 = vmatprep.mubr.f32.mxu0 0.0
    %3529 = vmatmul.mubr.f32.gmra.mrb[0].mxu0 %v3462
    %v3530 = vpop.f32.mrb[0].mxu0
    %v3531 = vadd.f32 0.0, %v3530
    %v3532 = vpop.f32.mrb[0].mxu0
    %3533 = vdwg.mxu0
    %s3534 = scalar_lea.vmem %s3, 16
    %v3535 = vld [vmem:[%s3534] sm:$0x1f]
    %v3536 = vmul.f32 %v3531, %v3535
    %v3537 = vsel %vm2757, %v3536, -inf
    %3538 = vmax.xlane.f32.xlu0 %v3537
    %v3539 = vpop.xlane.xlu0 %3538
    %v3540 = vsub.f32 %v3536, %v3539
    %v3541 = vmul.f32 %v3540, 1.442695
    %v3542 = vpow.pop %v3541
    %v3544 = vsel %vm2764, %v3542, 0
    %3546 = vmatprep.subr.mxu0 0.0
    %3547 = vmatpush1.msra.mxu0 %v2372
    %3548 = vmatprep.subr.mxu0 0.0
    %3549 = vmatpush1.msra.mxu0 %v2373
    %3550 = vmatprep.subr.mxu0 0.0
    %3551 = vmatpush1.msra.mxu0 %v2769
    %3552 = vmatprep.subr.mxu0 0.0
    %3553 = vmatpush1.msra.mxu0 0.0
    %3554 = vmatprep.subr.mxu0 0.0
    %3555 = vmatpush1.msra.mxu0 0.0
    %3556 = vmatprep.subr.mxu0 0.0
    %3557 = vmatpush1.msra.mxu0 0.0
    %3558 = vmatprep.subr.mxu0 0.0
    %3559 = vmatpush1.msra.mxu0 0.0
    %3560 = vmatprep.subr.mxu0 0.0
    %3561 = vmatpush1.msra.mxu0 0.0
    %3562 = vmatprep.subr.mxu0 0.0
    %3563 = vmatpush1.msra.mxu0 0.0
    %3564 = vmatprep.subr.mxu0 0.0
    %3565 = vmatpush1.msra.mxu0 0.0
    %3566 = vmatprep.subr.mxu0 0.0
    %3567 = vmatpush1.msra.mxu0 0.0
    %3568 = vmatprep.subr.mxu0 0.0
    %3569 = vmatpush1.msra.mxu0 0.0
    %3570 = vmatprep.subr.mxu0 0.0
    %3571 = vmatpush1.msra.mxu0 0.0
    %3572 = vmatprep.subr.mxu0 0.0
    %3573 = vmatpush1.msra.mxu0 0.0
    %3574 = vmatprep.subr.mxu0 0.0
    %3575 = vmatpush1.msra.mxu0 0.0
    %3576 = vmatprep.subr.mxu0 0.0
    %3577 = vmatpush1.msra.mxu0 0.0
    %3578 = vmatprep.subr.mxu0 0.0
    %3579 = vmatpush1.msra.mxu0 0.0
    %3580 = vmatprep.subr.mxu0 0.0
    %3581 = vmatpush1.msra.mxu0 0.0
    %3582 = vmatprep.subr.mxu0 0.0
    %3583 = vmatpush1.msra.mxu0 0.0
    %3584 = vmatprep.subr.mxu0 0.0
    %3585 = vmatpush1.msra.mxu0 0.0
    %3586 = vmatprep.subr.mxu0 0.0
    %3587 = vmatpush1.msra.mxu0 0.0
    %3588 = vmatprep.subr.mxu0 0.0
    %3589 = vmatpush1.msra.mxu0 0.0
    %3590 = vmatprep.subr.mxu0 0.0
    %3591 = vmatpush1.msra.mxu0 0.0
    %3592 = vmatprep.subr.mxu0 0.0
    %3593 = vmatpush1.msra.mxu0 0.0
    %3594 = vmatprep.subr.mxu0 0.0
    %3595 = vmatpush1.msra.mxu0 0.0
    %3596 = vmatprep.subr.mxu0 0.0
    %3597 = vmatpush1.msra.mxu0 0.0
    %3598 = vmatprep.subr.mxu0 0.0
    %3599 = vmatpush1.msra.mxu0 0.0
    %3600 = vmatprep.subr.mxu0 0.0
    %3601 = vmatpush1.msra.mxu0 0.0
    %3602 = vmatprep.subr.mxu0 0.0
    %3603 = vmatpush1.msra.mxu0 0.0
    %3604 = vmatprep.subr.mxu0 0.0
    %3605 = vmatpush1.msra.mxu0 0.0
    %3606 = vmatprep.subr.mxu0 0.0
    %3607 = vmatpush1.msra.mxu0 0.0
    %3608 = vmatprep.subr.mxu0 0.0
    %3609 = vmatpush1.msra.mxu0 0.0
    %3610 = vmatprep.mubr.f32.mxu0 0.0
    %3611 = vmatmul.mubr.f32.gmra.mrb[0].mxu0 %v3544
    %v3612 = vpop.f32.mrb[0].mxu0
    %v3613 = vadd.f32 0.0, %v3612
    %v3614 = vpop.f32.mrb[0].mxu0
    %3615 = vdwg.mxu0
    %v3616 = vrcp.pop %v3613
    %v3617 = vmul.f32 %v3542, %v3616
    %v3619 = vsel %vm2764, %v3617, 0
    %v3622 = vsel %vm154, %v3386, 0
    %3624 = vmatprep.subr.mxu0 0.0
    %3625 = vmatpush1.msra.mxu0 %v3376
    %3626 = vmatprep.subr.mxu0 0.0
    %3627 = vmatpush1.msra.mxu0 %v3381
    %3628 = vmatprep.subr.mxu0 0.0
    %3629 = vmatpush1.msra.mxu0 %v3622
    %3630 = vmatprep.subr.mxu0 0.0
    %3631 = vmatpush1.msra.mxu0 0.0
    %3632 = vmatprep.subr.mxu0 0.0
    %3633 = vmatpush1.msra.mxu0 0.0
    %3634 = vmatprep.subr.mxu0 0.0
    %3635 = vmatpush1.msra.mxu0 0.0
    %3636 = vmatprep.subr.mxu0 0.0
    %3637 = vmatpush1.msra.mxu0 0.0
    %3638 = vmatprep.subr.mxu0 0.0
    %3639 = vmatpush1.msra.mxu0 0.0
    %3640 = vmatprep.subr.mxu0 0.0
    %3641 = vmatpush1.msra.mxu0 0.0
    %3642 = vmatprep.subr.mxu0 0.0
    %3643 = vmatpush1.msra.mxu0 0.0
    %3644 = vmatprep.subr.mxu0 0.0
    %3645 = vmatpush1.msra.mxu0 0.0
    %3646 = vmatprep.subr.mxu0 0.0
    %3647 = vmatpush1.msra.mxu0 0.0
    %3648 = vmatprep.subr.mxu0 0.0
    %3649 = vmatpush1.msra.mxu0 0.0
    %3650 = vmatprep.subr.mxu0 0.0
    %3651 = vmatpush1.msra.mxu0 0.0
    %3652 = vmatprep.subr.mxu0 0.0
    %3653 = vmatpush1.msra.mxu0 0.0
    %3654 = vmatprep.subr.mxu0 0.0
    %3655 = vmatpush1.msra.mxu0 0.0
    %3656 = vmatprep.subr.mxu0 0.0
    %3657 = vmatpush1.msra.mxu0 0.0
    %3658 = vmatprep.subr.mxu0 0.0
    %3659 = vmatpush1.msra.mxu0 0.0
    %3660 = vmatprep.subr.mxu0 0.0
    %3661 = vmatpush1.msra.mxu0 0.0
    %3662 = vmatprep.subr.mxu0 0.0
    %3663 = vmatpush1.msra.mxu0 0.0
    %3664 = vmatprep.subr.mxu0 0.0
    %3665 = vmatpush1.msra.mxu0 0.0
    %3666 = vmatprep.subr.mxu0 0.0
    %3667 = vmatpush1.msra.mxu0 0.0
    %3668 = vmatprep.subr.mxu0 0.0
    %3669 = vmatpush1.msra.mxu0 0.0
    %3670 = vmatprep.subr.mxu0 0.0
    %3671 = vmatpush1.msra.mxu0 0.0
    %3672 = vmatprep.subr.mxu0 0.0
    %3673 = vmatpush1.msra.mxu0 0.0
    %3674 = vmatprep.subr.mxu0 0.0
    %3675 = vmatpush1.msra.mxu0 0.0
    %3676 = vmatprep.subr.mxu0 0.0
    %3677 = vmatpush1.msra.mxu0 0.0
    %3678 = vmatprep.subr.mxu0 0.0
    %3679 = vmatpush1.msra.mxu0 0.0
    %3680 = vmatprep.subr.mxu0 0.0
    %3681 = vmatpush1.msra.mxu0 0.0
    %3682 = vmatprep.subr.mxu0 0.0
    %3683 = vmatpush1.msra.mxu0 0.0
    %3684 = vmatprep.subr.mxu0 0.0
    %3685 = vmatpush1.msra.mxu0 0.0
    %3686 = vmatprep.subr.mxu0 0.0
    %3687 = vmatpush1.msra.mxu0 0.0
    %3688 = vmatprep.mubr.f32.mxu0 0.0
    %3689 = vmatmul.mubr.f32.gmra.mrb[0].mxu0 %v3619
    %v3690 = vpop.f32.mrb[0].mxu0
    %v3691 = vadd.f32 0.0, %v3690
    %v3692 = vpop.f32.mrb[0].mxu0
    %3693 = vdwg.mxu0
    %v3694 = vmul.f32 %v3691, 0.25
    %v3695 = vsel %vm698, %v3222, 0
    %3697 = vmatprep.subr.mxu0 0.0
    %3698 = vmatpush1.xpose.msra.mxu0 %v3695
    %3699 = vmatprep.subr.mxu0 0.0
    %3700 = vmatpush1.xpose.msra.mxu0 0.0
    %3701 = vmatprep.subr.mxu0 0.0
    %3702 = vmatpush1.xpose.msra.mxu0 0.0
    %3703 = vmatprep.subr.mxu0 0.0
    %3704 = vmatpush1.xpose.msra.mxu0 0.0
    %3705 = vmatprep.subr.mxu0 0.0
    %3706 = vmatpush1.xpose.msra.mxu0 0.0
    %3707 = vmatprep.subr.mxu0 0.0
    %3708 = vmatpush1.xpose.msra.mxu0 0.0
    %3709 = vmatprep.subr.mxu0 0.0
    %3710 = vmatpush1.xpose.msra.mxu0 0.0
    %3711 = vmatprep.subr.mxu0 0.0
    %3712 = vmatpush1.xpose.msra.mxu0 0.0
    %3713 = vmatprep.subr.mxu0 0.0
    %3714 = vmatpush1.xpose.msra.mxu0 0.0
    %3715 = vmatprep.subr.mxu0 0.0
    %3716 = vmatpush1.xpose.msra.mxu0 0.0
    %3717 = vmatprep.subr.mxu0 0.0
    %3718 = vmatpush1.xpose.msra.mxu0 0.0
    %3719 = vmatprep.subr.mxu0 0.0
    %3720 = vmatpush1.xpose.msra.mxu0 0.0
    %3721 = vmatprep.subr.mxu0 0.0
    %3722 = vmatpush1.xpose.msra.mxu0 0.0
    %3723 = vmatprep.subr.mxu0 0.0
    %3724 = vmatpush1.xpose.msra.mxu0 0.0
    %3725 = vmatprep.subr.mxu0 0.0
    %3726 = vmatpush1.xpose.msra.mxu0 0.0
    %3727 = vmatprep.subr.mxu0 0.0
    %3728 = vmatpush1.xpose.msra.mxu0 0.0
    %3729 = vmatprep.subr.mxu0 0.0
    %3730 = vmatpush1.xpose.msra.mxu0 0.0
    %3731 = vmatprep.subr.mxu0 0.0
    %3732 = vmatpush1.xpose.msra.mxu0 0.0
    %3733 = vmatprep.subr.mxu0 0.0
    %3734 = vmatpush1.xpose.msra.mxu0 0.0
    %3735 = vmatprep.subr.mxu0 0.0
    %3736 = vmatpush1.xpose.msra.mxu0 0.0
    %3737 = vmatprep.subr.mxu0 0.0
    %3738 = vmatpush1.xpose.msra.mxu0 0.0
    %3739 = vmatprep.subr.mxu0 0.0
    %3740 = vmatpush1.xpose.msra.mxu0 0.0
    %3741 = vmatprep.subr.mxu0 0.0
    %3742 = vmatpush1.xpose.msra.mxu0 0.0
    %3743 = vmatprep.subr.mxu0 0.0
    %3744 = vmatpush1.xpose.msra.mxu0 0.0
    %3745 = vmatprep.subr.mxu0 0.0
    %3746 = vmatpush1.xpose.msra.mxu0 0.0
    %3747 = vmatprep.subr.mxu0 0.0
    %3748 = vmatpush1.xpose.msra.mxu0 0.0
    %3749 = vmatprep.subr.mxu0 0.0
    %3750 = vmatpush1.xpose.msra.mxu0 0.0
    %3751 = vmatprep.subr.mxu0 0.0
    %3752 = vmatpush1.xpose.msra.mxu0 0.0
    %3753 = vmatprep.subr.mxu0 0.0
    %3754 = vmatpush1.xpose.msra.mxu0 0.0
    %3755 = vmatprep.subr.mxu0 0.0
    %3756 = vmatpush1.xpose.msra.mxu0 0.0
    %3757 = vmatprep.subr.mxu0 0.0
    %3758 = vmatpush1.xpose.msra.mxu0 0.0
    %3759 = vmatprep.subr.mxu0 0.0
    %3760 = vmatpush1.xpose.msra.mxu0 0.0
    %3761 = vmatprep.mubr.f32.mxu0 0.0
    %3762 = vmatmul.mubr.f32.gmra.mrb[0].mxu0 %v3695
    %v3763 = vpop.f32.mrb[0].mxu0
    %v3764 = vadd.f32 0.0, %v3763
    %v3765 = vpop.f32.mrb[0].mxu0
    %3766 = vdwg.mxu0
    %v3768 = vsel %vm2423, %v3764, 0
    %3770 = vmatprep.subr.mxu0 0.0
    %3771 = vmatpush1.msra.mxu0 %v2683
    %3772 = vmatprep.subr.mxu0 0.0
    %3773 = vmatpush1.msra.mxu0 0.0
    %3774 = vmatprep.subr.mxu0 0.0
    %3775 = vmatpush1.msra.mxu0 0.0
    %3776 = vmatprep.subr.mxu0 0.0
    %3777 = vmatpush1.msra.mxu0 0.0
    %3778 = vmatprep.subr.mxu0 0.0
    %3779 = vmatpush1.msra.mxu0 0.0
    %3780 = vmatprep.subr.mxu0 0.0
    %3781 = vmatpush1.msra.mxu0 0.0
    %3782 = vmatprep.subr.mxu0 0.0
    %3783 = vmatpush1.msra.mxu0 0.0
    %3784 = vmatprep.subr.mxu0 0.0
    %3785 = vmatpush1.msra.mxu0 0.0
    %3786 = vmatprep.subr.mxu0 0.0
    %3787 = vmatpush1.msra.mxu0 0.0
    %3788 = vmatprep.subr.mxu0 0.0
    %3789 = vmatpush1.msra.mxu0 0.0
    %3790 = vmatprep.subr.mxu0 0.0
    %3791 = vmatpush1.msra.mxu0 0.0
    %3792 = vmatprep.subr.mxu0 0.0
    %3793 = vmatpush1.msra.mxu0 0.0
    %3794 = vmatprep.subr.mxu0 0.0
    %3795 = vmatpush1.msra.mxu0 0.0
    %3796 = vmatprep.subr.mxu0 0.0
    %3797 = vmatpush1.msra.mxu0 0.0
    %3798 = vmatprep.subr.mxu0 0.0
    %3799 = vmatpush1.msra.mxu0 0.0
    %3800 = vmatprep.subr.mxu0 0.0
    %3801 = vmatpush1.msra.mxu0 0.0
    %3802 = vmatprep.subr.mxu0 0.0
    %3803 = vmatpush1.msra.mxu0 0.0
    %3804 = vmatprep.subr.mxu0 0.0
    %3805 = vmatpush1.msra.mxu0 0.0
    %3806 = vmatprep.subr.mxu0 0.0
    %3807 = vmatpush1.msra.mxu0 0.0
    %3808 = vmatprep.subr.mxu0 0.0
    %3809 = vmatpush1.msra.mxu0 0.0
    %3810 = vmatprep.subr.mxu0 0.0
    %3811 = vmatpush1.msra.mxu0 0.0
    %3812 = vmatprep.subr.mxu0 0.0
    %3813 = vmatpush1.msra.mxu0 0.0
    %3814 = vmatprep.subr.mxu0 0.0
    %3815 = vmatpush1.msra.mxu0 0.0
    %3816 = vmatprep.subr.mxu0 0.0
    %3817 = vmatpush1.msra.mxu0 0.0
    %3818 = vmatprep.subr.mxu0 0.0
    %3819 = vmatpush1.msra.mxu0 0.0
    %3820 = vmatprep.subr.mxu0 0.0
    %3821 = vmatpush1.msra.mxu0 0.0
    %3822 = vmatprep.subr.mxu0 0.0
    %3823 = vmatpush1.msra.mxu0 0.0
    %3824 = vmatprep.subr.mxu0 0.0
    %3825 = vmatpush1.msra.mxu0 0.0
    %3826 = vmatprep.subr.mxu0 0.0
    %3827 = vmatpush1.msra.mxu0 0.0
    %3828 = vmatprep.subr.mxu0 0.0
    %3829 = vmatpush1.msra.mxu0 0.0
    %3830 = vmatprep.subr.mxu0 0.0
    %3831 = vmatpush1.msra.mxu0 0.0
    %3832 = vmatprep.subr.mxu0 0.0
    %3833 = vmatpush1.msra.mxu0 0.0
    %3834 = vmatprep.mubr.f32.mxu0 0.0
    %3835 = vmatmul.mubr.f32.gmra.mrb[0].mxu0 %v3768
    %v3836 = vpop.f32.mrb[0].mxu0
    %v3837 = vadd.f32 0.0, %v3836
    %v3838 = vpop.f32.mrb[0].mxu0
    %3839 = vdwg.mxu0
    %s3840 = scalar_lea.vmem %s3, 24
    %v3841 = vld [vmem:[%s3840] sm:$0x1f]
    %v3842 = vmul.f32 %v3837, %v3841
    %v3843 = vsel %vm2757, %v3842, -inf
    %3844 = vmax.xlane.f32.xlu0 %v3843
    %v3845 = vpop.xlane.xlu0 %3844
    %v3846 = vsub.f32 %v3842, %v3845
    %v3847 = vmul.f32 %v3846, 1.442695
    %v3848 = vpow.pop %v3847
    %v3850 = vsel %vm2764, %v3848, 0
    %3852 = vmatprep.subr.mxu0 0.0
    %3853 = vmatpush1.msra.mxu0 %v2372
    %3854 = vmatprep.subr.mxu0 0.0
    %3855 = vmatpush1.msra.mxu0 %v2373
    %3856 = vmatprep.subr.mxu0 0.0
    %3857 = vmatpush1.msra.mxu0 %v2769
    %3858 = vmatprep.subr.mxu0 0.0
    %3859 = vmatpush1.msra.mxu0 0.0
    %3860 = vmatprep.subr.mxu0 0.0
    %3861 = vmatpush1.msra.mxu0 0.0
    %3862 = vmatprep.subr.mxu0 0.0
    %3863 = vmatpush1.msra.mxu0 0.0
    %3864 = vmatprep.subr.mxu0 0.0
    %3865 = vmatpush1.msra.mxu0 0.0
    %3866 = vmatprep.subr.mxu0 0.0
    %3867 = vmatpush1.msra.mxu0 0.0
    %3868 = vmatprep.subr.mxu0 0.0
    %3869 = vmatpush1.msra.mxu0 0.0
    %3870 = vmatprep.subr.mxu0 0.0
    %3871 = vmatpush1.msra.mxu0 0.0
    %3872 = vmatprep.subr.mxu0 0.0
    %3873 = vmatpush1.msra.mxu0 0.0
    %3874 = vmatprep.subr.mxu0 0.0
    %3875 = vmatpush1.msra.mxu0 0.0
    %3876 = vmatprep.subr.mxu0 0.0
    %3877 = vmatpush1.msra.mxu0 0.0
    %3878 = vmatprep.subr.mxu0 0.0
    %3879 = vmatpush1.msra.mxu0 0.0
    %3880 = vmatprep.subr.mxu0 0.0
    %3881 = vmatpush1.msra.mxu0 0.0
    %3882 = vmatprep.subr.mxu0 0.0
    %3883 = vmatpush1.msra.mxu0 0.0
    %3884 = vmatprep.subr.mxu0 0.0
    %3885 = vmatpush1.msra.mxu0 0.0
    %3886 = vmatprep.subr.mxu0 0.0
    %3887 = vmatpush1.msra.mxu0 0.0
    %3888 = vmatprep.subr.mxu0 0.0
    %3889 = vmatpush1.msra.mxu0 0.0
    %3890 = vmatprep.subr.mxu0 0.0
    %3891 = vmatpush1.msra.mxu0 0.0
    %3892 = vmatprep.subr.mxu0 0.0
    %3893 = vmatpush1.msra.mxu0 0.0
    %3894 = vmatprep.subr.mxu0 0.0
    %3895 = vmatpush1.msra.mxu0 0.0
    %3896 = vmatprep.subr.mxu0 0.0
    %3897 = vmatpush1.msra.mxu0 0.0
    %3898 = vmatprep.subr.mxu0 0.0
    %3899 = vmatpush1.msra.mxu0 0.0
    %3900 = vmatprep.subr.mxu0 0.0
    %3901 = vmatpush1.msra.mxu0 0.0
    %3902 = vmatprep.subr.mxu0 0.0
    %3903 = vmatpush1.msra.mxu0 0.0
    %3904 = vmatprep.subr.mxu0 0.0
    %3905 = vmatpush1.msra.mxu0 0.0
    %3906 = vmatprep.subr.mxu0 0.0
    %3907 = vmatpush1.msra.mxu0 0.0
    %3908 = vmatprep.subr.mxu0 0.0
    %3909 = vmatpush1.msra.mxu0 0.0
    %3910 = vmatprep.subr.mxu0 0.0
    %3911 = vmatpush1.msra.mxu0 0.0
    %3912 = vmatprep.subr.mxu0 0.0
    %3913 = vmatpush1.msra.mxu0 0.0
    %3914 = vmatprep.subr.mxu0 0.0
    %3915 = vmatpush1.msra.mxu0 0.0
    %3916 = vmatprep.mubr.f32.mxu0 0.0
    %3917 = vmatmul.mubr.f32.gmra.mrb[0].mxu0 %v3850
    %v3918 = vpop.f32.mrb[0].mxu0
    %v3919 = vadd.f32 0.0, %v3918
    %v3920 = vpop.f32.mrb[0].mxu0
    %3921 = vdwg.mxu0
    %v3922 = vrcp.pop %v3919
    %v3923 = vmul.f32 %v3848, %v3922
    %v3925 = vsel %vm2764, %v3923, 0
    %3927 = vmatprep.subr.mxu0 0.0
    %3928 = vmatpush1.msra.mxu0 %v3376
    %3929 = vmatprep.subr.mxu0 0.0
    %3930 = vmatpush1.msra.mxu0 %v3381
    %3931 = vmatprep.subr.mxu0 0.0
    %3932 = vmatpush1.msra.mxu0 %v3622
    %3933 = vmatprep.subr.mxu0 0.0
    %3934 = vmatpush1.msra.mxu0 0.0
    %3935 = vmatprep.subr.mxu0 0.0
    %3936 = vmatpush1.msra.mxu0 0.0
    %3937 = vmatprep.subr.mxu0 0.0
    %3938 = vmatpush1.msra.mxu0 0.0
    %3939 = vmatprep.subr.mxu0 0.0
    %3940 = vmatpush1.msra.mxu0 0.0
    %3941 = vmatprep.subr.mxu0 0.0
    %3942 = vmatpush1.msra.mxu0 0.0
    %3943 = vmatprep.subr.mxu0 0.0
    %3944 = vmatpush1.msra.mxu0 0.0
    %3945 = vmatprep.subr.mxu0 0.0
    %3946 = vmatpush1.msra.mxu0 0.0
    %3947 = vmatprep.subr.mxu0 0.0
    %3948 = vmatpush1.msra.mxu0 0.0
    %3949 = vmatprep.subr.mxu0 0.0
    %3950 = vmatpush1.msra.mxu0 0.0
    %3951 = vmatprep.subr.mxu0 0.0
    %3952 = vmatpush1.msra.mxu0 0.0
    %3953 = vmatprep.subr.mxu0 0.0
    %3954 = vmatpush1.msra.mxu0 0.0
    %3955 = vmatprep.subr.mxu0 0.0
    %3956 = vmatpush1.msra.mxu0 0.0
    %3957 = vmatprep.subr.mxu0 0.0
    %3958 = vmatpush1.msra.mxu0 0.0
    %3959 = vmatprep.subr.mxu0 0.0
    %3960 = vmatpush1.msra.mxu0 0.0
    %3961 = vmatprep.subr.mxu0 0.0
    %3962 = vmatpush1.msra.mxu0 0.0
    %3963 = vmatprep.subr.mxu0 0.0
    %3964 = vmatpush1.msra.mxu0 0.0
    %3965 = vmatprep.subr.mxu0 0.0
    %3966 = vmatpush1.msra.mxu0 0.0
    %3967 = vmatprep.subr.mxu0 0.0
    %3968 = vmatpush1.msra.mxu0 0.0
    %3969 = vmatprep.subr.mxu0 0.0
    %3970 = vmatpush1.msra.mxu0 0.0
    %3971 = vmatprep.subr.mxu0 0.0
    %3972 = vmatpush1.msra.mxu0 0.0
    %3973 = vmatprep.subr.mxu0 0.0
    %3974 = vmatpush1.msra.mxu0 0.0
    %3975 = vmatprep.subr.mxu0 0.0
    %3976 = vmatpush1.msra.mxu0 0.0
    %3977 = vmatprep.subr.mxu0 0.0
    %3978 = vmatpush1.msra.mxu0 0.0
    %3979 = vmatprep.subr.mxu0 0.0
    %3980 = vmatpush1.msra.mxu0 0.0
    %3981 = vmatprep.subr.mxu0 0.0
    %3982 = vmatpush1.msra.mxu0 0.0
    %3983 = vmatprep.subr.mxu0 0.0
    %3984 = vmatpush1.msra.mxu0 0.0
    %3985 = vmatprep.subr.mxu0 0.0
    %3986 = vmatpush1.msra.mxu0 0.0
    %3987 = vmatprep.subr.mxu0 0.0
    %3988 = vmatpush1.msra.mxu0 0.0
    %3989 = vmatprep.subr.mxu0 0.0
    %3990 = vmatpush1.msra.mxu0 0.0
    %3991 = vmatprep.mubr.f32.mxu0 0.0
    %3992 = vmatmul.mubr.f32.gmra.mrb[0].mxu0 %v3925
    %v3993 = vpop.f32.mrb[0].mxu0
    %v3994 = vadd.f32 0.0, %v3993
    %v3995 = vpop.f32.mrb[0].mxu0
    %3996 = vdwg.mxu0
    %v3997 = vmul.f32 %v3994, 0.25
    %vm3998 = vcmp.eq.s32.totalorder %v234, 0
    %v3999 = vsel %vm698, %v1933, 0.0
    %vm4000 = vcmask 253952
    %v4001 = vsel %vm4000, %v1934, 0.0
    %v4002 = vadd.f32 %v3999, %v4001
    %v4003 = vrot.slane %v4002, 4
    %v4004 = vadd.f32 %v4002, %v4003
    %v4005 = vrot.slane %v4004, 2
    %v4006 = vadd.f32 %v4004, %v4005
    %v4007 = vrot.slane %v4006, 1
    %v4008 = vadd.f32 %v4006, %v4007
    %v4009 = vrcp.pop 9.0
    %v4010 = vmul.f32 %v4008, %v4009
    %v4011 = vsel %vm3998, %v4010, 0.0
    %vm4012 = vcmask 258048
    %v4013 = vsel %vm4012, %v3694, 0.0
    %v4014 = vrot.slane %v4013, 4
    %v4015 = vadd.f32 %v4013, %v4014
    %v4016 = vrot.slane %v4015, 2
    %v4017 = vadd.f32 %v4015, %v4016
    %v4018 = vrot.slane %v4017, 1
    %v4019 = vadd.f32 %v4017, %v4018
    %v4020 = vrcp.pop 5.0
    %v4021 = vmul.f32 %v4019, %v4020
    %v4022 = vsel %vm3998, %v4021, 0.0
    %v4023 = vlaneseq
    %v4024 = vshrl.u32 %v4023, 7
    %v4025 = vsub.s32 0, %v4024
    %v4026 = vrot.slane %v132, %v4025
    %v4027 = vsel %vm3998, %v4026, 0.0
    %vm4028 = vcmp.eq.s32.totalorder %v234, 1
    %v4029 = vsel %vm698, %v2279, 0.0
    %v4030 = vsel %vm4000, %v2280, 0.0
    %v4031 = vadd.f32 %v4029, %v4030
    %v4032 = vrot.slane %v4031, 4
    %v4033 = vadd.f32 %v4031, %v4032
    %v4034 = vrot.slane %v4033, 2
    %v4035 = vadd.f32 %v4033, %v4034
    %v4036 = vrot.slane %v4035, 1
    %v4037 = vadd.f32 %v4035, %v4036
    %v4038 = vmul.f32 %v4037, %v4009
    %v4039 = vsel %vm4028, %v4038, %v4011
    %v4040 = vsel %vm4012, %v3997, 0.0
    %v4041 = vrot.slane %v4040, 4
    %v4042 = vadd.f32 %v4040, %v4041
    %v4043 = vrot.slane %v4042, 2
    %v4044 = vadd.f32 %v4042, %v4043
    %v4045 = vrot.slane %v4044, 1
    %v4046 = vadd.f32 %v4044, %v4045
    %v4047 = vmul.f32 %v4046, %v4020
    %v4048 = vsel %vm4028, %v4047, %v4022
    %v4049 = vlaneseq
    %v4050 = vshrl.u32 %v4049, 7
    %v4051 = vsub.s32 1, %v4050
    %v4052 = vrot.slane %v137, %v4051
    %v4053 = vsel %vm4028, %v4052, %v4027
    %v4054 = vlaneseq
    %v4055 = vshrl.u32 %v4054, 7
    %v4056 = vsub.s32 0, %v4055
    %v4057 = vrot.slane %v37, %v4056
    %v4058 = vmul.f32 %v4053, %v4057
    %vm4059 = vcmask 254976
    %v4060 = vsel %vm4059, %v4058, 0.0
    %4061 = vadd.xlane.f32.xlu0 %v4060
    %v4062 = vpop.xlane.xlu0 %4061
    %v4063 = vlaneseq
    %v4064 = vshrl.u32 %v4063, 7
    %v4065 = vsub.s32 0, %v4064
    %v4066 = vrot.slane %v47, %v4065
    %v4067 = vadd.f32 %v4062, %v4066
    %v4068 = vlaneseq
    %v4069 = vshrl.u32 %v4068, 7
    %v4070 = vsub.s32 0, %v4069
    %v4071 = vrot.slane %v36, %v4070
    %v4072 = vmul.f32 %v4039, %v4071
    %v4073 = vsel %vm4059, %v4072, 0.0
    %4074 = vadd.xlane.f32.xlu0 %v4073
    %v4075 = vpop.xlane.xlu0 %4074
    %v4076 = vadd.f32 %v4075, %v4067
    %v4077 = vmul.f32 %v4048, %v4071
    %v4078 = vsel %vm4059, %v4077, 0.0
    %4079 = vadd.xlane.f32.xlu0 %v4078
    %v4080 = vpop.xlane.xlu0 %4079
    %v4081 = vadd.f32 %v4080, %v4067
    %v4082 = vmul.f32 %v4053, %v4071
    %v4083 = vsel %vm4059, %v4082, 0.0
    %4084 = vadd.xlane.f32.xlu0 %v4083
    %v4085 = vpop.xlane.xlu0 %4084
    %v4086 = vadd.f32 %v4085, %v4067
    %vm4087 = vcmp.gt.f32.partialorder %v4076, 0.0
    %v4088 = vmul.f32 %v4076, 0.01
    %v4089 = vsel %vm4087, %v4076, %v4088
    %vm4090 = vcmp.gt.f32.partialorder %v4081, 0.0
    %v4091 = vmul.f32 %v4081, 0.01
    %v4092 = vsel %vm4090, %v4081, %v4091
    %vm4093 = vcmp.gt.f32.partialorder %v4086, 0.0
    %v4094 = vmul.f32 %v4086, 0.01
    %v4095 = vsel %vm4093, %v4086, %v4094
    %v4096 = vmax.f32 %v4089, %v4092
    %v4097 = vmax.f32 %v4096, %v4095
    %v4098 = vsub.f32 %v4089, %v4097
    %v4099 = vmul.f32 %v4098, 1.442695
    %v4100 = vpow.pop %v4099
    %v4101 = vsub.f32 %v4092, %v4097
    %v4102 = vmul.f32 %v4101, 1.442695
    %v4103 = vpow.pop %v4102
    %v4104 = vsub.f32 %v4095, %v4097
    %v4105 = vmul.f32 %v4104, 1.442695
    %v4106 = vpow.pop %v4105
    %v4107 = vadd.f32 %v4100, %v4103
    %v4108 = vadd.f32 %v4107, %v4106
    %v4109 = vrcp.pop %v4108
    %v4110 = vmul.f32 %v4100, %v4109
    %v4111 = vmul.f32 %v4103, %v4109
    %v4112 = vmul.f32 %v4106, %v4109
    %4114 = vset.pattern.permute.xlu0 0
    %4115 = vperm.xlu0 %4114, %v4110
    %v4116 = vpop.permute.xlu0 %4115
    %v4118 = vmul.f32 %v4116, %v4039
    %4120 = vset.pattern.permute.xlu0 0
    %4121 = vperm.xlu0 %4120, %v4111
    %v4122 = vpop.permute.xlu0 %4121
    %v4124 = vmul.f32 %v4122, %v4048
    %v4125 = vadd.f32 %v4118, %v4124
    %4127 = vset.pattern.permute.xlu0 0
    %4128 = vperm.xlu0 %4127, %v4112
    %v4129 = vpop.permute.xlu0 %4128
    %v4131 = vmul.f32 %v4129, %v4053
    %v4132 = vadd.f32 %v4125, %v4131
    %v4133 = vmul.f32 %v4132, 0.33333334
    %v4134 = vadd.f32 %v4110, %v4111
    %v4135 = vadd.f32 %v4134, %v4112
    %4137 = vset.pattern.permute.xlu0 0
    %4138 = vperm.xlu0 %4137, %v4135
    %v4139 = vpop.permute.xlu0 %4138
    %v4141 = vmul.f32 %v4139, %v4053
    %v4142 = vmul.f32 %v4141, 0.33333334
    %4143 = vst.msk [vmem:[%s6] sm:$0x3] %vm4059, %v4133
    %4144 = vst.msk [vmem:[%s7] sm:$0x3] %vm4059, %v4142
    %v4146 = vsel %vm698, %v4142, 0
    %4148 = vmatprep.subr.mxu0 0.0
    %4149 = vmatpush1.msra.mxu0 %v42
    %4150 = vmatprep.subr.mxu0 0.0
    %4151 = vmatpush1.msra.mxu0 %v43
    %4152 = vmatprep.subr.mxu0 0.0
    %4153 = vmatpush1.msra.mxu0 %v44
    %4154 = vmatprep.subr.mxu0 0.0
    %4155 = vmatpush1.msra.mxu0 %v45
    %4156 = vmatprep.subr.mxu0 0.0
    %4157 = vmatpush1.msra.mxu0 0.0
    %4158 = vmatprep.subr.mxu0 0.0
    %4159 = vmatpush1.msra.mxu0 0.0
    %4160 = vmatprep.subr.mxu0 0.0
    %4161 = vmatpush1.msra.mxu0 0.0
    %4162 = vmatprep.subr.mxu0 0.0
    %4163 = vmatpush1.msra.mxu0 0.0
    %4164 = vmatprep.subr.mxu0 0.0
    %4165 = vmatpush1.msra.mxu0 0.0
    %4166 = vmatprep.subr.mxu0 0.0
    %4167 = vmatpush1.msra.mxu0 0.0
    %4168 = vmatprep.subr.mxu0 0.0
    %4169 = vmatpush1.msra.mxu0 0.0
    %4170 = vmatprep.subr.mxu0 0.0
    %4171 = vmatpush1.msra.mxu0 0.0
    %4172 = vmatprep.subr.mxu0 0.0
    %4173 = vmatpush1.msra.mxu0 0.0
    %4174 = vmatprep.subr.mxu0 0.0
    %4175 = vmatpush1.msra.mxu0 0.0
    %4176 = vmatprep.subr.mxu0 0.0
    %4177 = vmatpush1.msra.mxu0 0.0
    %4178 = vmatprep.subr.mxu0 0.0
    %4179 = vmatpush1.msra.mxu0 0.0
    %4180 = vmatprep.subr.mxu0 0.0
    %4181 = vmatpush1.msra.mxu0 0.0
    %4182 = vmatprep.subr.mxu0 0.0
    %4183 = vmatpush1.msra.mxu0 0.0
    %4184 = vmatprep.subr.mxu0 0.0
    %4185 = vmatpush1.msra.mxu0 0.0
    %4186 = vmatprep.subr.mxu0 0.0
    %4187 = vmatpush1.msra.mxu0 0.0
    %4188 = vmatprep.subr.mxu0 0.0
    %4189 = vmatpush1.msra.mxu0 0.0
    %4190 = vmatprep.subr.mxu0 0.0
    %4191 = vmatpush1.msra.mxu0 0.0
    %4192 = vmatprep.subr.mxu0 0.0
    %4193 = vmatpush1.msra.mxu0 0.0
    %4194 = vmatprep.subr.mxu0 0.0
    %4195 = vmatpush1.msra.mxu0 0.0
    %4196 = vmatprep.subr.mxu0 0.0
    %4197 = vmatpush1.msra.mxu0 0.0
    %4198 = vmatprep.subr.mxu0 0.0
    %4199 = vmatpush1.msra.mxu0 0.0
    %4200 = vmatprep.subr.mxu0 0.0
    %4201 = vmatpush1.msra.mxu0 0.0
    %4202 = vmatprep.subr.mxu0 0.0
    %4203 = vmatpush1.msra.mxu0 0.0
    %4204 = vmatprep.subr.mxu0 0.0
    %4205 = vmatpush1.msra.mxu0 0.0
    %4206 = vmatprep.subr.mxu0 0.0
    %4207 = vmatpush1.msra.mxu0 0.0
    %4208 = vmatprep.subr.mxu0 0.0
    %4209 = vmatpush1.msra.mxu0 0.0
    %4210 = vmatprep.subr.mxu0 0.0
    %4211 = vmatpush1.msra.mxu0 0.0
    %4212 = vmatprep.mubr.f32.mxu0 0.0
    %4213 = vmatmul.mubr.f32.gmra.mrb[0].mxu0 %v4146
    %v4214 = vpop.f32.mrb[0].mxu0
    %v4215 = vadd.f32 0.0, %v4214
    %v4216 = vpop.f32.mrb[0].mxu0
    %4217 = vdwg.mxu0
    %v4219 = vsel %vm698, %v4133, 0
    %4221 = vmatprep.subr.mxu0 0.0
    %4222 = vmatpush1.msra.mxu0 %v38
    %4223 = vmatprep.subr.mxu0 0.0
    %4224 = vmatpush1.msra.mxu0 %v39
    %4225 = vmatprep.subr.mxu0 0.0
    %4226 = vmatpush1.msra.mxu0 %v40
    %4227 = vmatprep.subr.mxu0 0.0
    %4228 = vmatpush1.msra.mxu0 %v41
    %4229 = vmatprep.subr.mxu0 0.0
    %4230 = vmatpush1.msra.mxu0 0.0
    %4231 = vmatprep.subr.mxu0 0.0
    %4232 = vmatpush1.msra.mxu0 0.0
    %4233 = vmatprep.subr.mxu0 0.0
    %4234 = vmatpush1.msra.mxu0 0.0
    %4235 = vmatprep.subr.mxu0 0.0
    %4236 = vmatpush1.msra.mxu0 0.0
    %4237 = vmatprep.subr.mxu0 0.0
    %4238 = vmatpush1.msra.mxu0 0.0
    %4239 = vmatprep.subr.mxu0 0.0
    %4240 = vmatpush1.msra.mxu0 0.0
    %4241 = vmatprep.subr.mxu0 0.0
    %4242 = vmatpush1.msra.mxu0 0.0
    %4243 = vmatprep.subr.mxu0 0.0
    %4244 = vmatpush1.msra.mxu0 0.0
    %4245 = vmatprep.subr.mxu0 0.0
    %4246 = vmatpush1.msra.mxu0 0.0
    %4247 = vmatprep.subr.mxu0 0.0
    %4248 = vmatpush1.msra.mxu0 0.0
    %4249 = vmatprep.subr.mxu0 0.0
    %4250 = vmatpush1.msra.mxu0 0.0
    %4251 = vmatprep.subr.mxu0 0.0
    %4252 = vmatpush1.msra.mxu0 0.0
    %4253 = vmatprep.subr.mxu0 0.0
    %4254 = vmatpush1.msra.mxu0 0.0
    %4255 = vmatprep.subr.mxu0 0.0
    %4256 = vmatpush1.msra.mxu0 0.0
    %4257 = vmatprep.subr.mxu0 0.0
    %4258 = vmatpush1.msra.mxu0 0.0
    %4259 = vmatprep.subr.mxu0 0.0
    %4260 = vmatpush1.msra.mxu0 0.0
    %4261 = vmatprep.subr.mxu0 0.0
    %4262 = vmatpush1.msra.mxu0 0.0
    %4263 = vmatprep.subr.mxu0 0.0
    %4264 = vmatpush1.msra.mxu0 0.0
    %4265 = vmatprep.subr.mxu0 0.0
    %4266 = vmatpush1.msra.mxu0 0.0
    %4267 = vmatprep.subr.mxu0 0.0
    %4268 = vmatpush1.msra.mxu0 0.0
    %4269 = vmatprep.subr.mxu0 0.0
    %4270 = vmatpush1.msra.mxu0 0.0
    %4271 = vmatprep.subr.mxu0 0.0
    %4272 = vmatpush1.msra.mxu0 0.0
    %4273 = vmatprep.subr.mxu0 0.0
    %4274 = vmatpush1.msra.mxu0 0.0
    %4275 = vmatprep.subr.mxu0 0.0
    %4276 = vmatpush1.msra.mxu0 0.0
    %4277 = vmatprep.subr.mxu0 0.0
    %4278 = vmatpush1.msra.mxu0 0.0
    %4279 = vmatprep.subr.mxu0 0.0
    %4280 = vmatpush1.msra.mxu0 0.0
    %4281 = vmatprep.subr.mxu0 0.0
    %4282 = vmatpush1.msra.mxu0 0.0
    %4283 = vmatprep.subr.mxu0 0.0
    %4284 = vmatpush1.msra.mxu0 0.0
    %4285 = vmatprep.mubr.f32.mxu0 0.0
    %4286 = vmatmul.mubr.f32.gmra.mrb[0].mxu0 %v4219
    %v4287 = vpop.f32.mrb[0].mxu0
    %v4288 = vadd.f32 %v4215, %v4287
    %v4289 = vpop.f32.mrb[0].mxu0
    %4290 = vdwg.mxu0
    %v4291 = vlaneseq
    %v4292 = vshrl.u32 %v4291, 7
    %v4293 = vsub.s32 0, %v4292
    %v4294 = vrot.slane %v46, %v4293
    %v4295 = vadd.f32 %v4288, %v4294
    %vm4296 = vcmask 33792
    %4297 = vst.msk [vmem:[#allocation2] sm:$0x3] %vm4296, %v4295
    // Predicated region
    $region26: #{hmm_forward.1} parent=1 // pred_check
      _
    $region27: #{hmm_forward.1} parent=1 // pred_check_branch
      %4299 = sbr.rel (0) target = $region29
    $region28: #{hmm_forward.1} parent=1 // pred_region
      _
    $region29: #{hmm_forward.1} parent=1 // pred_fallthru
      _
    // Predicated region
    $region30: #{hmm_forward.1} parent=1 // pred_check
      _
    $region31: #{hmm_forward.1} parent=1 // pred_check_branch
      %4301 = sbr.rel (0) target = $region33
    $region32: #{hmm_forward.1} parent=1 // pred_region
      _
    $region33: #{hmm_forward.1} parent=1 // pred_fallthru
      _
    // Predicated region
    $region34: #{hmm_forward.1} parent=1 // pred_check
      _
    $region35: #{hmm_forward.1} parent=1 // pred_check_branch
      %4303 = sbr.rel (0) target = $region37
    $region36: #{hmm_forward.1} parent=1 // pred_region
      %s4305 = ssub.s32 32, 32
      %4306 = vsyncadd [#allocation3], %s4305
      %s4308 = sshll.u32 [#allocation2], 4
      %s4309 = int_to_ptr.vmem [resolvable:$true] %s4308
      %4311 = dma.vmem_to_hbm [thread:$0]  %s4309, 32, %s8, [#allocation3]
    $region37: #{hmm_forward.1} parent=1 // pred_fallthru
      _
    // Predicated region
    $region38: #{hmm_forward.1} parent=1 // pred_check
      _
    $region39: #{hmm_forward.1} parent=1 // pred_check_branch
      %4313 = sbr.rel (0) target = $region41
    $region40: #{hmm_forward.1} parent=1 // pred_region
      _
    $region41: #{hmm_forward.1} parent=1 // pred_fallthru
      _
    // Predicated region
    $region42: #{hmm_forward.1} parent=1 // pred_check
      _
    $region43: #{hmm_forward.1} parent=1 // pred_check_branch
      %4315 = sbr.rel (0) target = $region45
    $region44: #{hmm_forward.1} parent=1 // pred_region
      _
    $region45: #{hmm_forward.1} parent=1 // pred_fallthru
      _
    // Predicated region
    $region46: #{hmm_forward.1} parent=1 // pred_check
      _
    $region47: #{hmm_forward.1} parent=1 // pred_check_branch
      %4317 = sbr.rel (0) target = $region49
    $region48: #{hmm_forward.1} parent=1 // pred_region
      %4318 = dma.done [#allocation3], 32
    $region49: #{hmm_forward.1} parent=1 // pred_fallthru
      _
    %4319 = vsyncpa [#allocation3], 1

</llo_original>
